<compile_context>
chip_gen: v7x
topology: tpu7x:2x2x1
jax: 0.10.0
libtpu: 0.0.40
codegen_flags: <defaults>
</compile_context>

<pallas_src>
import jax
import jax.numpy as jnp
import numpy as np
from jax import lax
from jax.experimental import pallas as pl
from jax.experimental.pallas import tpu as pltpu

# Concrete instantiation of the HLSSKL callables (synthetic, deterministic):
#   backbone: Conv2d(C, D, 3, padding=1) -> ReLU -> global average pool -> (B, D)
#   proj1/2/3: Linear(D, P) -> (B, P)
B, C, H, W = 2, 4, 16, 16
K = 3
D = 32            # backbone feature dim (conv out channels)
P = 16            # projection dim
HW = H * W
BHW = B * HW
CKK = C * K * K               # 36 (left unpadded; MXU pads K internally)
OUT_W = 128                   # packed lane-dense output: [bb(32)|p1(16)|p2(16)|p3(16)|pad]
EPS2 = 1e-24                  # eps^2 preserving torch F.normalize(eps=1e-12) semantics

HIGHEST = lax.Precision.HIGHEST


def hlsskl_kernel(patches_ref, cw_ref, cb_ref, pool_ref, wbig_ref, bbig_ref,
                  gmask_ref, out_ref):
    # Conv as ONE batched im2col matmul + separate bias + ReLU.
    conv = jnp.dot(patches_ref[...], cw_ref[...],
                   preferred_element_type=jnp.float32,
                   precision=HIGHEST) + cb_ref[...]                # (BHW, D)
    conv = jnp.maximum(conv, 0.0)

    # Global average pool on the MXU: precomputed block-diagonal (B, BHW) matrix.
    bb = jnp.dot(pool_ref[...], conv,
                 preferred_element_type=jnp.float32,
                 precision=HIGHEST)                                # (B, D)

    # One fused projection matmul: identity passthrough of bb + the 3 heads + bias,
    # packed directly into the lane-dense (B, 128) output slab.
    y = jnp.dot(bb, wbig_ref[...],
                preferred_element_type=jnp.float32,
                precision=HIGHEST) + bbig_ref[...]                 # (B, OUT_W)

    # Per-head L2 normalize: precomputed group-mask matmul gives every column its
    # head's sum of squares (MXU), then lax.rsqrt (EUP) replaces sqrt + divide.
    sumsq = jnp.dot(y * y, gmask_ref[...],
                    preferred_element_type=jnp.float32,
                    precision=HIGHEST)                             # (B, OUT_W)
    out_ref[...] = y * lax.rsqrt(jnp.maximum(sumsq, jnp.float32(EPS2)))


def im2col(x):
    # x: (B, C, H, W) -> (B*H*W, C*K*K), zero-padded "same" 3x3 windows, (c, kh, kw) order.
    xp = jnp.pad(x, ((0, 0), (0, 0), (1, 1), (1, 1)))
    cols = []
    for kh in range(K):
        for kw in range(K):
            cols.append(xp[:, :, kh:kh + H, kw:kw + W])   # (B, C, H, W)
    p = jnp.stack(cols, axis=2)        # (B, C, K*K, H, W)
    p = p.transpose(0, 3, 4, 1, 2)     # (B, H, W, C, K*K)
    return p.reshape(BHW, CKK)


@jax.jit
def hlsskl_forward(x, params):
    patches = im2col(x)                                        # (BHW, CKK), no lane pad

    vmem = pl.BlockSpec(memory_space=pltpu.MemorySpace.VMEM)
    packed = pl.pallas_call(
        hlsskl_kernel,
        out_shape=jax.ShapeDtypeStruct((B, OUT_W), jnp.float32),
        in_specs=[vmem] * 7,
        out_specs=vmem,
    )(patches, params["cw"], params["cb"], params["pool"],
      params["wbig"], params["bbig"], params["gmask"])

    bb = packed[:, :D]
    p1 = packed[:, D:D + P]
    p2 = packed[:, D + P:D + 2 * P]
    p3 = packed[:, D + 2 * P:D + 3 * P]
    # unsqueeze(1), matching the torch module's return tuple
    return bb[:, None, :], p1[:, None, :], p2[:, None, :], p3[:, None, :]


def make_params(key):
    ks = jax.random.split(key, 8)
    conv_w = jax.random.normal(ks[0], (D, C, K, K), jnp.float32) * 0.1   # torch layout
    cw = conv_w.reshape(D, CKK).T                                        # (CKK, D)
    cb = jax.random.normal(ks[1], (1, D), jnp.float32) * 0.1
    w1 = jax.random.normal(ks[2], (D, P), jnp.float32) * 0.1
    b1 = jax.random.normal(ks[3], (1, P), jnp.float32) * 0.1
    w2 = jax.random.normal(ks[4], (D, P), jnp.float32) * 0.1
    b2 = jax.random.normal(ks[5], (1, P), jnp.float32) * 0.1
    w3 = jax.random.normal(ks[6], (D, P), jnp.float32) * 0.1
    b3 = jax.random.normal(ks[7], (1, P), jnp.float32) * 0.1

    # --- Kernel-side fused / precomputed constants (host-side numpy, built once) ---
    # Fused projection weight/bias: identity passthrough + 3 heads, packed to 128 lanes.
    wbig = np.zeros((D, OUT_W), np.float32)
    wbig[:, :D] = np.eye(D, dtype=np.float32)
    wbig[:, D:D + P] = np.asarray(w1)
    wbig[:, D + P:D + 2 * P] = np.asarray(w2)
    wbig[:, D + 2 * P:D + 3 * P] = np.asarray(w3)

    bbig = np.zeros((1, OUT_W), np.float32)
    bbig[:, D:D + P] = np.asarray(b1)
    bbig[:, D + P:D + 2 * P] = np.asarray(b2)
    bbig[:, D + 2 * P:D + 3 * P] = np.asarray(b3)

    # Block-diagonal global-average-pool matrix (B, BHW).
    pool = np.zeros((B, BHW), np.float32)
    for b in range(B):
        pool[b, b * HW:(b + 1) * HW] = 1.0 / HW

    # Per-head L2 group mask (OUT_W, OUT_W). Pad columns are grouped with the
    # backbone (group 0) so they never get the rsqrt(eps^2) amplification.
    gid = np.zeros(OUT_W, np.int32)
    gid[:D] = 0
    gid[D:D + P] = 1
    gid[D + P:D + 2 * P] = 2
    gid[D + 2 * P:D + 3 * P] = 3
    gid[D + 3 * P:] = 0
    gmask = (gid[:, None] == gid[None, :]).astype(np.float32)

    return dict(cw=cw, cb=cb, w1=w1, b1=b1, w2=w2, b2=b2, w3=w3, b3=b3,
                pool=jnp.asarray(pool), gmask=jnp.asarray(gmask),
                wbig=jnp.asarray(wbig), bbig=jnp.asarray(bbig))


def reference_forward(x, params):
    patches = im2col(x).reshape(B, HW, CKK)
    conv = jnp.einsum('bpk,kd->bpd', patches, params["cw"],
                      precision=HIGHEST) + params["cb"]
    conv = jnp.maximum(conv, 0.0)
    bb = conv.mean(axis=1)
    outs = [bb]
    for w, b in ((params["w1"], params["b1"]),
                 (params["w2"], params["b2"]),
                 (params["w3"], params["b3"])):
        outs.append(jnp.dot(bb, w, precision=HIGHEST) + b)

    def l2norm(v):   # torch.nn.functional.normalize(p=2, dim=1, eps=1e-12)
        n = jnp.sqrt(jnp.sum(v * v, axis=1, keepdims=True))
        return v / jnp.maximum(n, 1e-12)

    return tuple(l2norm(o)[:, None, :] for o in outs)


if __name__ == "__main__":
    key = jax.random.PRNGKey(0)
    kx, kp = jax.random.split(key)
    x = jax.random.normal(kx, (B, C, H, W), jnp.float32)
    params = make_params(kp)

    outs = hlsskl_forward(x, params)
    outs = jax.block_until_ready(outs)

    refs = reference_forward(x, params)
    for o, r in zip(outs, refs):
        assert o.shape == r.shape
        np.testing.assert_allclose(np.asarray(o), np.asarray(r), atol=1e-5, rtol=1e-5)

    print("KERNEL_OK")
</pallas_src>

<mosaic_0001>
module attributes {stable_mosaic.version = 11 : i64} {
  func.func @hlsskl_kernel(%arg0: memref<512x36xf32, #tpu.memory_space<vmem>>, %arg1: memref<36x32xf32, #tpu.memory_space<vmem>>, %arg2: memref<1x32xf32, #tpu.memory_space<vmem>>, %arg3: memref<2x512xf32, #tpu.memory_space<vmem>>, %arg4: memref<32x128xf32, #tpu.memory_space<vmem>>, %arg5: memref<1x128xf32, #tpu.memory_space<vmem>>, %arg6: memref<128x128xf32, #tpu.memory_space<vmem>>, %arg7: memref<2x128xf32, #tpu.memory_space<vmem>>) attributes {dimension_semantics = [], scalar_prefetch = 0 : i64, scratch_operands = 0 : i64, tpu.core_type = #tpu.core_type<tc>} {
    %c0 = arith.constant 0 : index
    %c0_0 = arith.constant 0 : index
    %0 = vector.load %arg0[%c0, %c0_0] : memref<512x36xf32, #tpu.memory_space<vmem>>, vector<512x36xf32>
    %c0_1 = arith.constant 0 : index
    %c0_2 = arith.constant 0 : index
    %1 = vector.load %arg1[%c0_1, %c0_2] : memref<36x32xf32, #tpu.memory_space<vmem>>, vector<36x32xf32>
    %cst = arith.constant dense<0.000000e+00> : vector<512x32xf32>
    %2 = tpu.matmul %0, %1, %cst {dimension_numbers = #tpu.dot_dimension_numbers<[1], [0], [0], [1], [0, 0, 1, 1], [], []>, precision = #tpu.contract_precision<fp32>} : vector<512x36xf32>, vector<36x32xf32>, vector<512x32xf32> -> vector<512x32xf32>
    %c0_3 = arith.constant 0 : index
    %c0_4 = arith.constant 0 : index
    %3 = vector.load %arg2[%c0_3, %c0_4] : memref<1x32xf32, #tpu.memory_space<vmem>>, vector<1x32xf32>
    %4 = vector.broadcast %3 : vector<1x32xf32> to vector<512x32xf32>
    %5 = arith.addf %2, %4 : vector<512x32xf32>
    %cst_5 = arith.constant 0.000000e+00 : f32
    %6 = vector.broadcast %cst_5 : f32 to vector<512x32xf32>
    %7 = arith.maximumf %5, %6 : vector<512x32xf32>
    %c0_6 = arith.constant 0 : index
    %c0_7 = arith.constant 0 : index
    %8 = vector.load %arg3[%c0_6, %c0_7] : memref<2x512xf32, #tpu.memory_space<vmem>>, vector<2x512xf32>
    %cst_8 = arith.constant dense<0.000000e+00> : vector<2x32xf32>
    %9 = tpu.matmul %8, %7, %cst_8 {dimension_numbers = #tpu.dot_dimension_numbers<[1], [0], [0], [1], [0, 0, 1, 1], [], []>, precision = #tpu.contract_precision<fp32>} : vector<2x512xf32>, vector<512x32xf32>, vector<2x32xf32> -> vector<2x32xf32>
    %c0_9 = arith.constant 0 : index
    %c0_10 = arith.constant 0 : index
    %10 = vector.load %arg4[%c0_9, %c0_10] : memref<32x128xf32, #tpu.memory_space<vmem>>, vector<32x128xf32>
    %cst_11 = arith.constant dense<0.000000e+00> : vector<2x128xf32>
    %11 = tpu.matmul %9, %10, %cst_11 {dimension_numbers = #tpu.dot_dimension_numbers<[1], [0], [0], [1], [0, 0, 1, 1], [], []>, precision = #tpu.contract_precision<fp32>} : vector<2x32xf32>, vector<32x128xf32>, vector<2x128xf32> -> vector<2x128xf32>
    %c0_12 = arith.constant 0 : index
    %c0_13 = arith.constant 0 : index
    %12 = vector.load %arg5[%c0_12, %c0_13] : memref<1x128xf32, #tpu.memory_space<vmem>>, vector<1x128xf32>
    %13 = vector.broadcast %12 : vector<1x128xf32> to vector<2x128xf32>
    %14 = arith.addf %11, %13 : vector<2x128xf32>
    %15 = arith.mulf %14, %14 : vector<2x128xf32>
    %c0_14 = arith.constant 0 : index
    %c0_15 = arith.constant 0 : index
    %16 = vector.load %arg6[%c0_14, %c0_15] : memref<128x128xf32, #tpu.memory_space<vmem>>, vector<128x128xf32>
    %cst_16 = arith.constant dense<0.000000e+00> : vector<2x128xf32>
    %17 = tpu.matmul %15, %16, %cst_16 {dimension_numbers = #tpu.dot_dimension_numbers<[1], [0], [0], [1], [0, 0, 1, 1], [], []>, precision = #tpu.contract_precision<fp32>} : vector<2x128xf32>, vector<128x128xf32>, vector<2x128xf32> -> vector<2x128xf32>
    %cst_17 = arith.constant 1.000000e-24 : f32
    %18 = vector.broadcast %cst_17 : f32 to vector<2x128xf32>
    %19 = arith.maximumf %17, %18 : vector<2x128xf32>
    %20 = math.rsqrt %19 : vector<2x128xf32>
    %21 = arith.mulf %14, %20 : vector<2x128xf32>
    %c0_18 = arith.constant 0 : index
    %c0_19 = arith.constant 0 : index
    %22 = vector.load %arg7[%c0_18, %c0_19] : memref<2x128xf32, #tpu.memory_space<vmem>>, vector<2x128xf32>
    tpu.vector_store %arg7[%c0_18, %c0_19], %21 {strides = array<i32>} : memref<2x128xf32, #tpu.memory_space<vmem>>, vector<2x128xf32>,
    return
  }
}

</mosaic_0001>

<llo_original>
// kernel: hlsskl_forward.1
$region0: #{hlsskl_forward.1}
  #allocation0 [shape = 'u32[]', space=smem, size = 0x4, offset = 0x4, fixed_abs, tag = 'smem constant byte address 0x4 - core index']
  #allocation1 [shape = 'u32[144,128]{1,0:T(1,128)}', space=vmem, size = 0x12000, scoped, tag = 'internal scratch']
  %s0 = inlined_call_operand.vmem [shape: f32[512,36], index: 0, kind: input, shape index: {}]
  %s1 = inlined_call_operand.vmem [shape: f32[36,32], index: 1, kind: input, shape index: {}]
  %s2 = inlined_call_operand.vmem [shape: f32[1,32], index: 2, kind: input, shape index: {}]
  %s3 = inlined_call_operand.vmem [shape: f32[2,512], index: 3, kind: input, shape index: {}]
  %s4 = inlined_call_operand.vmem [shape: f32[32,128], index: 4, kind: input, shape index: {}]
  %s5 = inlined_call_operand.vmem [shape: f32[1,128], index: 5, kind: input, shape index: {}]
  %s6 = inlined_call_operand.vmem [shape: f32[128,128], index: 6, kind: input, shape index: {}]
  %s7 = inlined_call_operand.vmem [shape: f32[2,128], index: 7, kind: output, shape index: {}]
  %s8 = sld [smem:[#allocation0]]
  $region38: #{hlsskl_forward.1} parent=0
    _
  %s10 = ssub.s32 1, %s8
  %s11 = scalar_select 0, %s10, %s8
  // Predicated region
  $region2: #{hlsskl_forward.1} parent=0 // pred_check
    _
  $region3: #{hlsskl_forward.1} parent=0 // pred_check_branch
    %13 = sbr.rel (0) target = $region5
  $region4: #{hlsskl_forward.1} parent=0 // pred_region
    _
  $region5: #{hlsskl_forward.1} parent=0 // pred_fallthru
    _
  // Predicated region
  $region6: #{hlsskl_forward.1} parent=0 // pred_check
    _
  $region7: #{hlsskl_forward.1} parent=0 // pred_check_branch
    %15 = sbr.rel (0) target = $region9
  $region8: #{hlsskl_forward.1} parent=0 // pred_region
    _
  $region9: #{hlsskl_forward.1} parent=0 // pred_fallthru
    _
  // Predicated region
  $region10: #{hlsskl_forward.1} parent=0 // pred_check
    _
  $region11: #{hlsskl_forward.1} parent=0 // pred_check_branch
    %17 = sbr.rel (0) target = $region13
  $region12: #{hlsskl_forward.1} parent=0 // pred_region
    _
  $region13: #{hlsskl_forward.1} parent=0 // pred_fallthru
    _
  // Predicated region
  $region14: #{hlsskl_forward.1} parent=0 // pred_check
    _
  $region15: #{hlsskl_forward.1} parent=0 // pred_check_branch
    %19 = sbr.rel (0) target = $region17
  $region16: #{hlsskl_forward.1} parent=0 // pred_region
    _
  $region17: #{hlsskl_forward.1} parent=0 // pred_fallthru
    _
  // Predicated region
  $region18: #{hlsskl_forward.1} parent=0 // pred_check
    _
  $region19: #{hlsskl_forward.1} parent=0 // pred_check_branch
    %21 = sbr.rel (0) target = $region21
  $region20: #{hlsskl_forward.1} parent=0 // pred_region
    _
  $region21: #{hlsskl_forward.1} parent=0 // pred_fallthru
    _
  // Predicated region
  $region22: #{hlsskl_forward.1} parent=0 // pred_check
    _
  $region23: #{hlsskl_forward.1} parent=0 // pred_check_branch
    %23 = sbr.rel (0) target = $region25
  $region24: #{hlsskl_forward.1} parent=0 // pred_region
    _
  $region25: #{hlsskl_forward.1} parent=0 // pred_fallthru
    _
  // Predicated region
  $region26: #{hlsskl_forward.1} parent=0 // pred_check
    _
  $region27: #{hlsskl_forward.1} parent=0 // pred_check_branch
    %25 = sbr.rel (0) target = $region29
  $region28: #{hlsskl_forward.1} parent=0 // pred_region
    _
  $region29: #{hlsskl_forward.1} parent=0 // pred_fallthru
    _
  %v26 = vld [vmem:[%s0] sm:$0xff]
  %v27 = vld [vmem:[%s0 + $0x8] sm:$0xff]
  %v28 = vld [vmem:[%s0 + $0x10] sm:$0xff]
  %v29 = vld [vmem:[%s0 + $0x18] sm:$0xff]
  %v30 = vld [vmem:[%s0 + $0x20] sm:$0xff]
  %v31 = vld [vmem:[%s0 + $0x28] sm:$0xff]
  %v32 = vld [vmem:[%s0 + $0x30] sm:$0xff]
  %v33 = vld [vmem:[%s0 + $0x38] sm:$0xff]
  %v34 = vld [vmem:[%s0 + $0x40] sm:$0xff]
  %v35 = vld [vmem:[%s0 + $0x48] sm:$0xff]
  %v36 = vld [vmem:[%s0 + $0x50] sm:$0xff]
  %v37 = vld [vmem:[%s0 + $0x58] sm:$0xff]
  %v38 = vld [vmem:[%s0 + $0x60] sm:$0xff]
  %v39 = vld [vmem:[%s0 + $0x68] sm:$0xff]
  %v40 = vld [vmem:[%s0 + $0x70] sm:$0xff]
  %v41 = vld [vmem:[%s0 + $0x78] sm:$0xff]
  %v42 = vld [vmem:[%s0 + $0x80] sm:$0xff]
  %v43 = vld [vmem:[%s0 + $0x88] sm:$0xff]
  %v44 = vld [vmem:[%s0 + $0x90] sm:$0xff]
  %v45 = vld [vmem:[%s0 + $0x98] sm:$0xff]
  %v46 = vld [vmem:[%s0 + $0xa0] sm:$0xff]
  %v47 = vld [vmem:[%s0 + $0xa8] sm:$0xff]
  %v48 = vld [vmem:[%s0 + $0xb0] sm:$0xff]
  %v49 = vld [vmem:[%s0 + $0xb8] sm:$0xff]
  %v50 = vld [vmem:[%s0 + $0xc0] sm:$0xff]
  %v51 = vld [vmem:[%s0 + $0xc8] sm:$0xff]
  %v52 = vld [vmem:[%s0 + $0xd0] sm:$0xff]
  %v53 = vld [vmem:[%s0 + $0xd8] sm:$0xff]
  %v54 = vld [vmem:[%s0 + $0xe0] sm:$0xff]
  %v55 = vld [vmem:[%s0 + $0xe8] sm:$0xff]
  %v56 = vld [vmem:[%s0 + $0xf0] sm:$0xff]
  %v57 = vld [vmem:[%s0 + $0xf8] sm:$0xff]
  %v58 = vld [vmem:[%s0 + $0x100] sm:$0xff]
  %v59 = vld [vmem:[%s0 + $0x108] sm:$0xff]
  %v60 = vld [vmem:[%s0 + $0x110] sm:$0xff]
  %v61 = vld [vmem:[%s0 + $0x118] sm:$0xff]
  %v62 = vld [vmem:[%s0 + $0x120] sm:$0xff]
  %v63 = vld [vmem:[%s0 + $0x128] sm:$0xff]
  %v64 = vld [vmem:[%s0 + $0x130] sm:$0xff]
  %v65 = vld [vmem:[%s0 + $0x138] sm:$0xff]
  %v66 = vld [vmem:[%s0 + $0x140] sm:$0xff]
  %v67 = vld [vmem:[%s0 + $0x148] sm:$0xff]
  %v68 = vld [vmem:[%s0 + $0x150] sm:$0xff]
  %v69 = vld [vmem:[%s0 + $0x158] sm:$0xff]
  %v70 = vld [vmem:[%s0 + $0x160] sm:$0xff]
  %v71 = vld [vmem:[%s0 + $0x168] sm:$0xff]
  %v72 = vld [vmem:[%s0 + $0x170] sm:$0xff]
  %v73 = vld [vmem:[%s0 + $0x178] sm:$0xff]
  %v74 = vld [vmem:[%s0 + $0x180] sm:$0xff]
  %v75 = vld [vmem:[%s0 + $0x188] sm:$0xff]
  %v76 = vld [vmem:[%s0 + $0x190] sm:$0xff]
  %v77 = vld [vmem:[%s0 + $0x198] sm:$0xff]
  %v78 = vld [vmem:[%s0 + $0x1a0] sm:$0xff]
  %v79 = vld [vmem:[%s0 + $0x1a8] sm:$0xff]
  %v80 = vld [vmem:[%s0 + $0x1b0] sm:$0xff]
  %v81 = vld [vmem:[%s0 + $0x1b8] sm:$0xff]
  %v82 = vld [vmem:[%s0 + $0x1c0] sm:$0xff]
  %v83 = vld [vmem:[%s0 + $0x1c8] sm:$0xff]
  %v84 = vld [vmem:[%s0 + $0x1d0] sm:$0xff]
  %v85 = vld [vmem:[%s0 + $0x1d8] sm:$0xff]
  %v86 = vld [vmem:[%s0 + $0x1e0] sm:$0xff]
  %v87 = vld [vmem:[%s0 + $0x1e8] sm:$0xff]
  %v88 = vld [vmem:[%s0 + $0x1f0] sm:$0xff]
  %v89 = vld [vmem:[%s0 + $0x1f8] sm:$0xff]
  %v90 = vld [vmem:[%s1] sm:$0xff]
  %v91 = vld [vmem:[%s1 + $0x8] sm:$0xff]
  %v92 = vld [vmem:[%s1 + $0x10] sm:$0xff]
  %v93 = vld [vmem:[%s1 + $0x18] sm:$0xff]
  %v94 = vld [vmem:[%s1 + $0x20] sm:$0xf]
  %v95 = vld [vmem:[%s2] sm:$0x1]
  %v97 = vlaneseq
  %v98 = vshrl.u32 %v97, 7
  %v99 = vsub.s32 0, %v98
  %v100 = vrot.slane %v95, %v99
  %vm102 = vcmask 293888
  %v104 = vsel %vm102, %v26, 0
  %v107 = vsel %vm102, %v27, 0
  %v110 = vsel %vm102, %v28, 0
  %v113 = vsel %vm102, %v29, 0
  %v116 = vsel %vm102, %v30, 0
  %v119 = vsel %vm102, %v31, 0
  %v122 = vsel %vm102, %v32, 0
  %v125 = vsel %vm102, %v33, 0
  %v128 = vsel %vm102, %v34, 0
  %v131 = vsel %vm102, %v35, 0
  %v134 = vsel %vm102, %v36, 0
  %v137 = vsel %vm102, %v37, 0
  %v140 = vsel %vm102, %v38, 0
  %v143 = vsel %vm102, %v39, 0
  %v146 = vsel %vm102, %v40, 0
  %v149 = vsel %vm102, %v41, 0
  %v152 = vsel %vm102, %v42, 0
  %v155 = vsel %vm102, %v43, 0
  %v158 = vsel %vm102, %v44, 0
  %v161 = vsel %vm102, %v45, 0
  %v164 = vsel %vm102, %v46, 0
  %v167 = vsel %vm102, %v47, 0
  %v170 = vsel %vm102, %v48, 0
  %v173 = vsel %vm102, %v49, 0
  %v176 = vsel %vm102, %v50, 0
  %v179 = vsel %vm102, %v51, 0
  %v182 = vsel %vm102, %v52, 0
  %v185 = vsel %vm102, %v53, 0
  %v188 = vsel %vm102, %v54, 0
  %v191 = vsel %vm102, %v55, 0
  %v194 = vsel %vm102, %v56, 0
  %v197 = vsel %vm102, %v57, 0
  %v200 = vsel %vm102, %v58, 0
  %v203 = vsel %vm102, %v59, 0
  %v206 = vsel %vm102, %v60, 0
  %v209 = vsel %vm102, %v61, 0
  %v212 = vsel %vm102, %v62, 0
  %v215 = vsel %vm102, %v63, 0
  %v218 = vsel %vm102, %v64, 0
  %v221 = vsel %vm102, %v65, 0
  %v224 = vsel %vm102, %v66, 0
  %v227 = vsel %vm102, %v67, 0
  %v230 = vsel %vm102, %v68, 0
  %v233 = vsel %vm102, %v69, 0
  %v236 = vsel %vm102, %v70, 0
  %v239 = vsel %vm102, %v71, 0
  %v242 = vsel %vm102, %v72, 0
  %v245 = vsel %vm102, %v73, 0
  %v248 = vsel %vm102, %v74, 0
  %v251 = vsel %vm102, %v75, 0
  %v254 = vsel %vm102, %v76, 0
  %v257 = vsel %vm102, %v77, 0
  %v260 = vsel %vm102, %v78, 0
  %v263 = vsel %vm102, %v79, 0
  %v266 = vsel %vm102, %v80, 0
  %v269 = vsel %vm102, %v81, 0
  %v272 = vsel %vm102, %v82, 0
  %v275 = vsel %vm102, %v83, 0
  %v278 = vsel %vm102, %v84, 0
  %v281 = vsel %vm102, %v85, 0
  %v284 = vsel %vm102, %v86, 0
  %v287 = vsel %vm102, %v87, 0
  %v290 = vsel %vm102, %v88, 0
  %v293 = vsel %vm102, %v89, 0
  %vm295 = vcmask 1043456
  %v297 = vsel %vm295, %v94, 0
  %299 = vmatprep.subr.mxu0 0.0
  %v300 = vand.u32 %v90, 4294901760
  %301 = vmatpush1.msra.mxu0 %v300
  %302 = vmatprep.subr.mxu0 0.0
  %v303 = vand.u32 %v91, 4294901760
  %304 = vmatpush1.msra.mxu0 %v303
  %305 = vmatprep.subr.mxu0 0.0
  %v306 = vand.u32 %v92, 4294901760
  %307 = vmatpush1.msra.mxu0 %v306
  %308 = vmatprep.subr.mxu0 0.0
  %v309 = vand.u32 %v93, 4294901760
  %310 = vmatpush1.msra.mxu0 %v309
  %311 = vmatprep.subr.mxu0 0.0
  %v312 = vand.u32 %v297, 4294901760
  %313 = vmatpush1.msra.mxu0 %v312
  %314 = vmatprep.subr.mxu0 0.0
  %315 = vmatpush1.msra.mxu0 0.0
  %316 = vmatprep.subr.mxu0 0.0
  %317 = vmatpush1.msra.mxu0 0.0
  %318 = vmatprep.subr.mxu0 0.0
  %319 = vmatpush1.msra.mxu0 0.0
  %320 = vmatprep.subr.mxu0 0.0
  %321 = vmatpush1.msra.mxu0 0.0
  %322 = vmatprep.subr.mxu0 0.0
  %323 = vmatpush1.msra.mxu0 0.0
  %324 = vmatprep.subr.mxu0 0.0
  %325 = vmatpush1.msra.mxu0 0.0
  %326 = vmatprep.subr.mxu0 0.0
  %327 = vmatpush1.msra.mxu0 0.0
  %328 = vmatprep.subr.mxu0 0.0
  %329 = vmatpush1.msra.mxu0 0.0
  %330 = vmatprep.subr.mxu0 0.0
  %331 = vmatpush1.msra.mxu0 0.0
  %332 = vmatprep.subr.mxu0 0.0
  %333 = vmatpush1.msra.mxu0 0.0
  %334 = vmatprep.subr.mxu0 0.0
  %335 = vmatpush1.msra.mxu0 0.0
  %336 = vmatprep.subr.mxu0 0.0
  %337 = vmatpush1.msra.mxu0 0.0
  %338 = vmatprep.subr.mxu0 0.0
  %339 = vmatpush1.msra.mxu0 0.0
  %340 = vmatprep.subr.mxu0 0.0
  %341 = vmatpush1.msra.mxu0 0.0
  %342 = vmatprep.subr.mxu0 0.0
  %343 = vmatpush1.msra.mxu0 0.0
  %344 = vmatprep.subr.mxu0 0.0
  %345 = vmatpush1.msra.mxu0 0.0
  %346 = vmatprep.subr.mxu0 0.0
  %347 = vmatpush1.msra.mxu0 0.0
  %348 = vmatprep.subr.mxu0 0.0
  %349 = vmatpush1.msra.mxu0 0.0
  %350 = vmatprep.subr.mxu0 0.0
  %351 = vmatpush1.msra.mxu0 0.0
  %352 = vmatprep.subr.mxu0 0.0
  %353 = vmatpush1.msra.mxu0 0.0
  %354 = vmatprep.subr.mxu0 0.0
  %355 = vmatpush1.msra.mxu0 0.0
  %356 = vmatprep.subr.mxu0 0.0
  %357 = vmatpush1.msra.mxu0 0.0
  %358 = vmatprep.subr.mxu0 0.0
  %359 = vmatpush1.msra.mxu0 0.0
  %360 = vmatprep.subr.mxu0 0.0
  %361 = vmatpush1.msra.mxu0 0.0
  %362 = vmatprep.subr.mxu0 0.0
  %363 = vmatpush1.msra.mxu0 0.0
  %364 = vmatprep.subr.mxu0 0.0
  %365 = vmatpush1.msra.mxu0 0.0
  %366 = vmatprep.subr.mxu0 0.0
  %367 = vmatpush1.msra.mxu0 0.0
  %368 = vmatprep.mubr.f32.mxu0 0.0
  %v369 = vand.u32 %v104, 4294901760
  %v370 = vsub.f32 %v104, %v369
  %v371 = vand.u32 %v370, 4294901760
  %v372 = vsub.f32 %v370, %v371
  %v373 = vand.u32 %v372, 4294901760
  %374 = vmatmul.mubr.f32.gmra.mrb[0].mxu0 %v373
  %v375 = vpop.f32.mrb[0].mxu0
  %v376 = vadd.f32 %v100, %v375
  %v377 = vpop.f32.mrb[0].mxu0
  %378 = vmatprep.mubr.f32.mxu0 0.0
  %v379 = vand.u32 %v107, 4294901760
  %v380 = vsub.f32 %v107, %v379
  %v381 = vand.u32 %v380, 4294901760
  %v382 = vsub.f32 %v380, %v381
  %v383 = vand.u32 %v382, 4294901760
  %384 = vmatmul.mubr.f32.gmra.mrb[0].mxu0 %v383
  %v385 = vpop.f32.mrb[0].mxu0
  %v386 = vadd.f32 %v100, %v385
  %v387 = vpop.f32.mrb[0].mxu0
  %388 = vmatprep.mubr.f32.mxu0 0.0
  %v389 = vand.u32 %v110, 4294901760
  %v390 = vsub.f32 %v110, %v389
  %v391 = vand.u32 %v390, 4294901760
  %v392 = vsub.f32 %v390, %v391
  %v393 = vand.u32 %v392, 4294901760
  %394 = vmatmul.mubr.f32.gmra.mrb[0].mxu0 %v393
  %v395 = vpop.f32.mrb[0].mxu0
  %v396 = vadd.f32 %v100, %v395
  %v397 = vpop.f32.mrb[0].mxu0
  %398 = vmatprep.mubr.f32.mxu0 0.0
  %v399 = vand.u32 %v113, 4294901760
  %v400 = vsub.f32 %v113, %v399
  %v401 = vand.u32 %v400, 4294901760
  %v402 = vsub.f32 %v400, %v401
  %v403 = vand.u32 %v402, 4294901760
  %404 = vmatmul.mubr.f32.gmra.mrb[0].mxu0 %v403
  %v405 = vpop.f32.mrb[0].mxu0
  %v406 = vadd.f32 %v100, %v405
  %v407 = vpop.f32.mrb[0].mxu0
  %408 = vmatprep.mubr.f32.mxu0 0.0
  %v409 = vand.u32 %v116, 4294901760
  %v410 = vsub.f32 %v116, %v409
  %v411 = vand.u32 %v410, 4294901760
  %v412 = vsub.f32 %v410, %v411
  %v413 = vand.u32 %v412, 4294901760
  %414 = vmatmul.mubr.f32.gmra.mrb[0].mxu0 %v413
  %v415 = vpop.f32.mrb[0].mxu0
  %v416 = vadd.f32 %v100, %v415
  %v417 = vpop.f32.mrb[0].mxu0
  %418 = vmatprep.mubr.f32.mxu0 0.0
  %v419 = vand.u32 %v119, 4294901760
  %v420 = vsub.f32 %v119, %v419
  %v421 = vand.u32 %v420, 4294901760
  %v422 = vsub.f32 %v420, %v421
  %v423 = vand.u32 %v422, 4294901760
  %424 = vmatmul.mubr.f32.gmra.mrb[0].mxu0 %v423
  %v425 = vpop.f32.mrb[0].mxu0
  %v426 = vadd.f32 %v100, %v425
  %v427 = vpop.f32.mrb[0].mxu0
  %428 = vmatprep.mubr.f32.mxu0 0.0
  %v429 = vand.u32 %v122, 4294901760
  %v430 = vsub.f32 %v122, %v429
  %v431 = vand.u32 %v430, 4294901760
  %v432 = vsub.f32 %v430, %v431
  %v433 = vand.u32 %v432, 4294901760
  %434 = vmatmul.mubr.f32.gmra.mrb[0].mxu0 %v433
  %v435 = vpop.f32.mrb[0].mxu0
  %v436 = vadd.f32 %v100, %v435
  %v437 = vpop.f32.mrb[0].mxu0
  %438 = vmatprep.mubr.f32.mxu0 0.0
  %v439 = vand.u32 %v125, 4294901760
  %v440 = vsub.f32 %v125, %v439
  %v441 = vand.u32 %v440, 4294901760
  %v442 = vsub.f32 %v440, %v441
  %v443 = vand.u32 %v442, 4294901760
  %444 = vmatmul.mubr.f32.gmra.mrb[0].mxu0 %v443
  %v445 = vpop.f32.mrb[0].mxu0
  %v446 = vadd.f32 %v100, %v445
  %v447 = vpop.f32.mrb[0].mxu0
  %448 = vmatprep.mubr.f32.mxu0 0.0
  %v449 = vand.u32 %v128, 4294901760
  %v450 = vsub.f32 %v128, %v449
  %v451 = vand.u32 %v450, 4294901760
  %v452 = vsub.f32 %v450, %v451
  %v453 = vand.u32 %v452, 4294901760
  %454 = vmatmul.mubr.f32.gmra.mrb[0].mxu0 %v453
  %v455 = vpop.f32.mrb[0].mxu0
  %v456 = vadd.f32 %v100, %v455
  %v457 = vpop.f32.mrb[0].mxu0
  %458 = vmatprep.mubr.f32.mxu0 0.0
  %v459 = vand.u32 %v131, 4294901760
  %v460 = vsub.f32 %v131, %v459
  %v461 = vand.u32 %v460, 4294901760
  %v462 = vsub.f32 %v460, %v461
  %v463 = vand.u32 %v462, 4294901760
  %464 = vmatmul.mubr.f32.gmra.mrb[0].mxu0 %v463
  %v465 = vpop.f32.mrb[0].mxu0
  %v466 = vadd.f32 %v100, %v465
  %v467 = vpop.f32.mrb[0].mxu0
  %468 = vmatprep.mubr.f32.mxu0 0.0
  %v469 = vand.u32 %v134, 4294901760
  %v470 = vsub.f32 %v134, %v469
  %v471 = vand.u32 %v470, 4294901760
  %v472 = vsub.f32 %v470, %v471
  %v473 = vand.u32 %v472, 4294901760
  %474 = vmatmul.mubr.f32.gmra.mrb[0].mxu0 %v473
  %v475 = vpop.f32.mrb[0].mxu0
  %v476 = vadd.f32 %v100, %v475
  %v477 = vpop.f32.mrb[0].mxu0
  %478 = vmatprep.mubr.f32.mxu0 0.0
  %v479 = vand.u32 %v137, 4294901760
  %v480 = vsub.f32 %v137, %v479
  %v481 = vand.u32 %v480, 4294901760
  %v482 = vsub.f32 %v480, %v481
  %v483 = vand.u32 %v482, 4294901760
  %484 = vmatmul.mubr.f32.gmra.mrb[0].mxu0 %v483
  %v485 = vpop.f32.mrb[0].mxu0
  %v486 = vadd.f32 %v100, %v485
  %v487 = vpop.f32.mrb[0].mxu0
  %488 = vmatprep.mubr.f32.mxu0 0.0
  %v489 = vand.u32 %v140, 4294901760
  %v490 = vsub.f32 %v140, %v489
  %v491 = vand.u32 %v490, 4294901760
  %v492 = vsub.f32 %v490, %v491
  %v493 = vand.u32 %v492, 4294901760
  %494 = vmatmul.mubr.f32.gmra.mrb[0].mxu0 %v493
  %v495 = vpop.f32.mrb[0].mxu0
  %v496 = vadd.f32 %v100, %v495
  %v497 = vpop.f32.mrb[0].mxu0
  %498 = vmatprep.mubr.f32.mxu0 0.0
  %v499 = vand.u32 %v143, 4294901760
  %v500 = vsub.f32 %v143, %v499
  %v501 = vand.u32 %v500, 4294901760
  %v502 = vsub.f32 %v500, %v501
  %v503 = vand.u32 %v502, 4294901760
  %504 = vmatmul.mubr.f32.gmra.mrb[0].mxu0 %v503
  %v505 = vpop.f32.mrb[0].mxu0
  %v506 = vadd.f32 %v100, %v505
  %v507 = vpop.f32.mrb[0].mxu0
  %508 = vmatprep.mubr.f32.mxu0 0.0
  %v509 = vand.u32 %v146, 4294901760
  %v510 = vsub.f32 %v146, %v509
  %v511 = vand.u32 %v510, 4294901760
  %v512 = vsub.f32 %v510, %v511
  %v513 = vand.u32 %v512, 4294901760
  %514 = vmatmul.mubr.f32.gmra.mrb[0].mxu0 %v513
  %v515 = vpop.f32.mrb[0].mxu0
  %v516 = vadd.f32 %v100, %v515
  %v517 = vpop.f32.mrb[0].mxu0
  %518 = vmatprep.mubr.f32.mxu0 0.0
  %v519 = vand.u32 %v149, 4294901760
  %v520 = vsub.f32 %v149, %v519
  %v521 = vand.u32 %v520, 4294901760
  %v522 = vsub.f32 %v520, %v521
  %v523 = vand.u32 %v522, 4294901760
  %524 = vmatmul.mubr.f32.gmra.mrb[0].mxu0 %v523
  %v525 = vpop.f32.mrb[0].mxu0
  %v526 = vadd.f32 %v100, %v525
  %v527 = vpop.f32.mrb[0].mxu0
  %528 = vmatprep.mubr.f32.mxu0 0.0
  %v529 = vand.u32 %v152, 4294901760
  %v530 = vsub.f32 %v152, %v529
  %v531 = vand.u32 %v530, 4294901760
  %v532 = vsub.f32 %v530, %v531
  %v533 = vand.u32 %v532, 4294901760
  %534 = vmatmul.mubr.f32.gmra.mrb[0].mxu0 %v533
  %v535 = vpop.f32.mrb[0].mxu0
  %v536 = vadd.f32 %v100, %v535
  %v537 = vpop.f32.mrb[0].mxu0
  %538 = vmatprep.mubr.f32.mxu0 0.0
  %v539 = vand.u32 %v155, 4294901760
  %v540 = vsub.f32 %v155, %v539
  %v541 = vand.u32 %v540, 4294901760
  %v542 = vsub.f32 %v540, %v541
  %v543 = vand.u32 %v542, 4294901760
  %544 = vmatmul.mubr.f32.gmra.mrb[0].mxu0 %v543
  %v545 = vpop.f32.mrb[0].mxu0
  %v546 = vadd.f32 %v100, %v545
  %v547 = vpop.f32.mrb[0].mxu0
  %548 = vmatprep.mubr.f32.mxu0 0.0
  %v549 = vand.u32 %v158, 4294901760
  %v550 = vsub.f32 %v158, %v549
  %v551 = vand.u32 %v550, 4294901760
  %v552 = vsub.f32 %v550, %v551
  %v553 = vand.u32 %v552, 4294901760
  %554 = vmatmul.mubr.f32.gmra.mrb[0].mxu0 %v553
  %v555 = vpop.f32.mrb[0].mxu0
  %v556 = vadd.f32 %v100, %v555
  %v557 = vpop.f32.mrb[0].mxu0
  %558 = vmatprep.mubr.f32.mxu0 0.0
  %v559 = vand.u32 %v161, 4294901760
  %v560 = vsub.f32 %v161, %v559
  %v561 = vand.u32 %v560, 4294901760
  %v562 = vsub.f32 %v560, %v561
  %v563 = vand.u32 %v562, 4294901760
  %564 = vmatmul.mubr.f32.gmra.mrb[0].mxu0 %v563
  %v565 = vpop.f32.mrb[0].mxu0
  %v566 = vadd.f32 %v100, %v565
  %v567 = vpop.f32.mrb[0].mxu0
  %568 = vmatprep.mubr.f32.mxu0 0.0
  %v569 = vand.u32 %v164, 4294901760
  %v570 = vsub.f32 %v164, %v569
  %v571 = vand.u32 %v570, 4294901760
  %v572 = vsub.f32 %v570, %v571
  %v573 = vand.u32 %v572, 4294901760
  %574 = vmatmul.mubr.f32.gmra.mrb[0].mxu0 %v573
  %v575 = vpop.f32.mrb[0].mxu0
  %v576 = vadd.f32 %v100, %v575
  %v577 = vpop.f32.mrb[0].mxu0
  %578 = vmatprep.mubr.f32.mxu0 0.0
  %v579 = vand.u32 %v167, 4294901760
  %v580 = vsub.f32 %v167, %v579
  %v581 = vand.u32 %v580, 4294901760
  %v582 = vsub.f32 %v580, %v581
  %v583 = vand.u32 %v582, 4294901760
  %584 = vmatmul.mubr.f32.gmra.mrb[0].mxu0 %v583
  %v585 = vpop.f32.mrb[0].mxu0
  %v586 = vadd.f32 %v100, %v585
  %v587 = vpop.f32.mrb[0].mxu0
  %588 = vmatprep.mubr.f32.mxu0 0.0
  %v589 = vand.u32 %v170, 4294901760
  %v590 = vsub.f32 %v170, %v589
  %v591 = vand.u32 %v590, 4294901760
  %v592 = vsub.f32 %v590, %v591
  %v593 = vand.u32 %v592, 4294901760
  %594 = vmatmul.mubr.f32.gmra.mrb[0].mxu0 %v593
  %v595 = vpop.f32.mrb[0].mxu0
  %v596 = vadd.f32 %v100, %v595
  %v597 = vpop.f32.mrb[0].mxu0
  %598 = vmatprep.mubr.f32.mxu0 0.0
  %v599 = vand.u32 %v173, 4294901760
  %v600 = vsub.f32 %v173, %v599
  %v601 = vand.u32 %v600, 4294901760
  %v602 = vsub.f32 %v600, %v601
  %v603 = vand.u32 %v602, 4294901760
  %604 = vmatmul.mubr.f32.gmra.mrb[0].mxu0 %v603
  %v605 = vpop.f32.mrb[0].mxu0
  %v606 = vadd.f32 %v100, %v605
  %v607 = vpop.f32.mrb[0].mxu0
  %608 = vmatprep.mubr.f32.mxu0 0.0
  %v609 = vand.u32 %v176, 4294901760
  %v610 = vsub.f32 %v176, %v609
  %v611 = vand.u32 %v610, 4294901760
  %v612 = vsub.f32 %v610, %v611
  %v613 = vand.u32 %v612, 4294901760
  %614 = vmatmul.mubr.f32.gmra.mrb[0].mxu0 %v613
  %v615 = vpop.f32.mrb[0].mxu0
  %v616 = vadd.f32 %v100, %v615
  %v617 = vpop.f32.mrb[0].mxu0
  %618 = vmatprep.mubr.f32.mxu0 0.0
  %v619 = vand.u32 %v179, 4294901760
  %v620 = vsub.f32 %v179, %v619
  %v621 = vand.u32 %v620, 4294901760
  %v622 = vsub.f32 %v620, %v621
  %v623 = vand.u32 %v622, 4294901760
  %624 = vmatmul.mubr.f32.gmra.mrb[0].mxu0 %v623
  %v625 = vpop.f32.mrb[0].mxu0
  %v626 = vadd.f32 %v100, %v625
  %v627 = vpop.f32.mrb[0].mxu0
  %628 = vmatprep.mubr.f32.mxu0 0.0
  %v629 = vand.u32 %v182, 4294901760
  %v630 = vsub.f32 %v182, %v629
  %v631 = vand.u32 %v630, 4294901760
  %v632 = vsub.f32 %v630, %v631
  %v633 = vand.u32 %v632, 4294901760
  %634 = vmatmul.mubr.f32.gmra.mrb[0].mxu0 %v633
  %v635 = vpop.f32.mrb[0].mxu0
  %v636 = vadd.f32 %v100, %v635
  %v637 = vpop.f32.mrb[0].mxu0
  %638 = vmatprep.mubr.f32.mxu0 0.0
  %v639 = vand.u32 %v185, 4294901760
  %v640 = vsub.f32 %v185, %v639
  %v641 = vand.u32 %v640, 4294901760
  %v642 = vsub.f32 %v640, %v641
  %v643 = vand.u32 %v642, 4294901760
  %644 = vmatmul.mubr.f32.gmra.mrb[0].mxu0 %v643
  %v645 = vpop.f32.mrb[0].mxu0
  %v646 = vadd.f32 %v100, %v645
  %v647 = vpop.f32.mrb[0].mxu0
  %648 = vmatprep.mubr.f32.mxu0 0.0
  %v649 = vand.u32 %v188, 4294901760
  %v650 = vsub.f32 %v188, %v649
  %v651 = vand.u32 %v650, 4294901760
  %v652 = vsub.f32 %v650, %v651
  %v653 = vand.u32 %v652, 4294901760
  %654 = vmatmul.mubr.f32.gmra.mrb[0].mxu0 %v653
  %v655 = vpop.f32.mrb[0].mxu0
  %v656 = vadd.f32 %v100, %v655
  %v657 = vpop.f32.mrb[0].mxu0
  %658 = vmatprep.mubr.f32.mxu0 0.0
  %v659 = vand.u32 %v191, 4294901760
  %v660 = vsub.f32 %v191, %v659
  %v661 = vand.u32 %v660, 4294901760
  %v662 = vsub.f32 %v660, %v661
  %v663 = vand.u32 %v662, 4294901760
  %664 = vmatmul.mubr.f32.gmra.mrb[0].mxu0 %v663
  %v665 = vpop.f32.mrb[0].mxu0
  %v666 = vadd.f32 %v100, %v665
  %v667 = vpop.f32.mrb[0].mxu0
  %668 = vmatprep.mubr.f32.mxu0 0.0
  %v669 = vand.u32 %v194, 4294901760
  %v670 = vsub.f32 %v194, %v669
  %v671 = vand.u32 %v670, 4294901760
  %v672 = vsub.f32 %v670, %v671
  %v673 = vand.u32 %v672, 4294901760
  %674 = vmatmul.mubr.f32.gmra.mrb[0].mxu0 %v673
  %v675 = vpop.f32.mrb[0].mxu0
  %v676 = vadd.f32 %v100, %v675
  %v677 = vpop.f32.mrb[0].mxu0
  %678 = vmatprep.mubr.f32.mxu0 0.0
  %v679 = vand.u32 %v197, 4294901760
  %v680 = vsub.f32 %v197, %v679
  %v681 = vand.u32 %v680, 4294901760
  %v682 = vsub.f32 %v680, %v681
  %v683 = vand.u32 %v682, 4294901760
  %684 = vmatmul.mubr.f32.gmra.mrb[0].mxu0 %v683
  %v685 = vpop.f32.mrb[0].mxu0
  %v686 = vadd.f32 %v100, %v685
  %v687 = vpop.f32.mrb[0].mxu0
  %688 = vmatprep.mubr.f32.mxu0 0.0
  %v689 = vand.u32 %v200, 4294901760
  %v690 = vsub.f32 %v200, %v689
  %v691 = vand.u32 %v690, 4294901760
  %v692 = vsub.f32 %v690, %v691
  %v693 = vand.u32 %v692, 4294901760
  %694 = vmatmul.mubr.f32.gmra.mrb[0].mxu0 %v693
  %v695 = vpop.f32.mrb[0].mxu0
  %v696 = vadd.f32 %v100, %v695
  %v697 = vpop.f32.mrb[0].mxu0
  %698 = vmatprep.mubr.f32.mxu0 0.0
  %v699 = vand.u32 %v203, 4294901760
  %v700 = vsub.f32 %v203, %v699
  %v701 = vand.u32 %v700, 4294901760
  %v702 = vsub.f32 %v700, %v701
  %v703 = vand.u32 %v702, 4294901760
  %704 = vmatmul.mubr.f32.gmra.mrb[0].mxu0 %v703
  %v705 = vpop.f32.mrb[0].mxu0
  %v706 = vadd.f32 %v100, %v705
  %v707 = vpop.f32.mrb[0].mxu0
  %708 = vmatprep.mubr.f32.mxu0 0.0
  %v709 = vand.u32 %v206, 4294901760
  %v710 = vsub.f32 %v206, %v709
  %v711 = vand.u32 %v710, 4294901760
  %v712 = vsub.f32 %v710, %v711
  %v713 = vand.u32 %v712, 4294901760
  %714 = vmatmul.mubr.f32.gmra.mrb[0].mxu0 %v713
  %v715 = vpop.f32.mrb[0].mxu0
  %v716 = vadd.f32 %v100, %v715
  %v717 = vpop.f32.mrb[0].mxu0
  %718 = vmatprep.mubr.f32.mxu0 0.0
  %v719 = vand.u32 %v209, 4294901760
  %v720 = vsub.f32 %v209, %v719
  %v721 = vand.u32 %v720, 4294901760
  %v722 = vsub.f32 %v720, %v721
  %v723 = vand.u32 %v722, 4294901760
  %724 = vmatmul.mubr.f32.gmra.mrb[0].mxu0 %v723
  %v725 = vpop.f32.mrb[0].mxu0
  %v726 = vadd.f32 %v100, %v725
  %v727 = vpop.f32.mrb[0].mxu0
  %728 = vmatprep.mubr.f32.mxu0 0.0
  %v729 = vand.u32 %v212, 4294901760
  %v730 = vsub.f32 %v212, %v729
  %v731 = vand.u32 %v730, 4294901760
  %v732 = vsub.f32 %v730, %v731
  %v733 = vand.u32 %v732, 4294901760
  %734 = vmatmul.mubr.f32.gmra.mrb[0].mxu0 %v733
  %v735 = vpop.f32.mrb[0].mxu0
  %v736 = vadd.f32 %v100, %v735
  %v737 = vpop.f32.mrb[0].mxu0
  %738 = vmatprep.mubr.f32.mxu0 0.0
  %v739 = vand.u32 %v215, 4294901760
  %v740 = vsub.f32 %v215, %v739
  %v741 = vand.u32 %v740, 4294901760
  %v742 = vsub.f32 %v740, %v741
  %v743 = vand.u32 %v742, 4294901760
  %744 = vmatmul.mubr.f32.gmra.mrb[0].mxu0 %v743
  %v745 = vpop.f32.mrb[0].mxu0
  %v746 = vadd.f32 %v100, %v745
  %v747 = vpop.f32.mrb[0].mxu0
  %748 = vmatprep.mubr.f32.mxu0 0.0
  %v749 = vand.u32 %v218, 4294901760
  %v750 = vsub.f32 %v218, %v749
  %v751 = vand.u32 %v750, 4294901760
  %v752 = vsub.f32 %v750, %v751
  %v753 = vand.u32 %v752, 4294901760
  %754 = vmatmul.mubr.f32.gmra.mrb[0].mxu0 %v753
  %v755 = vpop.f32.mrb[0].mxu0
  %v756 = vadd.f32 %v100, %v755
  %v757 = vpop.f32.mrb[0].mxu0
  %758 = vmatprep.mubr.f32.mxu0 0.0
  %v759 = vand.u32 %v221, 4294901760
  %v760 = vsub.f32 %v221, %v759
  %v761 = vand.u32 %v760, 4294901760
  %v762 = vsub.f32 %v760, %v761
  %v763 = vand.u32 %v762, 4294901760
  %764 = vmatmul.mubr.f32.gmra.mrb[0].mxu0 %v763
  %v765 = vpop.f32.mrb[0].mxu0
  %v766 = vadd.f32 %v100, %v765
  %v767 = vpop.f32.mrb[0].mxu0
  %768 = vmatprep.mubr.f32.mxu0 0.0
  %v769 = vand.u32 %v224, 4294901760
  %v770 = vsub.f32 %v224, %v769
  %v771 = vand.u32 %v770, 4294901760
  %v772 = vsub.f32 %v770, %v771
  %v773 = vand.u32 %v772, 4294901760
  %774 = vmatmul.mubr.f32.gmra.mrb[0].mxu0 %v773
  %v775 = vpop.f32.mrb[0].mxu0
  %v776 = vadd.f32 %v100, %v775
  %v777 = vpop.f32.mrb[0].mxu0
  %778 = vmatprep.mubr.f32.mxu0 0.0
  %v779 = vand.u32 %v227, 4294901760
  %v780 = vsub.f32 %v227, %v779
  %v781 = vand.u32 %v780, 4294901760
  %v782 = vsub.f32 %v780, %v781
  %v783 = vand.u32 %v782, 4294901760
  %784 = vmatmul.mubr.f32.gmra.mrb[0].mxu0 %v783
  %v785 = vpop.f32.mrb[0].mxu0
  %v786 = vadd.f32 %v100, %v785
  %v787 = vpop.f32.mrb[0].mxu0
  %788 = vmatprep.mubr.f32.mxu0 0.0
  %v789 = vand.u32 %v230, 4294901760
  %v790 = vsub.f32 %v230, %v789
  %v791 = vand.u32 %v790, 4294901760
  %v792 = vsub.f32 %v790, %v791
  %v793 = vand.u32 %v792, 4294901760
  %794 = vmatmul.mubr.f32.gmra.mrb[0].mxu0 %v793
  %v795 = vpop.f32.mrb[0].mxu0
  %v796 = vadd.f32 %v100, %v795
  %v797 = vpop.f32.mrb[0].mxu0
  %798 = vmatprep.mubr.f32.mxu0 0.0
  %v799 = vand.u32 %v233, 4294901760
  %v800 = vsub.f32 %v233, %v799
  %v801 = vand.u32 %v800, 4294901760
  %v802 = vsub.f32 %v800, %v801
  %v803 = vand.u32 %v802, 4294901760
  %804 = vmatmul.mubr.f32.gmra.mrb[0].mxu0 %v803
  %v805 = vpop.f32.mrb[0].mxu0
  %v806 = vadd.f32 %v100, %v805
  %v807 = vpop.f32.mrb[0].mxu0
  %808 = vmatprep.mubr.f32.mxu0 0.0
  %v809 = vand.u32 %v236, 4294901760
  %v810 = vsub.f32 %v236, %v809
  %v811 = vand.u32 %v810, 4294901760
  %v812 = vsub.f32 %v810, %v811
  %v813 = vand.u32 %v812, 4294901760
  %814 = vmatmul.mubr.f32.gmra.mrb[0].mxu0 %v813
  %v815 = vpop.f32.mrb[0].mxu0
  %v816 = vadd.f32 %v100, %v815
  %v817 = vpop.f32.mrb[0].mxu0
  %818 = vmatprep.mubr.f32.mxu0 0.0
  %v819 = vand.u32 %v239, 4294901760
  %v820 = vsub.f32 %v239, %v819
  %v821 = vand.u32 %v820, 4294901760
  %v822 = vsub.f32 %v820, %v821
  %v823 = vand.u32 %v822, 4294901760
  %824 = vmatmul.mubr.f32.gmra.mrb[0].mxu0 %v823
  %v825 = vpop.f32.mrb[0].mxu0
  %v826 = vadd.f32 %v100, %v825
  %v827 = vpop.f32.mrb[0].mxu0
  %828 = vmatprep.mubr.f32.mxu0 0.0
  %v829 = vand.u32 %v242, 4294901760
  %v830 = vsub.f32 %v242, %v829
  %v831 = vand.u32 %v830, 4294901760
  %v832 = vsub.f32 %v830, %v831
  %v833 = vand.u32 %v832, 4294901760
  %834 = vmatmul.mubr.f32.gmra.mrb[0].mxu0 %v833
  %v835 = vpop.f32.mrb[0].mxu0
  %v836 = vadd.f32 %v100, %v835
  %v837 = vpop.f32.mrb[0].mxu0
  %838 = vmatprep.mubr.f32.mxu0 0.0
  %v839 = vand.u32 %v245, 4294901760
  %v840 = vsub.f32 %v245, %v839
  %v841 = vand.u32 %v840, 4294901760
  %v842 = vsub.f32 %v840, %v841
  %v843 = vand.u32 %v842, 4294901760
  %844 = vmatmul.mubr.f32.gmra.mrb[0].mxu0 %v843
  %v845 = vpop.f32.mrb[0].mxu0
  %v846 = vadd.f32 %v100, %v845
  %v847 = vpop.f32.mrb[0].mxu0
  %848 = vmatprep.mubr.f32.mxu0 0.0
  %v849 = vand.u32 %v248, 4294901760
  %v850 = vsub.f32 %v248, %v849
  %v851 = vand.u32 %v850, 4294901760
  %v852 = vsub.f32 %v850, %v851
  %v853 = vand.u32 %v852, 4294901760
  %854 = vmatmul.mubr.f32.gmra.mrb[0].mxu0 %v853
  %v855 = vpop.f32.mrb[0].mxu0
  %v856 = vadd.f32 %v100, %v855
  %v857 = vpop.f32.mrb[0].mxu0
  %858 = vmatprep.mubr.f32.mxu0 0.0
  %v859 = vand.u32 %v251, 4294901760
  %v860 = vsub.f32 %v251, %v859
  %v861 = vand.u32 %v860, 4294901760
  %v862 = vsub.f32 %v860, %v861
  %v863 = vand.u32 %v862, 4294901760
  %864 = vmatmul.mubr.f32.gmra.mrb[0].mxu0 %v863
  %v865 = vpop.f32.mrb[0].mxu0
  %v866 = vadd.f32 %v100, %v865
  %v867 = vpop.f32.mrb[0].mxu0
  %868 = vmatprep.mubr.f32.mxu0 0.0
  %v869 = vand.u32 %v254, 4294901760
  %v870 = vsub.f32 %v254, %v869
  %v871 = vand.u32 %v870, 4294901760
  %v872 = vsub.f32 %v870, %v871
  %v873 = vand.u32 %v872, 4294901760
  %874 = vmatmul.mubr.f32.gmra.mrb[0].mxu0 %v873
  %v875 = vpop.f32.mrb[0].mxu0
  %v876 = vadd.f32 %v100, %v875
  %v877 = vpop.f32.mrb[0].mxu0
  %878 = vmatprep.mubr.f32.mxu0 0.0
  %v879 = vand.u32 %v257, 4294901760
  %v880 = vsub.f32 %v257, %v879
  %v881 = vand.u32 %v880, 4294901760
  %v882 = vsub.f32 %v880, %v881
  %v883 = vand.u32 %v882, 4294901760
  %884 = vmatmul.mubr.f32.gmra.mrb[0].mxu0 %v883
  %v885 = vpop.f32.mrb[0].mxu0
  %v886 = vadd.f32 %v100, %v885
  %v887 = vpop.f32.mrb[0].mxu0
  %888 = vmatprep.mubr.f32.mxu0 0.0
  %v889 = vand.u32 %v260, 4294901760
  %v890 = vsub.f32 %v260, %v889
  %v891 = vand.u32 %v890, 4294901760
  %v892 = vsub.f32 %v890, %v891
  %v893 = vand.u32 %v892, 4294901760
  %894 = vmatmul.mubr.f32.gmra.mrb[0].mxu0 %v893
  %v895 = vpop.f32.mrb[0].mxu0
  %v896 = vadd.f32 %v100, %v895
  %v897 = vpop.f32.mrb[0].mxu0
  %898 = vmatprep.mubr.f32.mxu0 0.0
  %v899 = vand.u32 %v263, 4294901760
  %v900 = vsub.f32 %v263, %v899
  %v901 = vand.u32 %v900, 4294901760
  %v902 = vsub.f32 %v900, %v901
  %v903 = vand.u32 %v902, 4294901760
  %904 = vmatmul.mubr.f32.gmra.mrb[0].mxu0 %v903
  %v905 = vpop.f32.mrb[0].mxu0
  %v906 = vadd.f32 %v100, %v905
  %v907 = vpop.f32.mrb[0].mxu0
  %908 = vmatprep.mubr.f32.mxu0 0.0
  %v909 = vand.u32 %v266, 4294901760
  %v910 = vsub.f32 %v266, %v909
  %v911 = vand.u32 %v910, 4294901760
  %v912 = vsub.f32 %v910, %v911
  %v913 = vand.u32 %v912, 4294901760
  %914 = vmatmul.mubr.f32.gmra.mrb[0].mxu0 %v913
  %v915 = vpop.f32.mrb[0].mxu0
  %v916 = vadd.f32 %v100, %v915
  %v917 = vpop.f32.mrb[0].mxu0
  %918 = vmatprep.mubr.f32.mxu0 0.0
  %v919 = vand.u32 %v269, 4294901760
  %v920 = vsub.f32 %v269, %v919
  %v921 = vand.u32 %v920, 4294901760
  %v922 = vsub.f32 %v920, %v921
  %v923 = vand.u32 %v922, 4294901760
  %924 = vmatmul.mubr.f32.gmra.mrb[0].mxu0 %v923
  %v925 = vpop.f32.mrb[0].mxu0
  %v926 = vadd.f32 %v100, %v925
  %v927 = vpop.f32.mrb[0].mxu0
  %928 = vmatprep.mubr.f32.mxu0 0.0
  %v929 = vand.u32 %v272, 4294901760
  %v930 = vsub.f32 %v272, %v929
  %v931 = vand.u32 %v930, 4294901760
  %v932 = vsub.f32 %v930, %v931
  %v933 = vand.u32 %v932, 4294901760
  %934 = vmatmul.mubr.f32.gmra.mrb[0].mxu0 %v933
  %v935 = vpop.f32.mrb[0].mxu0
  %v936 = vadd.f32 %v100, %v935
  %v937 = vpop.f32.mrb[0].mxu0
  %938 = vmatprep.mubr.f32.mxu0 0.0
  %v939 = vand.u32 %v275, 4294901760
  %v940 = vsub.f32 %v275, %v939
  %v941 = vand.u32 %v940, 4294901760
  %v942 = vsub.f32 %v940, %v941
  %v943 = vand.u32 %v942, 4294901760
  %944 = vmatmul.mubr.f32.gmra.mrb[0].mxu0 %v943
  %v945 = vpop.f32.mrb[0].mxu0
  %v946 = vadd.f32 %v100, %v945
  %v947 = vpop.f32.mrb[0].mxu0
  %948 = vmatprep.mubr.f32.mxu0 0.0
  %v949 = vand.u32 %v278, 4294901760
  %v950 = vsub.f32 %v278, %v949
  %v951 = vand.u32 %v950, 4294901760
  %v952 = vsub.f32 %v950, %v951
  %v953 = vand.u32 %v952, 4294901760
  %954 = vmatmul.mubr.f32.gmra.mrb[0].mxu0 %v953
  %v955 = vpop.f32.mrb[0].mxu0
  %v956 = vadd.f32 %v100, %v955
  %v957 = vpop.f32.mrb[0].mxu0
  %958 = vmatprep.mubr.f32.mxu0 0.0
  %v959 = vand.u32 %v281, 4294901760
  %v960 = vsub.f32 %v281, %v959
  %v961 = vand.u32 %v960, 4294901760
  %v962 = vsub.f32 %v960, %v961
  %v963 = vand.u32 %v962, 4294901760
  %964 = vmatmul.mubr.f32.gmra.mrb[0].mxu0 %v963
  %v965 = vpop.f32.mrb[0].mxu0
  %v966 = vadd.f32 %v100, %v965
  %v967 = vpop.f32.mrb[0].mxu0
  %968 = vmatprep.mubr.f32.mxu0 0.0
  %v969 = vand.u32 %v284, 4294901760
  %v970 = vsub.f32 %v284, %v969
  %v971 = vand.u32 %v970, 4294901760
  %v972 = vsub.f32 %v970, %v971
  %v973 = vand.u32 %v972, 4294901760
  %974 = vmatmul.mubr.f32.gmra.mrb[0].mxu0 %v973
  %v975 = vpop.f32.mrb[0].mxu0
  %v976 = vadd.f32 %v100, %v975
  %v977 = vpop.f32.mrb[0].mxu0
  %978 = vmatprep.mubr.f32.mxu0 0.0
  %v979 = vand.u32 %v287, 4294901760
  %v980 = vsub.f32 %v287, %v979
  %v981 = vand.u32 %v980, 4294901760
  %v982 = vsub.f32 %v980, %v981
  %v983 = vand.u32 %v982, 4294901760
  %984 = vmatmul.mubr.f32.gmra.mrb[0].mxu0 %v983
  %v985 = vpop.f32.mrb[0].mxu0
  %v986 = vadd.f32 %v100, %v985
  %v987 = vpop.f32.mrb[0].mxu0
  %988 = vmatprep.mubr.f32.mxu0 0.0
  %v989 = vand.u32 %v290, 4294901760
  %v990 = vsub.f32 %v290, %v989
  %v991 = vand.u32 %v990, 4294901760
  %v992 = vsub.f32 %v990, %v991
  %v993 = vand.u32 %v992, 4294901760
  %994 = vmatmul.mubr.f32.gmra.mrb[0].mxu0 %v993
  %v995 = vpop.f32.mrb[0].mxu0
  %v996 = vadd.f32 %v100, %v995
  %v997 = vpop.f32.mrb[0].mxu0
  %998 = vmatprep.mubr.f32.mxu0 0.0
  %v999 = vand.u32 %v293, 4294901760
  %v1000 = vsub.f32 %v293, %v999
  %v1001 = vand.u32 %v1000, 4294901760
  %v1002 = vsub.f32 %v1000, %v1001
  %v1003 = vand.u32 %v1002, 4294901760
  %1004 = vmatmul.mubr.f32.gmra.mrb[0].mxu0 %v1003
  %v1005 = vpop.f32.mrb[0].mxu0
  %v1006 = vadd.f32 %v100, %v1005
  %v1007 = vpop.f32.mrb[0].mxu0
  %1008 = vdwg.mxu0
  %1009 = vmatprep.subr.mxu0 0.0
  %v1010 = vand.u32 %v90, 4294901760
  %v1011 = vsub.f32 %v90, %v1010
  %v1012 = vand.u32 %v1011, 4294901760
  %v1013 = vsub.f32 %v1011, %v1012
  %v1014 = vand.u32 %v1013, 4294901760
  %1015 = vmatpush1.msra.mxu0 %v1014
  %1016 = vmatprep.subr.mxu0 0.0
  %v1017 = vand.u32 %v91, 4294901760
  %v1018 = vsub.f32 %v91, %v1017
  %v1019 = vand.u32 %v1018, 4294901760
  %v1020 = vsub.f32 %v1018, %v1019
  %v1021 = vand.u32 %v1020, 4294901760
  %1022 = vmatpush1.msra.mxu0 %v1021
  %1023 = vmatprep.subr.mxu0 0.0
  %v1024 = vand.u32 %v92, 4294901760
  %v1025 = vsub.f32 %v92, %v1024
  %v1026 = vand.u32 %v1025, 4294901760
  %v1027 = vsub.f32 %v1025, %v1026
  %v1028 = vand.u32 %v1027, 4294901760
  %1029 = vmatpush1.msra.mxu0 %v1028
  %1030 = vmatprep.subr.mxu0 0.0
  %v1031 = vand.u32 %v93, 4294901760
  %v1032 = vsub.f32 %v93, %v1031
  %v1033 = vand.u32 %v1032, 4294901760
  %v1034 = vsub.f32 %v1032, %v1033
  %v1035 = vand.u32 %v1034, 4294901760
  %1036 = vmatpush1.msra.mxu0 %v1035
  %1037 = vmatprep.subr.mxu0 0.0
  %v1038 = vand.u32 %v297, 4294901760
  %v1039 = vsub.f32 %v297, %v1038
  %v1040 = vand.u32 %v1039, 4294901760
  %v1041 = vsub.f32 %v1039, %v1040
  %v1042 = vand.u32 %v1041, 4294901760
  %1043 = vmatpush1.msra.mxu0 %v1042
  %1044 = vmatprep.subr.mxu0 0.0
  %1045 = vmatpush1.msra.mxu0 0.0
  %1046 = vmatprep.subr.mxu0 0.0
  %1047 = vmatpush1.msra.mxu0 0.0
  %1048 = vmatprep.subr.mxu0 0.0
  %1049 = vmatpush1.msra.mxu0 0.0
  %1050 = vmatprep.subr.mxu0 0.0
  %1051 = vmatpush1.msra.mxu0 0.0
  %1052 = vmatprep.subr.mxu0 0.0
  %1053 = vmatpush1.msra.mxu0 0.0
  %1054 = vmatprep.subr.mxu0 0.0
  %1055 = vmatpush1.msra.mxu0 0.0
  %1056 = vmatprep.subr.mxu0 0.0
  %1057 = vmatpush1.msra.mxu0 0.0
  %1058 = vmatprep.subr.mxu0 0.0
  %1059 = vmatpush1.msra.mxu0 0.0
  %1060 = vmatprep.subr.mxu0 0.0
  %1061 = vmatpush1.msra.mxu0 0.0
  %1062 = vmatprep.subr.mxu0 0.0
  %1063 = vmatpush1.msra.mxu0 0.0
  %1064 = vmatprep.subr.mxu0 0.0
  %1065 = vmatpush1.msra.mxu0 0.0
  %1066 = vmatprep.subr.mxu0 0.0
  %1067 = vmatpush1.msra.mxu0 0.0
  %1068 = vmatprep.subr.mxu0 0.0
  %1069 = vmatpush1.msra.mxu0 0.0
  %1070 = vmatprep.subr.mxu0 0.0
  %1071 = vmatpush1.msra.mxu0 0.0
  %1072 = vmatprep.subr.mxu0 0.0
  %1073 = vmatpush1.msra.mxu0 0.0
  %1074 = vmatprep.subr.mxu0 0.0
  %1075 = vmatpush1.msra.mxu0 0.0
  %1076 = vmatprep.subr.mxu0 0.0
  %1077 = vmatpush1.msra.mxu0 0.0
  %1078 = vmatprep.subr.mxu0 0.0
  %1079 = vmatpush1.msra.mxu0 0.0
  %1080 = vmatprep.subr.mxu0 0.0
  %1081 = vmatpush1.msra.mxu0 0.0
  %1082 = vmatprep.subr.mxu0 0.0
  %1083 = vmatpush1.msra.mxu0 0.0
  %1084 = vmatprep.subr.mxu0 0.0
  %1085 = vmatpush1.msra.mxu0 0.0
  %1086 = vmatprep.subr.mxu0 0.0
  %1087 = vmatpush1.msra.mxu0 0.0
  %1088 = vmatprep.subr.mxu0 0.0
  %1089 = vmatpush1.msra.mxu0 0.0
  %1090 = vmatprep.subr.mxu0 0.0
  %1091 = vmatpush1.msra.mxu0 0.0
  %1092 = vmatprep.subr.mxu0 0.0
  %1093 = vmatpush1.msra.mxu0 0.0
  %1094 = vmatprep.subr.mxu0 0.0
  %1095 = vmatpush1.msra.mxu0 0.0
  %1096 = vmatprep.subr.mxu0 0.0
  %1097 = vmatpush1.msra.mxu0 0.0
  %1098 = vmatprep.mubr.f32.mxu0 0.0
  %v1099 = vand.u32 %v104, 4294901760
  %1100 = vmatmul.mubr.f32.gmra.mrb[0].mxu0 %v1099
  %v1101 = vpop.f32.mrb[0].mxu0
  %v1102 = vadd.f32 %v376, %v1101
  %v1103 = vpop.f32.mrb[0].mxu0
  %1104 = vmatprep.mubr.f32.mxu0 0.0
  %v1105 = vand.u32 %v107, 4294901760
  %1106 = vmatmul.mubr.f32.gmra.mrb[0].mxu0 %v1105
  %v1107 = vpop.f32.mrb[0].mxu0
  %v1108 = vadd.f32 %v386, %v1107
  %v1109 = vpop.f32.mrb[0].mxu0
  %1110 = vmatprep.mubr.f32.mxu0 0.0
  %v1111 = vand.u32 %v110, 4294901760
  %1112 = vmatmul.mubr.f32.gmra.mrb[0].mxu0 %v1111
  %v1113 = vpop.f32.mrb[0].mxu0
  %v1114 = vadd.f32 %v396, %v1113
  %v1115 = vpop.f32.mrb[0].mxu0
  %1116 = vmatprep.mubr.f32.mxu0 0.0
  %v1117 = vand.u32 %v113, 4294901760
  %1118 = vmatmul.mubr.f32.gmra.mrb[0].mxu0 %v1117
  %v1119 = vpop.f32.mrb[0].mxu0
  %v1120 = vadd.f32 %v406, %v1119
  %v1121 = vpop.f32.mrb[0].mxu0
  %1122 = vmatprep.mubr.f32.mxu0 0.0
  %v1123 = vand.u32 %v116, 4294901760
  %1124 = vmatmul.mubr.f32.gmra.mrb[0].mxu0 %v1123
  %v1125 = vpop.f32.mrb[0].mxu0
  %v1126 = vadd.f32 %v416, %v1125
  %v1127 = vpop.f32.mrb[0].mxu0
  %1128 = vmatprep.mubr.f32.mxu0 0.0
  %v1129 = vand.u32 %v119, 4294901760
  %1130 = vmatmul.mubr.f32.gmra.mrb[0].mxu0 %v1129
  %v1131 = vpop.f32.mrb[0].mxu0
  %v1132 = vadd.f32 %v426, %v1131
  %v1133 = vpop.f32.mrb[0].mxu0
  %1134 = vmatprep.mubr.f32.mxu0 0.0
  %v1135 = vand.u32 %v122, 4294901760
  %1136 = vmatmul.mubr.f32.gmra.mrb[0].mxu0 %v1135
  %v1137 = vpop.f32.mrb[0].mxu0
  %v1138 = vadd.f32 %v436, %v1137
  %v1139 = vpop.f32.mrb[0].mxu0
  %1140 = vmatprep.mubr.f32.mxu0 0.0
  %v1141 = vand.u32 %v125, 4294901760
  %1142 = vmatmul.mubr.f32.gmra.mrb[0].mxu0 %v1141
  %v1143 = vpop.f32.mrb[0].mxu0
  %v1144 = vadd.f32 %v446, %v1143
  %v1145 = vpop.f32.mrb[0].mxu0
  %1146 = vmatprep.mubr.f32.mxu0 0.0
  %v1147 = vand.u32 %v128, 4294901760
  %1148 = vmatmul.mubr.f32.gmra.mrb[0].mxu0 %v1147
  %v1149 = vpop.f32.mrb[0].mxu0
  %v1150 = vadd.f32 %v456, %v1149
  %v1151 = vpop.f32.mrb[0].mxu0
  %1152 = vmatprep.mubr.f32.mxu0 0.0
  %v1153 = vand.u32 %v131, 4294901760
  %1154 = vmatmul.mubr.f32.gmra.mrb[0].mxu0 %v1153
  %v1155 = vpop.f32.mrb[0].mxu0
  %v1156 = vadd.f32 %v466, %v1155
  %v1157 = vpop.f32.mrb[0].mxu0
  %1158 = vmatprep.mubr.f32.mxu0 0.0
  %v1159 = vand.u32 %v134, 4294901760
  %1160 = vmatmul.mubr.f32.gmra.mrb[0].mxu0 %v1159
  %v1161 = vpop.f32.mrb[0].mxu0
  %v1162 = vadd.f32 %v476, %v1161
  %v1163 = vpop.f32.mrb[0].mxu0
  %1164 = vmatprep.mubr.f32.mxu0 0.0
  %v1165 = vand.u32 %v137, 4294901760
  %1166 = vmatmul.mubr.f32.gmra.mrb[0].mxu0 %v1165
  %v1167 = vpop.f32.mrb[0].mxu0
  %v1168 = vadd.f32 %v486, %v1167
  %v1169 = vpop.f32.mrb[0].mxu0
  %1170 = vmatprep.mubr.f32.mxu0 0.0
  %v1171 = vand.u32 %v140, 4294901760
  %1172 = vmatmul.mubr.f32.gmra.mrb[0].mxu0 %v1171
  %v1173 = vpop.f32.mrb[0].mxu0
  %v1174 = vadd.f32 %v496, %v1173
  %v1175 = vpop.f32.mrb[0].mxu0
  %1176 = vmatprep.mubr.f32.mxu0 0.0
  %v1177 = vand.u32 %v143, 4294901760
  %1178 = vmatmul.mubr.f32.gmra.mrb[0].mxu0 %v1177
  %v1179 = vpop.f32.mrb[0].mxu0
  %v1180 = vadd.f32 %v506, %v1179
  %v1181 = vpop.f32.mrb[0].mxu0
  %1182 = vmatprep.mubr.f32.mxu0 0.0
  %v1183 = vand.u32 %v146, 4294901760
  %1184 = vmatmul.mubr.f32.gmra.mrb[0].mxu0 %v1183
  %v1185 = vpop.f32.mrb[0].mxu0
  %v1186 = vadd.f32 %v516, %v1185
  %v1187 = vpop.f32.mrb[0].mxu0
  %1188 = vmatprep.mubr.f32.mxu0 0.0
  %v1189 = vand.u32 %v149, 4294901760
  %1190 = vmatmul.mubr.f32.gmra.mrb[0].mxu0 %v1189
  %v1191 = vpop.f32.mrb[0].mxu0
  %v1192 = vadd.f32 %v526, %v1191
  %v1193 = vpop.f32.mrb[0].mxu0
  %1194 = vmatprep.mubr.f32.mxu0 0.0
  %v1195 = vand.u32 %v152, 4294901760
  %1196 = vmatmul.mubr.f32.gmra.mrb[0].mxu0 %v1195
  %v1197 = vpop.f32.mrb[0].mxu0
  %v1198 = vadd.f32 %v536, %v1197
  %v1199 = vpop.f32.mrb[0].mxu0
  %1200 = vmatprep.mubr.f32.mxu0 0.0
  %v1201 = vand.u32 %v155, 4294901760
  %1202 = vmatmul.mubr.f32.gmra.mrb[0].mxu0 %v1201
  %v1203 = vpop.f32.mrb[0].mxu0
  %v1204 = vadd.f32 %v546, %v1203
  %v1205 = vpop.f32.mrb[0].mxu0
  %1206 = vmatprep.mubr.f32.mxu0 0.0
  %v1207 = vand.u32 %v158, 4294901760
  %1208 = vmatmul.mubr.f32.gmra.mrb[0].mxu0 %v1207
  %v1209 = vpop.f32.mrb[0].mxu0
  %v1210 = vadd.f32 %v556, %v1209
  %v1211 = vpop.f32.mrb[0].mxu0
  %1212 = vmatprep.mubr.f32.mxu0 0.0
  %v1213 = vand.u32 %v161, 4294901760
  %1214 = vmatmul.mubr.f32.gmra.mrb[0].mxu0 %v1213
  %v1215 = vpop.f32.mrb[0].mxu0
  %v1216 = vadd.f32 %v566, %v1215
  %v1217 = vpop.f32.mrb[0].mxu0
  %1218 = vmatprep.mubr.f32.mxu0 0.0
  %v1219 = vand.u32 %v164, 4294901760
  %1220 = vmatmul.mubr.f32.gmra.mrb[0].mxu0 %v1219
  %v1221 = vpop.f32.mrb[0].mxu0
  %v1222 = vadd.f32 %v576, %v1221
  %v1223 = vpop.f32.mrb[0].mxu0
  %1224 = vmatprep.mubr.f32.mxu0 0.0
  %v1225 = vand.u32 %v167, 4294901760
  %1226 = vmatmul.mubr.f32.gmra.mrb[0].mxu0 %v1225
  %v1227 = vpop.f32.mrb[0].mxu0
  %v1228 = vadd.f32 %v586, %v1227
  %v1229 = vpop.f32.mrb[0].mxu0
  %1230 = vmatprep.mubr.f32.mxu0 0.0
  %v1231 = vand.u32 %v170, 4294901760
  %1232 = vmatmul.mubr.f32.gmra.mrb[0].mxu0 %v1231
  %v1233 = vpop.f32.mrb[0].mxu0
  %v1234 = vadd.f32 %v596, %v1233
  %v1235 = vpop.f32.mrb[0].mxu0
  %1236 = vmatprep.mubr.f32.mxu0 0.0
  %v1237 = vand.u32 %v173, 4294901760
  %1238 = vmatmul.mubr.f32.gmra.mrb[0].mxu0 %v1237
  %v1239 = vpop.f32.mrb[0].mxu0
  %v1240 = vadd.f32 %v606, %v1239
  %v1241 = vpop.f32.mrb[0].mxu0
  %1242 = vmatprep.mubr.f32.mxu0 0.0
  %v1243 = vand.u32 %v176, 4294901760
  %1244 = vmatmul.mubr.f32.gmra.mrb[0].mxu0 %v1243
  %v1245 = vpop.f32.mrb[0].mxu0
  %v1246 = vadd.f32 %v616, %v1245
  %v1247 = vpop.f32.mrb[0].mxu0
  %1248 = vmatprep.mubr.f32.mxu0 0.0
  %v1249 = vand.u32 %v179, 4294901760
  %1250 = vmatmul.mubr.f32.gmra.mrb[0].mxu0 %v1249
  %v1251 = vpop.f32.mrb[0].mxu0
  %v1252 = vadd.f32 %v626, %v1251
  %v1253 = vpop.f32.mrb[0].mxu0
  %1254 = vmatprep.mubr.f32.mxu0 0.0
  %v1255 = vand.u32 %v182, 4294901760
  %1256 = vmatmul.mubr.f32.gmra.mrb[0].mxu0 %v1255
  %v1257 = vpop.f32.mrb[0].mxu0
  %v1258 = vadd.f32 %v636, %v1257
  %v1259 = vpop.f32.mrb[0].mxu0
  %1260 = vmatprep.mubr.f32.mxu0 0.0
  %v1261 = vand.u32 %v185, 4294901760
  %1262 = vmatmul.mubr.f32.gmra.mrb[0].mxu0 %v1261
  %v1263 = vpop.f32.mrb[0].mxu0
  %v1264 = vadd.f32 %v646, %v1263
  %v1265 = vpop.f32.mrb[0].mxu0
  %1266 = vmatprep.mubr.f32.mxu0 0.0
  %v1267 = vand.u32 %v188, 4294901760
  %1268 = vmatmul.mubr.f32.gmra.mrb[0].mxu0 %v1267
  %v1269 = vpop.f32.mrb[0].mxu0
  %v1270 = vadd.f32 %v656, %v1269
  %v1271 = vpop.f32.mrb[0].mxu0
  %1272 = vmatprep.mubr.f32.mxu0 0.0
  %v1273 = vand.u32 %v191, 4294901760
  %1274 = vmatmul.mubr.f32.gmra.mrb[0].mxu0 %v1273
  %v1275 = vpop.f32.mrb[0].mxu0
  %v1276 = vadd.f32 %v666, %v1275
  %v1277 = vpop.f32.mrb[0].mxu0
  %1278 = vmatprep.mubr.f32.mxu0 0.0
  %v1279 = vand.u32 %v194, 4294901760
  %1280 = vmatmul.mubr.f32.gmra.mrb[0].mxu0 %v1279
  %v1281 = vpop.f32.mrb[0].mxu0
  %v1282 = vadd.f32 %v676, %v1281
  %v1283 = vpop.f32.mrb[0].mxu0
  %1284 = vmatprep.mubr.f32.mxu0 0.0
  %v1285 = vand.u32 %v197, 4294901760
  %1286 = vmatmul.mubr.f32.gmra.mrb[0].mxu0 %v1285
  %v1287 = vpop.f32.mrb[0].mxu0
  %v1288 = vadd.f32 %v686, %v1287
  %v1289 = vpop.f32.mrb[0].mxu0
  %1290 = vmatprep.mubr.f32.mxu0 0.0
  %v1291 = vand.u32 %v200, 4294901760
  %1292 = vmatmul.mubr.f32.gmra.mrb[0].mxu0 %v1291
  %v1293 = vpop.f32.mrb[0].mxu0
  %v1294 = vadd.f32 %v696, %v1293
  %v1295 = vpop.f32.mrb[0].mxu0
  %1296 = vmatprep.mubr.f32.mxu0 0.0
  %v1297 = vand.u32 %v203, 4294901760
  %1298 = vmatmul.mubr.f32.gmra.mrb[0].mxu0 %v1297
  %v1299 = vpop.f32.mrb[0].mxu0
  %v1300 = vadd.f32 %v706, %v1299
  %v1301 = vpop.f32.mrb[0].mxu0
  %1302 = vmatprep.mubr.f32.mxu0 0.0
  %v1303 = vand.u32 %v206, 4294901760
  %1304 = vmatmul.mubr.f32.gmra.mrb[0].mxu0 %v1303
  %v1305 = vpop.f32.mrb[0].mxu0
  %v1306 = vadd.f32 %v716, %v1305
  %v1307 = vpop.f32.mrb[0].mxu0
  %1308 = vmatprep.mubr.f32.mxu0 0.0
  %v1309 = vand.u32 %v209, 4294901760
  %1310 = vmatmul.mubr.f32.gmra.mrb[0].mxu0 %v1309
  %v1311 = vpop.f32.mrb[0].mxu0
  %v1312 = vadd.f32 %v726, %v1311
  %v1313 = vpop.f32.mrb[0].mxu0
  %1314 = vmatprep.mubr.f32.mxu0 0.0
  %v1315 = vand.u32 %v212, 4294901760
  %1316 = vmatmul.mubr.f32.gmra.mrb[0].mxu0 %v1315
  %v1317 = vpop.f32.mrb[0].mxu0
  %v1318 = vadd.f32 %v736, %v1317
  %v1319 = vpop.f32.mrb[0].mxu0
  %1320 = vmatprep.mubr.f32.mxu0 0.0
  %v1321 = vand.u32 %v215, 4294901760
  %1322 = vmatmul.mubr.f32.gmra.mrb[0].mxu0 %v1321
  %v1323 = vpop.f32.mrb[0].mxu0
  %v1324 = vadd.f32 %v746, %v1323
  %v1325 = vpop.f32.mrb[0].mxu0
  %1326 = vmatprep.mubr.f32.mxu0 0.0
  %v1327 = vand.u32 %v218, 4294901760
  %1328 = vmatmul.mubr.f32.gmra.mrb[0].mxu0 %v1327
  %v1329 = vpop.f32.mrb[0].mxu0
  %v1330 = vadd.f32 %v756, %v1329
  %v1331 = vpop.f32.mrb[0].mxu0
  %1332 = vmatprep.mubr.f32.mxu0 0.0
  %v1333 = vand.u32 %v221, 4294901760
  %1334 = vmatmul.mubr.f32.gmra.mrb[0].mxu0 %v1333
  %v1335 = vpop.f32.mrb[0].mxu0
  %v1336 = vadd.f32 %v766, %v1335
  %v1337 = vpop.f32.mrb[0].mxu0
  %1338 = vmatprep.mubr.f32.mxu0 0.0
  %v1339 = vand.u32 %v224, 4294901760
  %1340 = vmatmul.mubr.f32.gmra.mrb[0].mxu0 %v1339
  %v1341 = vpop.f32.mrb[0].mxu0
  %v1342 = vadd.f32 %v776, %v1341
  %v1343 = vpop.f32.mrb[0].mxu0
  %1344 = vmatprep.mubr.f32.mxu0 0.0
  %v1345 = vand.u32 %v227, 4294901760
  %1346 = vmatmul.mubr.f32.gmra.mrb[0].mxu0 %v1345
  %v1347 = vpop.f32.mrb[0].mxu0
  %v1348 = vadd.f32 %v786, %v1347
  %v1349 = vpop.f32.mrb[0].mxu0
  %1350 = vmatprep.mubr.f32.mxu0 0.0
  %v1351 = vand.u32 %v230, 4294901760
  %1352 = vmatmul.mubr.f32.gmra.mrb[0].mxu0 %v1351
  %v1353 = vpop.f32.mrb[0].mxu0
  %v1354 = vadd.f32 %v796, %v1353
  %v1355 = vpop.f32.mrb[0].mxu0
  %1356 = vmatprep.mubr.f32.mxu0 0.0
  %v1357 = vand.u32 %v233, 4294901760
  %1358 = vmatmul.mubr.f32.gmra.mrb[0].mxu0 %v1357
  %v1359 = vpop.f32.mrb[0].mxu0
  %v1360 = vadd.f32 %v806, %v1359
  %v1361 = vpop.f32.mrb[0].mxu0
  %1362 = vmatprep.mubr.f32.mxu0 0.0
  %v1363 = vand.u32 %v236, 4294901760
  %1364 = vmatmul.mubr.f32.gmra.mrb[0].mxu0 %v1363
  %v1365 = vpop.f32.mrb[0].mxu0
  %v1366 = vadd.f32 %v816, %v1365
  %v1367 = vpop.f32.mrb[0].mxu0
  %1368 = vmatprep.mubr.f32.mxu0 0.0
  %v1369 = vand.u32 %v239, 4294901760
  %1370 = vmatmul.mubr.f32.gmra.mrb[0].mxu0 %v1369
  %v1371 = vpop.f32.mrb[0].mxu0
  %v1372 = vadd.f32 %v826, %v1371
  %v1373 = vpop.f32.mrb[0].mxu0
  %1374 = vmatprep.mubr.f32.mxu0 0.0
  %v1375 = vand.u32 %v242, 4294901760
  %1376 = vmatmul.mubr.f32.gmra.mrb[0].mxu0 %v1375
  %v1377 = vpop.f32.mrb[0].mxu0
  %v1378 = vadd.f32 %v836, %v1377
  %v1379 = vpop.f32.mrb[0].mxu0
  %1380 = vmatprep.mubr.f32.mxu0 0.0
  %v1381 = vand.u32 %v245, 4294901760
  %1382 = vmatmul.mubr.f32.gmra.mrb[0].mxu0 %v1381
  %v1383 = vpop.f32.mrb[0].mxu0
  %v1384 = vadd.f32 %v846, %v1383
  %v1385 = vpop.f32.mrb[0].mxu0
  %1386 = vmatprep.mubr.f32.mxu0 0.0
  %v1387 = vand.u32 %v248, 4294901760
  %1388 = vmatmul.mubr.f32.gmra.mrb[0].mxu0 %v1387
  %v1389 = vpop.f32.mrb[0].mxu0
  %v1390 = vadd.f32 %v856, %v1389
  %v1391 = vpop.f32.mrb[0].mxu0
  %1392 = vmatprep.mubr.f32.mxu0 0.0
  %v1393 = vand.u32 %v251, 4294901760
  %1394 = vmatmul.mubr.f32.gmra.mrb[0].mxu0 %v1393
  %v1395 = vpop.f32.mrb[0].mxu0
  %v1396 = vadd.f32 %v866, %v1395
  %v1397 = vpop.f32.mrb[0].mxu0
  %1398 = vmatprep.mubr.f32.mxu0 0.0
  %v1399 = vand.u32 %v254, 4294901760
  %1400 = vmatmul.mubr.f32.gmra.mrb[0].mxu0 %v1399
  %v1401 = vpop.f32.mrb[0].mxu0
  %v1402 = vadd.f32 %v876, %v1401
  %v1403 = vpop.f32.mrb[0].mxu0
  %1404 = vmatprep.mubr.f32.mxu0 0.0
  %v1405 = vand.u32 %v257, 4294901760
  %1406 = vmatmul.mubr.f32.gmra.mrb[0].mxu0 %v1405
  %v1407 = vpop.f32.mrb[0].mxu0
  %v1408 = vadd.f32 %v886, %v1407
  %v1409 = vpop.f32.mrb[0].mxu0
  %1410 = vmatprep.mubr.f32.mxu0 0.0
  %v1411 = vand.u32 %v260, 4294901760
  %1412 = vmatmul.mubr.f32.gmra.mrb[0].mxu0 %v1411
  %v1413 = vpop.f32.mrb[0].mxu0
  %v1414 = vadd.f32 %v896, %v1413
  %v1415 = vpop.f32.mrb[0].mxu0
  %1416 = vmatprep.mubr.f32.mxu0 0.0
  %v1417 = vand.u32 %v263, 4294901760
  %1418 = vmatmul.mubr.f32.gmra.mrb[0].mxu0 %v1417
  %v1419 = vpop.f32.mrb[0].mxu0
  %v1420 = vadd.f32 %v906, %v1419
  %v1421 = vpop.f32.mrb[0].mxu0
  %1422 = vmatprep.mubr.f32.mxu0 0.0
  %v1423 = vand.u32 %v266, 4294901760
  %1424 = vmatmul.mubr.f32.gmra.mrb[0].mxu0 %v1423
  %v1425 = vpop.f32.mrb[0].mxu0
  %v1426 = vadd.f32 %v916, %v1425
  %v1427 = vpop.f32.mrb[0].mxu0
  %1428 = vmatprep.mubr.f32.mxu0 0.0
  %v1429 = vand.u32 %v269, 4294901760
  %1430 = vmatmul.mubr.f32.gmra.mrb[0].mxu0 %v1429
  %v1431 = vpop.f32.mrb[0].mxu0
  %v1432 = vadd.f32 %v926, %v1431
  %v1433 = vpop.f32.mrb[0].mxu0
  %1434 = vmatprep.mubr.f32.mxu0 0.0
  %v1435 = vand.u32 %v272, 4294901760
  %1436 = vmatmul.mubr.f32.gmra.mrb[0].mxu0 %v1435
  %v1437 = vpop.f32.mrb[0].mxu0
  %v1438 = vadd.f32 %v936, %v1437
  %v1439 = vpop.f32.mrb[0].mxu0
  %1440 = vmatprep.mubr.f32.mxu0 0.0
  %v1441 = vand.u32 %v275, 4294901760
  %1442 = vmatmul.mubr.f32.gmra.mrb[0].mxu0 %v1441
  %v1443 = vpop.f32.mrb[0].mxu0
  %v1444 = vadd.f32 %v946, %v1443
  %v1445 = vpop.f32.mrb[0].mxu0
  %1446 = vmatprep.mubr.f32.mxu0 0.0
  %v1447 = vand.u32 %v278, 4294901760
  %1448 = vmatmul.mubr.f32.gmra.mrb[0].mxu0 %v1447
  %v1449 = vpop.f32.mrb[0].mxu0
  %v1450 = vadd.f32 %v956, %v1449
  %v1451 = vpop.f32.mrb[0].mxu0
  %1452 = vmatprep.mubr.f32.mxu0 0.0
  %v1453 = vand.u32 %v281, 4294901760
  %1454 = vmatmul.mubr.f32.gmra.mrb[0].mxu0 %v1453
  %v1455 = vpop.f32.mrb[0].mxu0
  %v1456 = vadd.f32 %v966, %v1455
  %v1457 = vpop.f32.mrb[0].mxu0
  %1458 = vmatprep.mubr.f32.mxu0 0.0
  %v1459 = vand.u32 %v284, 4294901760
  %1460 = vmatmul.mubr.f32.gmra.mrb[0].mxu0 %v1459
  %v1461 = vpop.f32.mrb[0].mxu0
  %v1462 = vadd.f32 %v976, %v1461
  %v1463 = vpop.f32.mrb[0].mxu0
  %1464 = vmatprep.mubr.f32.mxu0 0.0
  %v1465 = vand.u32 %v287, 4294901760
  %1466 = vmatmul.mubr.f32.gmra.mrb[0].mxu0 %v1465
  %v1467 = vpop.f32.mrb[0].mxu0
  %v1468 = vadd.f32 %v986, %v1467
  %v1469 = vpop.f32.mrb[0].mxu0
  %1470 = vmatprep.mubr.f32.mxu0 0.0
  %v1471 = vand.u32 %v290, 4294901760
  %1472 = vmatmul.mubr.f32.gmra.mrb[0].mxu0 %v1471
  %v1473 = vpop.f32.mrb[0].mxu0
  %v1474 = vadd.f32 %v996, %v1473
  %v1475 = vpop.f32.mrb[0].mxu0
  %1476 = vmatprep.mubr.f32.mxu0 0.0
  %v1477 = vand.u32 %v293, 4294901760
  %1478 = vmatmul.mubr.f32.gmra.mrb[0].mxu0 %v1477
  %v1479 = vpop.f32.mrb[0].mxu0
  %v1480 = vadd.f32 %v1006, %v1479
  %v1481 = vpop.f32.mrb[0].mxu0
  %1482 = vdwg.mxu0
  %1483 = vmatprep.subr.mxu0 0.0
  %v1484 = vand.u32 %v90, 4294901760
  %v1485 = vsub.f32 %v90, %v1484
  %1486 = vmatpush1.msra.mxu0 %v1485
  %1487 = vmatprep.subr.mxu0 0.0
  %v1488 = vand.u32 %v91, 4294901760
  %v1489 = vsub.f32 %v91, %v1488
  %1490 = vmatpush1.msra.mxu0 %v1489
  %1491 = vmatprep.subr.mxu0 0.0
  %v1492 = vand.u32 %v92, 4294901760
  %v1493 = vsub.f32 %v92, %v1492
  %1494 = vmatpush1.msra.mxu0 %v1493
  %1495 = vmatprep.subr.mxu0 0.0
  %v1496 = vand.u32 %v93, 4294901760
  %v1497 = vsub.f32 %v93, %v1496
  %1498 = vmatpush1.msra.mxu0 %v1497
  %1499 = vmatprep.subr.mxu0 0.0
  %v1500 = vand.u32 %v297, 4294901760
  %v1501 = vsub.f32 %v297, %v1500
  %1502 = vmatpush1.msra.mxu0 %v1501
  %1503 = vmatprep.subr.mxu0 0.0
  %1504 = vmatpush1.msra.mxu0 0.0
  %1505 = vmatprep.subr.mxu0 0.0
  %1506 = vmatpush1.msra.mxu0 0.0
  %1507 = vmatprep.subr.mxu0 0.0
  %1508 = vmatpush1.msra.mxu0 0.0
  %1509 = vmatprep.subr.mxu0 0.0
  %1510 = vmatpush1.msra.mxu0 0.0
  %1511 = vmatprep.subr.mxu0 0.0
  %1512 = vmatpush1.msra.mxu0 0.0
  %1513 = vmatprep.subr.mxu0 0.0
  %1514 = vmatpush1.msra.mxu0 0.0
  %1515 = vmatprep.subr.mxu0 0.0
  %1516 = vmatpush1.msra.mxu0 0.0
  %1517 = vmatprep.subr.mxu0 0.0
  %1518 = vmatpush1.msra.mxu0 0.0
  %1519 = vmatprep.subr.mxu0 0.0
  %1520 = vmatpush1.msra.mxu0 0.0
  %1521 = vmatprep.subr.mxu0 0.0
  %1522 = vmatpush1.msra.mxu0 0.0
  %1523 = vmatprep.subr.mxu0 0.0
  %1524 = vmatpush1.msra.mxu0 0.0
  %1525 = vmatprep.subr.mxu0 0.0
  %1526 = vmatpush1.msra.mxu0 0.0
  %1527 = vmatprep.subr.mxu0 0.0
  %1528 = vmatpush1.msra.mxu0 0.0
  %1529 = vmatprep.subr.mxu0 0.0
  %1530 = vmatpush1.msra.mxu0 0.0
  %1531 = vmatprep.subr.mxu0 0.0
  %1532 = vmatpush1.msra.mxu0 0.0
  %1533 = vmatprep.subr.mxu0 0.0
  %1534 = vmatpush1.msra.mxu0 0.0
  %1535 = vmatprep.subr.mxu0 0.0
  %1536 = vmatpush1.msra.mxu0 0.0
  %1537 = vmatprep.subr.mxu0 0.0
  %1538 = vmatpush1.msra.mxu0 0.0
  %1539 = vmatprep.subr.mxu0 0.0
  %1540 = vmatpush1.msra.mxu0 0.0
  %1541 = vmatprep.subr.mxu0 0.0
  %1542 = vmatpush1.msra.mxu0 0.0
  %1543 = vmatprep.subr.mxu0 0.0
  %1544 = vmatpush1.msra.mxu0 0.0
  %1545 = vmatprep.subr.mxu0 0.0
  %1546 = vmatpush1.msra.mxu0 0.0
  %1547 = vmatprep.subr.mxu0 0.0
  %1548 = vmatpush1.msra.mxu0 0.0
  %1549 = vmatprep.subr.mxu0 0.0
  %1550 = vmatpush1.msra.mxu0 0.0
  %1551 = vmatprep.subr.mxu0 0.0
  %1552 = vmatpush1.msra.mxu0 0.0
  %1553 = vmatprep.subr.mxu0 0.0
  %1554 = vmatpush1.msra.mxu0 0.0
  %1555 = vmatprep.subr.mxu0 0.0
  %1556 = vmatpush1.msra.mxu0 0.0
  %1557 = vmatprep.mubr.f32.mxu0 0.0
  %v1558 = vand.u32 %v104, 4294901760
  %v1559 = vsub.f32 %v104, %v1558
  %1560 = vmatmul.mubr.f32.gmra.mrb[0].mxu0 %v1559
  %v1561 = vpop.f32.mrb[0].mxu0
  %v1562 = vadd.f32 %v1102, %v1561
  %v1563 = vpop.f32.mrb[0].mxu0
  %1564 = vmatprep.mubr.f32.mxu0 0.0
  %v1565 = vand.u32 %v107, 4294901760
  %v1566 = vsub.f32 %v107, %v1565
  %1567 = vmatmul.mubr.f32.gmra.mrb[0].mxu0 %v1566
  %v1568 = vpop.f32.mrb[0].mxu0
  %v1569 = vadd.f32 %v1108, %v1568
  %v1570 = vpop.f32.mrb[0].mxu0
  %1571 = vmatprep.mubr.f32.mxu0 0.0
  %v1572 = vand.u32 %v110, 4294901760
  %v1573 = vsub.f32 %v110, %v1572
  %1574 = vmatmul.mubr.f32.gmra.mrb[0].mxu0 %v1573
  %v1575 = vpop.f32.mrb[0].mxu0
  %v1576 = vadd.f32 %v1114, %v1575
  %v1577 = vpop.f32.mrb[0].mxu0
  %1578 = vmatprep.mubr.f32.mxu0 0.0
  %v1579 = vand.u32 %v113, 4294901760
  %v1580 = vsub.f32 %v113, %v1579
  %1581 = vmatmul.mubr.f32.gmra.mrb[0].mxu0 %v1580
  %v1582 = vpop.f32.mrb[0].mxu0
  %v1583 = vadd.f32 %v1120, %v1582
  %v1584 = vpop.f32.mrb[0].mxu0
  %1585 = vmatprep.mubr.f32.mxu0 0.0
  %v1586 = vand.u32 %v116, 4294901760
  %v1587 = vsub.f32 %v116, %v1586
  %1588 = vmatmul.mubr.f32.gmra.mrb[0].mxu0 %v1587
  %v1589 = vpop.f32.mrb[0].mxu0
  %v1590 = vadd.f32 %v1126, %v1589
  %v1591 = vpop.f32.mrb[0].mxu0
  %1592 = vmatprep.mubr.f32.mxu0 0.0
  %v1593 = vand.u32 %v119, 4294901760
  %v1594 = vsub.f32 %v119, %v1593
  %1595 = vmatmul.mubr.f32.gmra.mrb[0].mxu0 %v1594
  %v1596 = vpop.f32.mrb[0].mxu0
  %v1597 = vadd.f32 %v1132, %v1596
  %v1598 = vpop.f32.mrb[0].mxu0
  %1599 = vmatprep.mubr.f32.mxu0 0.0
  %v1600 = vand.u32 %v122, 4294901760
  %v1601 = vsub.f32 %v122, %v1600
  %1602 = vmatmul.mubr.f32.gmra.mrb[0].mxu0 %v1601
  %v1603 = vpop.f32.mrb[0].mxu0
  %v1604 = vadd.f32 %v1138, %v1603
  %v1605 = vpop.f32.mrb[0].mxu0
  %1606 = vmatprep.mubr.f32.mxu0 0.0
  %v1607 = vand.u32 %v125, 4294901760
  %v1608 = vsub.f32 %v125, %v1607
  %1609 = vmatmul.mubr.f32.gmra.mrb[0].mxu0 %v1608
  %v1610 = vpop.f32.mrb[0].mxu0
  %v1611 = vadd.f32 %v1144, %v1610
  %v1612 = vpop.f32.mrb[0].mxu0
  %1613 = vmatprep.mubr.f32.mxu0 0.0
  %v1614 = vand.u32 %v128, 4294901760
  %v1615 = vsub.f32 %v128, %v1614
  %1616 = vmatmul.mubr.f32.gmra.mrb[0].mxu0 %v1615
  %v1617 = vpop.f32.mrb[0].mxu0
  %v1618 = vadd.f32 %v1150, %v1617
  %v1619 = vpop.f32.mrb[0].mxu0
  %1620 = vmatprep.mubr.f32.mxu0 0.0
  %v1621 = vand.u32 %v131, 4294901760
  %v1622 = vsub.f32 %v131, %v1621
  %1623 = vmatmul.mubr.f32.gmra.mrb[0].mxu0 %v1622
  %v1624 = vpop.f32.mrb[0].mxu0
  %v1625 = vadd.f32 %v1156, %v1624
  %v1626 = vpop.f32.mrb[0].mxu0
  %1627 = vmatprep.mubr.f32.mxu0 0.0
  %v1628 = vand.u32 %v134, 4294901760
  %v1629 = vsub.f32 %v134, %v1628
  %1630 = vmatmul.mubr.f32.gmra.mrb[0].mxu0 %v1629
  %v1631 = vpop.f32.mrb[0].mxu0
  %v1632 = vadd.f32 %v1162, %v1631
  %v1633 = vpop.f32.mrb[0].mxu0
  %1634 = vmatprep.mubr.f32.mxu0 0.0
  %v1635 = vand.u32 %v137, 4294901760
  %v1636 = vsub.f32 %v137, %v1635
  %1637 = vmatmul.mubr.f32.gmra.mrb[0].mxu0 %v1636
  %v1638 = vpop.f32.mrb[0].mxu0
  %v1639 = vadd.f32 %v1168, %v1638
  %v1640 = vpop.f32.mrb[0].mxu0
  %1641 = vmatprep.mubr.f32.mxu0 0.0
  %v1642 = vand.u32 %v140, 4294901760
  %v1643 = vsub.f32 %v140, %v1642
  %1644 = vmatmul.mubr.f32.gmra.mrb[0].mxu0 %v1643
  %v1645 = vpop.f32.mrb[0].mxu0
  %v1646 = vadd.f32 %v1174, %v1645
  %v1647 = vpop.f32.mrb[0].mxu0
  %1648 = vmatprep.mubr.f32.mxu0 0.0
  %v1649 = vand.u32 %v143, 4294901760
  %v1650 = vsub.f32 %v143, %v1649
  %1651 = vmatmul.mubr.f32.gmra.mrb[0].mxu0 %v1650
  %v1652 = vpop.f32.mrb[0].mxu0
  %v1653 = vadd.f32 %v1180, %v1652
  %v1654 = vpop.f32.mrb[0].mxu0
  %1655 = vmatprep.mubr.f32.mxu0 0.0
  %v1656 = vand.u32 %v146, 4294901760
  %v1657 = vsub.f32 %v146, %v1656
  %1658 = vmatmul.mubr.f32.gmra.mrb[0].mxu0 %v1657
  %v1659 = vpop.f32.mrb[0].mxu0
  %v1660 = vadd.f32 %v1186, %v1659
  %v1661 = vpop.f32.mrb[0].mxu0
  %1662 = vmatprep.mubr.f32.mxu0 0.0
  %v1663 = vand.u32 %v149, 4294901760
  %v1664 = vsub.f32 %v149, %v1663
  %1665 = vmatmul.mubr.f32.gmra.mrb[0].mxu0 %v1664
  %v1666 = vpop.f32.mrb[0].mxu0
  %v1667 = vadd.f32 %v1192, %v1666
  %v1668 = vpop.f32.mrb[0].mxu0
  %1669 = vmatprep.mubr.f32.mxu0 0.0
  %v1670 = vand.u32 %v152, 4294901760
  %v1671 = vsub.f32 %v152, %v1670
  %1672 = vmatmul.mubr.f32.gmra.mrb[0].mxu0 %v1671
  %v1673 = vpop.f32.mrb[0].mxu0
  %v1674 = vadd.f32 %v1198, %v1673
  %v1675 = vpop.f32.mrb[0].mxu0
  %1676 = vmatprep.mubr.f32.mxu0 0.0
  %v1677 = vand.u32 %v155, 4294901760
  %v1678 = vsub.f32 %v155, %v1677
  %1679 = vmatmul.mubr.f32.gmra.mrb[0].mxu0 %v1678
  %v1680 = vpop.f32.mrb[0].mxu0
  %v1681 = vadd.f32 %v1204, %v1680
  %v1682 = vpop.f32.mrb[0].mxu0
  %1683 = vmatprep.mubr.f32.mxu0 0.0
  %v1684 = vand.u32 %v158, 4294901760
  %v1685 = vsub.f32 %v158, %v1684
  %1686 = vmatmul.mubr.f32.gmra.mrb[0].mxu0 %v1685
  %v1687 = vpop.f32.mrb[0].mxu0
  %v1688 = vadd.f32 %v1210, %v1687
  %v1689 = vpop.f32.mrb[0].mxu0
  %1690 = vmatprep.mubr.f32.mxu0 0.0
  %v1691 = vand.u32 %v161, 4294901760
  %v1692 = vsub.f32 %v161, %v1691
  %1693 = vmatmul.mubr.f32.gmra.mrb[0].mxu0 %v1692
  %v1694 = vpop.f32.mrb[0].mxu0
  %v1695 = vadd.f32 %v1216, %v1694
  %v1696 = vpop.f32.mrb[0].mxu0
  %1697 = vmatprep.mubr.f32.mxu0 0.0
  %v1698 = vand.u32 %v164, 4294901760
  %v1699 = vsub.f32 %v164, %v1698
  %1700 = vmatmul.mubr.f32.gmra.mrb[0].mxu0 %v1699
  %v1701 = vpop.f32.mrb[0].mxu0
  %v1702 = vadd.f32 %v1222, %v1701
  %v1703 = vpop.f32.mrb[0].mxu0
  %1704 = vmatprep.mubr.f32.mxu0 0.0
  %v1705 = vand.u32 %v167, 4294901760
  %v1706 = vsub.f32 %v167, %v1705
  %1707 = vmatmul.mubr.f32.gmra.mrb[0].mxu0 %v1706
  %v1708 = vpop.f32.mrb[0].mxu0
  %v1709 = vadd.f32 %v1228, %v1708
  %v1710 = vpop.f32.mrb[0].mxu0
  %1711 = vmatprep.mubr.f32.mxu0 0.0
  %v1712 = vand.u32 %v170, 4294901760
  %v1713 = vsub.f32 %v170, %v1712
  %1714 = vmatmul.mubr.f32.gmra.mrb[0].mxu0 %v1713
  %v1715 = vpop.f32.mrb[0].mxu0
  %v1716 = vadd.f32 %v1234, %v1715
  %v1717 = vpop.f32.mrb[0].mxu0
  %1718 = vmatprep.mubr.f32.mxu0 0.0
  %v1719 = vand.u32 %v173, 4294901760
  %v1720 = vsub.f32 %v173, %v1719
  %1721 = vmatmul.mubr.f32.gmra.mrb[0].mxu0 %v1720
  %v1722 = vpop.f32.mrb[0].mxu0
  %v1723 = vadd.f32 %v1240, %v1722
  %v1724 = vpop.f32.mrb[0].mxu0
  %1725 = vmatprep.mubr.f32.mxu0 0.0
  %v1726 = vand.u32 %v176, 4294901760
  %v1727 = vsub.f32 %v176, %v1726
  %1728 = vmatmul.mubr.f32.gmra.mrb[0].mxu0 %v1727
  %v1729 = vpop.f32.mrb[0].mxu0
  %v1730 = vadd.f32 %v1246, %v1729
  %v1731 = vpop.f32.mrb[0].mxu0
  %1732 = vmatprep.mubr.f32.mxu0 0.0
  %v1733 = vand.u32 %v179, 4294901760
  %v1734 = vsub.f32 %v179, %v1733
  %1735 = vmatmul.mubr.f32.gmra.mrb[0].mxu0 %v1734
  %v1736 = vpop.f32.mrb[0].mxu0
  %v1737 = vadd.f32 %v1252, %v1736
  %v1738 = vpop.f32.mrb[0].mxu0
  %1739 = vmatprep.mubr.f32.mxu0 0.0
  %v1740 = vand.u32 %v182, 4294901760
  %v1741 = vsub.f32 %v182, %v1740
  %1742 = vmatmul.mubr.f32.gmra.mrb[0].mxu0 %v1741
  %v1743 = vpop.f32.mrb[0].mxu0
  %v1744 = vadd.f32 %v1258, %v1743
  %v1745 = vpop.f32.mrb[0].mxu0
  %1746 = vmatprep.mubr.f32.mxu0 0.0
  %v1747 = vand.u32 %v185, 4294901760
  %v1748 = vsub.f32 %v185, %v1747
  %1749 = vmatmul.mubr.f32.gmra.mrb[0].mxu0 %v1748
  %v1750 = vpop.f32.mrb[0].mxu0
  %v1751 = vadd.f32 %v1264, %v1750
  %v1752 = vpop.f32.mrb[0].mxu0
  %1753 = vmatprep.mubr.f32.mxu0 0.0
  %v1754 = vand.u32 %v188, 4294901760
  %v1755 = vsub.f32 %v188, %v1754
  %1756 = vmatmul.mubr.f32.gmra.mrb[0].mxu0 %v1755
  %v1757 = vpop.f32.mrb[0].mxu0
  %v1758 = vadd.f32 %v1270, %v1757
  %v1759 = vpop.f32.mrb[0].mxu0
  %1760 = vmatprep.mubr.f32.mxu0 0.0
  %v1761 = vand.u32 %v191, 4294901760
  %v1762 = vsub.f32 %v191, %v1761
  %1763 = vmatmul.mubr.f32.gmra.mrb[0].mxu0 %v1762
  %v1764 = vpop.f32.mrb[0].mxu0
  %v1765 = vadd.f32 %v1276, %v1764
  %v1766 = vpop.f32.mrb[0].mxu0
  %1767 = vmatprep.mubr.f32.mxu0 0.0
  %v1768 = vand.u32 %v194, 4294901760
  %v1769 = vsub.f32 %v194, %v1768
  %1770 = vmatmul.mubr.f32.gmra.mrb[0].mxu0 %v1769
  %v1771 = vpop.f32.mrb[0].mxu0
  %v1772 = vadd.f32 %v1282, %v1771
  %v1773 = vpop.f32.mrb[0].mxu0
  %1774 = vmatprep.mubr.f32.mxu0 0.0
  %v1775 = vand.u32 %v197, 4294901760
  %v1776 = vsub.f32 %v197, %v1775
  %1777 = vmatmul.mubr.f32.gmra.mrb[0].mxu0 %v1776
  %v1778 = vpop.f32.mrb[0].mxu0
  %v1779 = vadd.f32 %v1288, %v1778
  %v1780 = vpop.f32.mrb[0].mxu0
  %1781 = vmatprep.mubr.f32.mxu0 0.0
  %v1782 = vand.u32 %v200, 4294901760
  %v1783 = vsub.f32 %v200, %v1782
  %1784 = vmatmul.mubr.f32.gmra.mrb[0].mxu0 %v1783
  %v1785 = vpop.f32.mrb[0].mxu0
  %v1786 = vadd.f32 %v1294, %v1785
  %v1787 = vpop.f32.mrb[0].mxu0
  %1788 = vmatprep.mubr.f32.mxu0 0.0
  %v1789 = vand.u32 %v203, 4294901760
  %v1790 = vsub.f32 %v203, %v1789
  %1791 = vmatmul.mubr.f32.gmra.mrb[0].mxu0 %v1790
  %v1792 = vpop.f32.mrb[0].mxu0
  %v1793 = vadd.f32 %v1300, %v1792
  %v1794 = vpop.f32.mrb[0].mxu0
  %1795 = vmatprep.mubr.f32.mxu0 0.0
  %v1796 = vand.u32 %v206, 4294901760
  %v1797 = vsub.f32 %v206, %v1796
  %1798 = vmatmul.mubr.f32.gmra.mrb[0].mxu0 %v1797
  %v1799 = vpop.f32.mrb[0].mxu0
  %v1800 = vadd.f32 %v1306, %v1799
  %v1801 = vpop.f32.mrb[0].mxu0
  %1802 = vmatprep.mubr.f32.mxu0 0.0
  %v1803 = vand.u32 %v209, 4294901760
  %v1804 = vsub.f32 %v209, %v1803
  %1805 = vmatmul.mubr.f32.gmra.mrb[0].mxu0 %v1804
  %v1806 = vpop.f32.mrb[0].mxu0
  %v1807 = vadd.f32 %v1312, %v1806
  %v1808 = vpop.f32.mrb[0].mxu0
  %1809 = vmatprep.mubr.f32.mxu0 0.0
  %v1810 = vand.u32 %v212, 4294901760
  %v1811 = vsub.f32 %v212, %v1810
  %1812 = vmatmul.mubr.f32.gmra.mrb[0].mxu0 %v1811
  %v1813 = vpop.f32.mrb[0].mxu0
  %v1814 = vadd.f32 %v1318, %v1813
  %v1815 = vpop.f32.mrb[0].mxu0
  %1816 = vmatprep.mubr.f32.mxu0 0.0
  %v1817 = vand.u32 %v215, 4294901760
  %v1818 = vsub.f32 %v215, %v1817
  %1819 = vmatmul.mubr.f32.gmra.mrb[0].mxu0 %v1818
  %v1820 = vpop.f32.mrb[0].mxu0
  %v1821 = vadd.f32 %v1324, %v1820
  %v1822 = vpop.f32.mrb[0].mxu0
  %1823 = vmatprep.mubr.f32.mxu0 0.0
  %v1824 = vand.u32 %v218, 4294901760
  %v1825 = vsub.f32 %v218, %v1824
  %1826 = vmatmul.mubr.f32.gmra.mrb[0].mxu0 %v1825
  %v1827 = vpop.f32.mrb[0].mxu0
  %v1828 = vadd.f32 %v1330, %v1827
  %v1829 = vpop.f32.mrb[0].mxu0
  %1830 = vmatprep.mubr.f32.mxu0 0.0
  %v1831 = vand.u32 %v221, 4294901760
  %v1832 = vsub.f32 %v221, %v1831
  %1833 = vmatmul.mubr.f32.gmra.mrb[0].mxu0 %v1832
  %v1834 = vpop.f32.mrb[0].mxu0
  %v1835 = vadd.f32 %v1336, %v1834
  %v1836 = vpop.f32.mrb[0].mxu0
  %1837 = vmatprep.mubr.f32.mxu0 0.0
  %v1838 = vand.u32 %v224, 4294901760
  %v1839 = vsub.f32 %v224, %v1838
  %1840 = vmatmul.mubr.f32.gmra.mrb[0].mxu0 %v1839
  %v1841 = vpop.f32.mrb[0].mxu0
  %v1842 = vadd.f32 %v1342, %v1841
  %v1843 = vpop.f32.mrb[0].mxu0
  %1844 = vmatprep.mubr.f32.mxu0 0.0
  %v1845 = vand.u32 %v227, 4294901760
  %v1846 = vsub.f32 %v227, %v1845
  %1847 = vmatmul.mubr.f32.gmra.mrb[0].mxu0 %v1846
  %v1848 = vpop.f32.mrb[0].mxu0
  %v1849 = vadd.f32 %v1348, %v1848
  %v1850 = vpop.f32.mrb[0].mxu0
  %1851 = vmatprep.mubr.f32.mxu0 0.0
  %v1852 = vand.u32 %v230, 4294901760
  %v1853 = vsub.f32 %v230, %v1852
  %1854 = vmatmul.mubr.f32.gmra.mrb[0].mxu0 %v1853
  %v1855 = vpop.f32.mrb[0].mxu0
  %v1856 = vadd.f32 %v1354, %v1855
  %v1857 = vpop.f32.mrb[0].mxu0
  %1858 = vmatprep.mubr.f32.mxu0 0.0
  %v1859 = vand.u32 %v233, 4294901760
  %v1860 = vsub.f32 %v233, %v1859
  %1861 = vmatmul.mubr.f32.gmra.mrb[0].mxu0 %v1860
  %v1862 = vpop.f32.mrb[0].mxu0
  %v1863 = vadd.f32 %v1360, %v1862
  %v1864 = vpop.f32.mrb[0].mxu0
  %1865 = vmatprep.mubr.f32.mxu0 0.0
  %v1866 = vand.u32 %v236, 4294901760
  %v1867 = vsub.f32 %v236, %v1866
  %1868 = vmatmul.mubr.f32.gmra.mrb[0].mxu0 %v1867
  %v1869 = vpop.f32.mrb[0].mxu0
  %v1870 = vadd.f32 %v1366, %v1869
  %v1871 = vpop.f32.mrb[0].mxu0
  %1872 = vmatprep.mubr.f32.mxu0 0.0
  %v1873 = vand.u32 %v239, 4294901760
  %v1874 = vsub.f32 %v239, %v1873
  %1875 = vmatmul.mubr.f32.gmra.mrb[0].mxu0 %v1874
  %v1876 = vpop.f32.mrb[0].mxu0
  %v1877 = vadd.f32 %v1372, %v1876
  %v1878 = vpop.f32.mrb[0].mxu0
  %1879 = vmatprep.mubr.f32.mxu0 0.0
  %v1880 = vand.u32 %v242, 4294901760
  %v1881 = vsub.f32 %v242, %v1880
  %1882 = vmatmul.mubr.f32.gmra.mrb[0].mxu0 %v1881
  %v1883 = vpop.f32.mrb[0].mxu0
  %v1884 = vadd.f32 %v1378, %v1883
  %v1885 = vpop.f32.mrb[0].mxu0
  %1886 = vmatprep.mubr.f32.mxu0 0.0
  %v1887 = vand.u32 %v245, 4294901760
  %v1888 = vsub.f32 %v245, %v1887
  %1889 = vmatmul.mubr.f32.gmra.mrb[0].mxu0 %v1888
  %v1890 = vpop.f32.mrb[0].mxu0
  %v1891 = vadd.f32 %v1384, %v1890
  %v1892 = vpop.f32.mrb[0].mxu0
  %1893 = vmatprep.mubr.f32.mxu0 0.0
  %v1894 = vand.u32 %v248, 4294901760
  %v1895 = vsub.f32 %v248, %v1894
  %1896 = vmatmul.mubr.f32.gmra.mrb[0].mxu0 %v1895
  %v1897 = vpop.f32.mrb[0].mxu0
  %v1898 = vadd.f32 %v1390, %v1897
  %v1899 = vpop.f32.mrb[0].mxu0
  %1900 = vmatprep.mubr.f32.mxu0 0.0
  %v1901 = vand.u32 %v251, 4294901760
  %v1902 = vsub.f32 %v251, %v1901
  %1903 = vmatmul.mubr.f32.gmra.mrb[0].mxu0 %v1902
  %v1904 = vpop.f32.mrb[0].mxu0
  %v1905 = vadd.f32 %v1396, %v1904
  %v1906 = vpop.f32.mrb[0].mxu0
  %1907 = vmatprep.mubr.f32.mxu0 0.0
  %v1908 = vand.u32 %v254, 4294901760
  %v1909 = vsub.f32 %v254, %v1908
  %1910 = vmatmul.mubr.f32.gmra.mrb[0].mxu0 %v1909
  %v1911 = vpop.f32.mrb[0].mxu0
  %v1912 = vadd.f32 %v1402, %v1911
  %v1913 = vpop.f32.mrb[0].mxu0
  %1914 = vmatprep.mubr.f32.mxu0 0.0
  %v1915 = vand.u32 %v257, 4294901760
  %v1916 = vsub.f32 %v257, %v1915
  %1917 = vmatmul.mubr.f32.gmra.mrb[0].mxu0 %v1916
  %v1918 = vpop.f32.mrb[0].mxu0
  %v1919 = vadd.f32 %v1408, %v1918
  %v1920 = vpop.f32.mrb[0].mxu0
  %1921 = vmatprep.mubr.f32.mxu0 0.0
  %v1922 = vand.u32 %v260, 4294901760
  %v1923 = vsub.f32 %v260, %v1922
  %1924 = vmatmul.mubr.f32.gmra.mrb[0].mxu0 %v1923
  %v1925 = vpop.f32.mrb[0].mxu0
  %v1926 = vadd.f32 %v1414, %v1925
  %v1927 = vpop.f32.mrb[0].mxu0
  %1928 = vmatprep.mubr.f32.mxu0 0.0
  %v1929 = vand.u32 %v263, 4294901760
  %v1930 = vsub.f32 %v263, %v1929
  %1931 = vmatmul.mubr.f32.gmra.mrb[0].mxu0 %v1930
  %v1932 = vpop.f32.mrb[0].mxu0
  %v1933 = vadd.f32 %v1420, %v1932
  %v1934 = vpop.f32.mrb[0].mxu0
  %1935 = vmatprep.mubr.f32.mxu0 0.0
  %v1936 = vand.u32 %v266, 4294901760
  %v1937 = vsub.f32 %v266, %v1936
  %1938 = vmatmul.mubr.f32.gmra.mrb[0].mxu0 %v1937
  %v1939 = vpop.f32.mrb[0].mxu0
  %v1940 = vadd.f32 %v1426, %v1939
  %v1941 = vpop.f32.mrb[0].mxu0
  %1942 = vmatprep.mubr.f32.mxu0 0.0
  %v1943 = vand.u32 %v269, 4294901760
  %v1944 = vsub.f32 %v269, %v1943
  %1945 = vmatmul.mubr.f32.gmra.mrb[0].mxu0 %v1944
  %v1946 = vpop.f32.mrb[0].mxu0
  %v1947 = vadd.f32 %v1432, %v1946
  %v1948 = vpop.f32.mrb[0].mxu0
  %1949 = vmatprep.mubr.f32.mxu0 0.0
  %v1950 = vand.u32 %v272, 4294901760
  %v1951 = vsub.f32 %v272, %v1950
  %1952 = vmatmul.mubr.f32.gmra.mrb[0].mxu0 %v1951
  %v1953 = vpop.f32.mrb[0].mxu0
  %v1954 = vadd.f32 %v1438, %v1953
  %v1955 = vpop.f32.mrb[0].mxu0
  %1956 = vmatprep.mubr.f32.mxu0 0.0
  %v1957 = vand.u32 %v275, 4294901760
  %v1958 = vsub.f32 %v275, %v1957
  %1959 = vmatmul.mubr.f32.gmra.mrb[0].mxu0 %v1958
  %v1960 = vpop.f32.mrb[0].mxu0
  %v1961 = vadd.f32 %v1444, %v1960
  %v1962 = vpop.f32.mrb[0].mxu0
  %1963 = vmatprep.mubr.f32.mxu0 0.0
  %v1964 = vand.u32 %v278, 4294901760
  %v1965 = vsub.f32 %v278, %v1964
  %1966 = vmatmul.mubr.f32.gmra.mrb[0].mxu0 %v1965
  %v1967 = vpop.f32.mrb[0].mxu0
  %v1968 = vadd.f32 %v1450, %v1967
  %v1969 = vpop.f32.mrb[0].mxu0
  %1970 = vmatprep.mubr.f32.mxu0 0.0
  %v1971 = vand.u32 %v281, 4294901760
  %v1972 = vsub.f32 %v281, %v1971
  %1973 = vmatmul.mubr.f32.gmra.mrb[0].mxu0 %v1972
  %v1974 = vpop.f32.mrb[0].mxu0
  %v1975 = vadd.f32 %v1456, %v1974
  %v1976 = vpop.f32.mrb[0].mxu0
  %1977 = vmatprep.mubr.f32.mxu0 0.0
  %v1978 = vand.u32 %v284, 4294901760
  %v1979 = vsub.f32 %v284, %v1978
  %1980 = vmatmul.mubr.f32.gmra.mrb[0].mxu0 %v1979
  %v1981 = vpop.f32.mrb[0].mxu0
  %v1982 = vadd.f32 %v1462, %v1981
  %v1983 = vpop.f32.mrb[0].mxu0
  %1984 = vmatprep.mubr.f32.mxu0 0.0
  %v1985 = vand.u32 %v287, 4294901760
  %v1986 = vsub.f32 %v287, %v1985
  %1987 = vmatmul.mubr.f32.gmra.mrb[0].mxu0 %v1986
  %v1988 = vpop.f32.mrb[0].mxu0
  %v1989 = vadd.f32 %v1468, %v1988
  %v1990 = vpop.f32.mrb[0].mxu0
  %1991 = vmatprep.mubr.f32.mxu0 0.0
  %v1992 = vand.u32 %v290, 4294901760
  %v1993 = vsub.f32 %v290, %v1992
  %1994 = vmatmul.mubr.f32.gmra.mrb[0].mxu0 %v1993
  %v1995 = vpop.f32.mrb[0].mxu0
  %v1996 = vadd.f32 %v1474, %v1995
  %v1997 = vpop.f32.mrb[0].mxu0
  %1998 = vmatprep.mubr.f32.mxu0 0.0
  %v1999 = vand.u32 %v293, 4294901760
  %v2000 = vsub.f32 %v293, %v1999
  %2001 = vmatmul.mubr.f32.gmra.mrb[0].mxu0 %v2000
  %v2002 = vpop.f32.mrb[0].mxu0
  %v2003 = vadd.f32 %v1480, %v2002
  %v2004 = vpop.f32.mrb[0].mxu0
  %2005 = vdwg.mxu0
  %2006 = vmatprep.subr.mxu0 0.0
  %v2007 = vand.u32 %v90, 4294901760
  %2008 = vmatpush1.msra.mxu0 %v2007
  %2009 = vmatprep.subr.mxu0 0.0
  %v2010 = vand.u32 %v91, 4294901760
  %2011 = vmatpush1.msra.mxu0 %v2010
  %2012 = vmatprep.subr.mxu0 0.0
  %v2013 = vand.u32 %v92, 4294901760
  %2014 = vmatpush1.msra.mxu0 %v2013
  %2015 = vmatprep.subr.mxu0 0.0
  %v2016 = vand.u32 %v93, 4294901760
  %2017 = vmatpush1.msra.mxu0 %v2016
  %2018 = vmatprep.subr.mxu0 0.0
  %v2019 = vand.u32 %v297, 4294901760
  %2020 = vmatpush1.msra.mxu0 %v2019
  %2021 = vmatprep.subr.mxu0 0.0
  %2022 = vmatpush1.msra.mxu0 0.0
  %2023 = vmatprep.subr.mxu0 0.0
  %2024 = vmatpush1.msra.mxu0 0.0
  %2025 = vmatprep.subr.mxu0 0.0
  %2026 = vmatpush1.msra.mxu0 0.0
  %2027 = vmatprep.subr.mxu0 0.0
  %2028 = vmatpush1.msra.mxu0 0.0
  %2029 = vmatprep.subr.mxu0 0.0
  %2030 = vmatpush1.msra.mxu0 0.0
  %2031 = vmatprep.subr.mxu0 0.0
  %2032 = vmatpush1.msra.mxu0 0.0
  %2033 = vmatprep.subr.mxu0 0.0
  %2034 = vmatpush1.msra.mxu0 0.0
  %2035 = vmatprep.subr.mxu0 0.0
  %2036 = vmatpush1.msra.mxu0 0.0
  %2037 = vmatprep.subr.mxu0 0.0
  %2038 = vmatpush1.msra.mxu0 0.0
  %2039 = vmatprep.subr.mxu0 0.0
  %2040 = vmatpush1.msra.mxu0 0.0
  %2041 = vmatprep.subr.mxu0 0.0
  %2042 = vmatpush1.msra.mxu0 0.0
  %2043 = vmatprep.subr.mxu0 0.0
  %2044 = vmatpush1.msra.mxu0 0.0
  %2045 = vmatprep.subr.mxu0 0.0
  %2046 = vmatpush1.msra.mxu0 0.0
  %2047 = vmatprep.subr.mxu0 0.0
  %2048 = vmatpush1.msra.mxu0 0.0
  %2049 = vmatprep.subr.mxu0 0.0
  %2050 = vmatpush1.msra.mxu0 0.0
  %2051 = vmatprep.subr.mxu0 0.0
  %2052 = vmatpush1.msra.mxu0 0.0
  %2053 = vmatprep.subr.mxu0 0.0
  %2054 = vmatpush1.msra.mxu0 0.0
  %2055 = vmatprep.subr.mxu0 0.0
  %2056 = vmatpush1.msra.mxu0 0.0
  %2057 = vmatprep.subr.mxu0 0.0
  %2058 = vmatpush1.msra.mxu0 0.0
  %2059 = vmatprep.subr.mxu0 0.0
  %2060 = vmatpush1.msra.mxu0 0.0
  %2061 = vmatprep.subr.mxu0 0.0
  %2062 = vmatpush1.msra.mxu0 0.0
  %2063 = vmatprep.subr.mxu0 0.0
  %2064 = vmatpush1.msra.mxu0 0.0
  %2065 = vmatprep.subr.mxu0 0.0
  %2066 = vmatpush1.msra.mxu0 0.0
  %2067 = vmatprep.subr.mxu0 0.0
  %2068 = vmatpush1.msra.mxu0 0.0
  %2069 = vmatprep.subr.mxu0 0.0
  %2070 = vmatpush1.msra.mxu0 0.0
  %2071 = vmatprep.subr.mxu0 0.0
  %2072 = vmatpush1.msra.mxu0 0.0
  %2073 = vmatprep.subr.mxu0 0.0
  %2074 = vmatpush1.msra.mxu0 0.0
  %2075 = vmatprep.mubr.f32.mxu0 0.0
  %v2076 = vand.u32 %v104, 4294901760
  %v2077 = vsub.f32 %v104, %v2076
  %v2078 = vand.u32 %v2077, 4294901760
  %2079 = vmatmul.mubr.f32.gmra.mrb[0].mxu0 %v2078
  %v2080 = vpop.f32.mrb[0].mxu0
  %v2081 = vadd.f32 %v1562, %v2080
  %v2082 = vpop.f32.mrb[0].mxu0
  %2083 = vmatprep.mubr.f32.mxu0 0.0
  %v2084 = vand.u32 %v107, 4294901760
  %v2085 = vsub.f32 %v107, %v2084
  %v2086 = vand.u32 %v2085, 4294901760
  %2087 = vmatmul.mubr.f32.gmra.mrb[0].mxu0 %v2086
  %v2088 = vpop.f32.mrb[0].mxu0
  %v2089 = vadd.f32 %v1569, %v2088
  %v2090 = vpop.f32.mrb[0].mxu0
  %2091 = vmatprep.mubr.f32.mxu0 0.0
  %v2092 = vand.u32 %v110, 4294901760
  %v2093 = vsub.f32 %v110, %v2092
  %v2094 = vand.u32 %v2093, 4294901760
  %2095 = vmatmul.mubr.f32.gmra.mrb[0].mxu0 %v2094
  %v2096 = vpop.f32.mrb[0].mxu0
  %v2097 = vadd.f32 %v1576, %v2096
  %v2098 = vpop.f32.mrb[0].mxu0
  %2099 = vmatprep.mubr.f32.mxu0 0.0
  %v2100 = vand.u32 %v113, 4294901760
  %v2101 = vsub.f32 %v113, %v2100
  %v2102 = vand.u32 %v2101, 4294901760
  %2103 = vmatmul.mubr.f32.gmra.mrb[0].mxu0 %v2102
  %v2104 = vpop.f32.mrb[0].mxu0
  %v2105 = vadd.f32 %v1583, %v2104
  %v2106 = vpop.f32.mrb[0].mxu0
  %2107 = vmatprep.mubr.f32.mxu0 0.0
  %v2108 = vand.u32 %v116, 4294901760
  %v2109 = vsub.f32 %v116, %v2108
  %v2110 = vand.u32 %v2109, 4294901760
  %2111 = vmatmul.mubr.f32.gmra.mrb[0].mxu0 %v2110
  %v2112 = vpop.f32.mrb[0].mxu0
  %v2113 = vadd.f32 %v1590, %v2112
  %v2114 = vpop.f32.mrb[0].mxu0
  %2115 = vmatprep.mubr.f32.mxu0 0.0
  %v2116 = vand.u32 %v119, 4294901760
  %v2117 = vsub.f32 %v119, %v2116
  %v2118 = vand.u32 %v2117, 4294901760
  %2119 = vmatmul.mubr.f32.gmra.mrb[0].mxu0 %v2118
  %v2120 = vpop.f32.mrb[0].mxu0
  %v2121 = vadd.f32 %v1597, %v2120
  %v2122 = vpop.f32.mrb[0].mxu0
  %2123 = vmatprep.mubr.f32.mxu0 0.0
  %v2124 = vand.u32 %v122, 4294901760
  %v2125 = vsub.f32 %v122, %v2124
  %v2126 = vand.u32 %v2125, 4294901760
  %2127 = vmatmul.mubr.f32.gmra.mrb[0].mxu0 %v2126
  %v2128 = vpop.f32.mrb[0].mxu0
  %v2129 = vadd.f32 %v1604, %v2128
  %v2130 = vpop.f32.mrb[0].mxu0
  %2131 = vmatprep.mubr.f32.mxu0 0.0
  %v2132 = vand.u32 %v125, 4294901760
  %v2133 = vsub.f32 %v125, %v2132
  %v2134 = vand.u32 %v2133, 4294901760
  %2135 = vmatmul.mubr.f32.gmra.mrb[0].mxu0 %v2134
  %v2136 = vpop.f32.mrb[0].mxu0
  %v2137 = vadd.f32 %v1611, %v2136
  %v2138 = vpop.f32.mrb[0].mxu0
  %2139 = vmatprep.mubr.f32.mxu0 0.0
  %v2140 = vand.u32 %v128, 4294901760
  %v2141 = vsub.f32 %v128, %v2140
  %v2142 = vand.u32 %v2141, 4294901760
  %2143 = vmatmul.mubr.f32.gmra.mrb[0].mxu0 %v2142
  %v2144 = vpop.f32.mrb[0].mxu0
  %v2145 = vadd.f32 %v1618, %v2144
  %v2146 = vpop.f32.mrb[0].mxu0
  %2147 = vmatprep.mubr.f32.mxu0 0.0
  %v2148 = vand.u32 %v131, 4294901760
  %v2149 = vsub.f32 %v131, %v2148
  %v2150 = vand.u32 %v2149, 4294901760
  %2151 = vmatmul.mubr.f32.gmra.mrb[0].mxu0 %v2150
  %v2152 = vpop.f32.mrb[0].mxu0
  %v2153 = vadd.f32 %v1625, %v2152
  %v2154 = vpop.f32.mrb[0].mxu0
  %2155 = vmatprep.mubr.f32.mxu0 0.0
  %v2156 = vand.u32 %v134, 4294901760
  %v2157 = vsub.f32 %v134, %v2156
  %v2158 = vand.u32 %v2157, 4294901760
  %2159 = vmatmul.mubr.f32.gmra.mrb[0].mxu0 %v2158
  %v2160 = vpop.f32.mrb[0].mxu0
  %v2161 = vadd.f32 %v1632, %v2160
  %v2162 = vpop.f32.mrb[0].mxu0
  %2163 = vmatprep.mubr.f32.mxu0 0.0
  %v2164 = vand.u32 %v137, 4294901760
  %v2165 = vsub.f32 %v137, %v2164
  %v2166 = vand.u32 %v2165, 4294901760
  %2167 = vmatmul.mubr.f32.gmra.mrb[0].mxu0 %v2166
  %v2168 = vpop.f32.mrb[0].mxu0
  %v2169 = vadd.f32 %v1639, %v2168
  %v2170 = vpop.f32.mrb[0].mxu0
  %2171 = vmatprep.mubr.f32.mxu0 0.0
  %v2172 = vand.u32 %v140, 4294901760
  %v2173 = vsub.f32 %v140, %v2172
  %v2174 = vand.u32 %v2173, 4294901760
  %2175 = vmatmul.mubr.f32.gmra.mrb[0].mxu0 %v2174
  %v2176 = vpop.f32.mrb[0].mxu0
  %v2177 = vadd.f32 %v1646, %v2176
  %v2178 = vpop.f32.mrb[0].mxu0
  %2179 = vmatprep.mubr.f32.mxu0 0.0
  %v2180 = vand.u32 %v143, 4294901760
  %v2181 = vsub.f32 %v143, %v2180
  %v2182 = vand.u32 %v2181, 4294901760
  %2183 = vmatmul.mubr.f32.gmra.mrb[0].mxu0 %v2182
  %v2184 = vpop.f32.mrb[0].mxu0
  %v2185 = vadd.f32 %v1653, %v2184
  %v2186 = vpop.f32.mrb[0].mxu0
  %2187 = vmatprep.mubr.f32.mxu0 0.0
  %v2188 = vand.u32 %v146, 4294901760
  %v2189 = vsub.f32 %v146, %v2188
  %v2190 = vand.u32 %v2189, 4294901760
  %2191 = vmatmul.mubr.f32.gmra.mrb[0].mxu0 %v2190
  %v2192 = vpop.f32.mrb[0].mxu0
  %v2193 = vadd.f32 %v1660, %v2192
  %v2194 = vpop.f32.mrb[0].mxu0
  %2195 = vmatprep.mubr.f32.mxu0 0.0
  %v2196 = vand.u32 %v149, 4294901760
  %v2197 = vsub.f32 %v149, %v2196
  %v2198 = vand.u32 %v2197, 4294901760
  %2199 = vmatmul.mubr.f32.gmra.mrb[0].mxu0 %v2198
  %v2200 = vpop.f32.mrb[0].mxu0
  %v2201 = vadd.f32 %v1667, %v2200
  %v2202 = vpop.f32.mrb[0].mxu0
  %2203 = vmatprep.mubr.f32.mxu0 0.0
  %v2204 = vand.u32 %v152, 4294901760
  %v2205 = vsub.f32 %v152, %v2204
  %v2206 = vand.u32 %v2205, 4294901760
  %2207 = vmatmul.mubr.f32.gmra.mrb[0].mxu0 %v2206
  %v2208 = vpop.f32.mrb[0].mxu0
  %v2209 = vadd.f32 %v1674, %v2208
  %v2210 = vpop.f32.mrb[0].mxu0
  %2211 = vmatprep.mubr.f32.mxu0 0.0
  %v2212 = vand.u32 %v155, 4294901760
  %v2213 = vsub.f32 %v155, %v2212
  %v2214 = vand.u32 %v2213, 4294901760
  %2215 = vmatmul.mubr.f32.gmra.mrb[0].mxu0 %v2214
  %v2216 = vpop.f32.mrb[0].mxu0
  %v2217 = vadd.f32 %v1681, %v2216
  %v2218 = vpop.f32.mrb[0].mxu0
  %2219 = vmatprep.mubr.f32.mxu0 0.0
  %v2220 = vand.u32 %v158, 4294901760
  %v2221 = vsub.f32 %v158, %v2220
  %v2222 = vand.u32 %v2221, 4294901760
  %2223 = vmatmul.mubr.f32.gmra.mrb[0].mxu0 %v2222
  %v2224 = vpop.f32.mrb[0].mxu0
  %v2225 = vadd.f32 %v1688, %v2224
  %v2226 = vpop.f32.mrb[0].mxu0
  %2227 = vmatprep.mubr.f32.mxu0 0.0
  %v2228 = vand.u32 %v161, 4294901760
  %v2229 = vsub.f32 %v161, %v2228
  %v2230 = vand.u32 %v2229, 4294901760
  %2231 = vmatmul.mubr.f32.gmra.mrb[0].mxu0 %v2230
  %v2232 = vpop.f32.mrb[0].mxu0
  %v2233 = vadd.f32 %v1695, %v2232
  %v2234 = vpop.f32.mrb[0].mxu0
  %2235 = vmatprep.mubr.f32.mxu0 0.0
  %v2236 = vand.u32 %v164, 4294901760
  %v2237 = vsub.f32 %v164, %v2236
  %v2238 = vand.u32 %v2237, 4294901760
  %2239 = vmatmul.mubr.f32.gmra.mrb[0].mxu0 %v2238
  %v2240 = vpop.f32.mrb[0].mxu0
  %v2241 = vadd.f32 %v1702, %v2240
  %v2242 = vpop.f32.mrb[0].mxu0
  %2243 = vmatprep.mubr.f32.mxu0 0.0
  %v2244 = vand.u32 %v167, 4294901760
  %v2245 = vsub.f32 %v167, %v2244
  %v2246 = vand.u32 %v2245, 4294901760
  %2247 = vmatmul.mubr.f32.gmra.mrb[0].mxu0 %v2246
  %v2248 = vpop.f32.mrb[0].mxu0
  %v2249 = vadd.f32 %v1709, %v2248
  %v2250 = vpop.f32.mrb[0].mxu0
  %2251 = vmatprep.mubr.f32.mxu0 0.0
  %v2252 = vand.u32 %v170, 4294901760
  %v2253 = vsub.f32 %v170, %v2252
  %v2254 = vand.u32 %v2253, 4294901760
  %2255 = vmatmul.mubr.f32.gmra.mrb[0].mxu0 %v2254
  %v2256 = vpop.f32.mrb[0].mxu0
  %v2257 = vadd.f32 %v1716, %v2256
  %v2258 = vpop.f32.mrb[0].mxu0
  %2259 = vmatprep.mubr.f32.mxu0 0.0
  %v2260 = vand.u32 %v173, 4294901760
  %v2261 = vsub.f32 %v173, %v2260
  %v2262 = vand.u32 %v2261, 4294901760
  %2263 = vmatmul.mubr.f32.gmra.mrb[0].mxu0 %v2262
  %v2264 = vpop.f32.mrb[0].mxu0
  %v2265 = vadd.f32 %v1723, %v2264
  %v2266 = vpop.f32.mrb[0].mxu0
  %2267 = vmatprep.mubr.f32.mxu0 0.0
  %v2268 = vand.u32 %v176, 4294901760
  %v2269 = vsub.f32 %v176, %v2268
  %v2270 = vand.u32 %v2269, 4294901760
  %2271 = vmatmul.mubr.f32.gmra.mrb[0].mxu0 %v2270
  %v2272 = vpop.f32.mrb[0].mxu0
  %v2273 = vadd.f32 %v1730, %v2272
  %v2274 = vpop.f32.mrb[0].mxu0
  %2275 = vmatprep.mubr.f32.mxu0 0.0
  %v2276 = vand.u32 %v179, 4294901760
  %v2277 = vsub.f32 %v179, %v2276
  %v2278 = vand.u32 %v2277, 4294901760
  %2279 = vmatmul.mubr.f32.gmra.mrb[0].mxu0 %v2278
  %v2280 = vpop.f32.mrb[0].mxu0
  %v2281 = vadd.f32 %v1737, %v2280
  %v2282 = vpop.f32.mrb[0].mxu0
  %2283 = vmatprep.mubr.f32.mxu0 0.0
  %v2284 = vand.u32 %v182, 4294901760
  %v2285 = vsub.f32 %v182, %v2284
  %v2286 = vand.u32 %v2285, 4294901760
  %2287 = vmatmul.mubr.f32.gmra.mrb[0].mxu0 %v2286
  %v2288 = vpop.f32.mrb[0].mxu0
  %v2289 = vadd.f32 %v1744, %v2288
  %v2290 = vpop.f32.mrb[0].mxu0
  %2291 = vmatprep.mubr.f32.mxu0 0.0
  %v2292 = vand.u32 %v185, 4294901760
  %v2293 = vsub.f32 %v185, %v2292
  %v2294 = vand.u32 %v2293, 4294901760
  %2295 = vmatmul.mubr.f32.gmra.mrb[0].mxu0 %v2294
  %v2296 = vpop.f32.mrb[0].mxu0
  %v2297 = vadd.f32 %v1751, %v2296
  %v2298 = vpop.f32.mrb[0].mxu0
  %2299 = vmatprep.mubr.f32.mxu0 0.0
  %v2300 = vand.u32 %v188, 4294901760
  %v2301 = vsub.f32 %v188, %v2300
  %v2302 = vand.u32 %v2301, 4294901760
  %2303 = vmatmul.mubr.f32.gmra.mrb[0].mxu0 %v2302
  %v2304 = vpop.f32.mrb[0].mxu0
  %v2305 = vadd.f32 %v1758, %v2304
  %v2306 = vpop.f32.mrb[0].mxu0
  %2307 = vmatprep.mubr.f32.mxu0 0.0
  %v2308 = vand.u32 %v191, 4294901760
  %v2309 = vsub.f32 %v191, %v2308
  %v2310 = vand.u32 %v2309, 4294901760
  %2311 = vmatmul.mubr.f32.gmra.mrb[0].mxu0 %v2310
  %v2312 = vpop.f32.mrb[0].mxu0
  %v2313 = vadd.f32 %v1765, %v2312
  %v2314 = vpop.f32.mrb[0].mxu0
  %2315 = vmatprep.mubr.f32.mxu0 0.0
  %v2316 = vand.u32 %v194, 4294901760
  %v2317 = vsub.f32 %v194, %v2316
  %v2318 = vand.u32 %v2317, 4294901760
  %2319 = vmatmul.mubr.f32.gmra.mrb[0].mxu0 %v2318
  %v2320 = vpop.f32.mrb[0].mxu0
  %v2321 = vadd.f32 %v1772, %v2320
  %v2322 = vpop.f32.mrb[0].mxu0
  %2323 = vmatprep.mubr.f32.mxu0 0.0
  %v2324 = vand.u32 %v197, 4294901760
  %v2325 = vsub.f32 %v197, %v2324
  %v2326 = vand.u32 %v2325, 4294901760
  %2327 = vmatmul.mubr.f32.gmra.mrb[0].mxu0 %v2326
  %v2328 = vpop.f32.mrb[0].mxu0
  %v2329 = vadd.f32 %v1779, %v2328
  %v2330 = vpop.f32.mrb[0].mxu0
  %2331 = vmatprep.mubr.f32.mxu0 0.0
  %v2332 = vand.u32 %v200, 4294901760
  %v2333 = vsub.f32 %v200, %v2332
  %v2334 = vand.u32 %v2333, 4294901760
  %2335 = vmatmul.mubr.f32.gmra.mrb[0].mxu0 %v2334
  %v2336 = vpop.f32.mrb[0].mxu0
  %v2337 = vadd.f32 %v1786, %v2336
  %v2338 = vpop.f32.mrb[0].mxu0
  %2339 = vmatprep.mubr.f32.mxu0 0.0
  %v2340 = vand.u32 %v203, 4294901760
  %v2341 = vsub.f32 %v203, %v2340
  %v2342 = vand.u32 %v2341, 4294901760
  %2343 = vmatmul.mubr.f32.gmra.mrb[0].mxu0 %v2342
  %v2344 = vpop.f32.mrb[0].mxu0
  %v2345 = vadd.f32 %v1793, %v2344
  %v2346 = vpop.f32.mrb[0].mxu0
  %2347 = vmatprep.mubr.f32.mxu0 0.0
  %v2348 = vand.u32 %v206, 4294901760
  %v2349 = vsub.f32 %v206, %v2348
  %v2350 = vand.u32 %v2349, 4294901760
  %2351 = vmatmul.mubr.f32.gmra.mrb[0].mxu0 %v2350
  %v2352 = vpop.f32.mrb[0].mxu0
  %v2353 = vadd.f32 %v1800, %v2352
  %v2354 = vpop.f32.mrb[0].mxu0
  %2355 = vmatprep.mubr.f32.mxu0 0.0
  %v2356 = vand.u32 %v209, 4294901760
  %v2357 = vsub.f32 %v209, %v2356
  %v2358 = vand.u32 %v2357, 4294901760
  %2359 = vmatmul.mubr.f32.gmra.mrb[0].mxu0 %v2358
  %v2360 = vpop.f32.mrb[0].mxu0
  %v2361 = vadd.f32 %v1807, %v2360
  %v2362 = vpop.f32.mrb[0].mxu0
  %2363 = vmatprep.mubr.f32.mxu0 0.0
  %v2364 = vand.u32 %v212, 4294901760
  %v2365 = vsub.f32 %v212, %v2364
  %v2366 = vand.u32 %v2365, 4294901760
  %2367 = vmatmul.mubr.f32.gmra.mrb[0].mxu0 %v2366
  %v2368 = vpop.f32.mrb[0].mxu0
  %v2369 = vadd.f32 %v1814, %v2368
  %v2370 = vpop.f32.mrb[0].mxu0
  %2371 = vmatprep.mubr.f32.mxu0 0.0
  %v2372 = vand.u32 %v215, 4294901760
  %v2373 = vsub.f32 %v215, %v2372
  %v2374 = vand.u32 %v2373, 4294901760
  %2375 = vmatmul.mubr.f32.gmra.mrb[0].mxu0 %v2374
  %v2376 = vpop.f32.mrb[0].mxu0
  %v2377 = vadd.f32 %v1821, %v2376
  %v2378 = vpop.f32.mrb[0].mxu0
  %2379 = vmatprep.mubr.f32.mxu0 0.0
  %v2380 = vand.u32 %v218, 4294901760
  %v2381 = vsub.f32 %v218, %v2380
  %v2382 = vand.u32 %v2381, 4294901760
  %2383 = vmatmul.mubr.f32.gmra.mrb[0].mxu0 %v2382
  %v2384 = vpop.f32.mrb[0].mxu0
  %v2385 = vadd.f32 %v1828, %v2384
  %v2386 = vpop.f32.mrb[0].mxu0
  %2387 = vmatprep.mubr.f32.mxu0 0.0
  %v2388 = vand.u32 %v221, 4294901760
  %v2389 = vsub.f32 %v221, %v2388
  %v2390 = vand.u32 %v2389, 4294901760
  %2391 = vmatmul.mubr.f32.gmra.mrb[0].mxu0 %v2390
  %v2392 = vpop.f32.mrb[0].mxu0
  %v2393 = vadd.f32 %v1835, %v2392
  %v2394 = vpop.f32.mrb[0].mxu0
  %2395 = vmatprep.mubr.f32.mxu0 0.0
  %v2396 = vand.u32 %v224, 4294901760
  %v2397 = vsub.f32 %v224, %v2396
  %v2398 = vand.u32 %v2397, 4294901760
  %2399 = vmatmul.mubr.f32.gmra.mrb[0].mxu0 %v2398
  %v2400 = vpop.f32.mrb[0].mxu0
  %v2401 = vadd.f32 %v1842, %v2400
  %v2402 = vpop.f32.mrb[0].mxu0
  %2403 = vmatprep.mubr.f32.mxu0 0.0
  %v2404 = vand.u32 %v227, 4294901760
  %v2405 = vsub.f32 %v227, %v2404
  %v2406 = vand.u32 %v2405, 4294901760
  %2407 = vmatmul.mubr.f32.gmra.mrb[0].mxu0 %v2406
  %v2408 = vpop.f32.mrb[0].mxu0
  %v2409 = vadd.f32 %v1849, %v2408
  %v2410 = vpop.f32.mrb[0].mxu0
  %2411 = vmatprep.mubr.f32.mxu0 0.0
  %v2412 = vand.u32 %v230, 4294901760
  %v2413 = vsub.f32 %v230, %v2412
  %v2414 = vand.u32 %v2413, 4294901760
  %2415 = vmatmul.mubr.f32.gmra.mrb[0].mxu0 %v2414
  %v2416 = vpop.f32.mrb[0].mxu0
  %v2417 = vadd.f32 %v1856, %v2416
  %v2418 = vpop.f32.mrb[0].mxu0
  %2419 = vmatprep.mubr.f32.mxu0 0.0
  %v2420 = vand.u32 %v233, 4294901760
  %v2421 = vsub.f32 %v233, %v2420
  %v2422 = vand.u32 %v2421, 4294901760
  %2423 = vmatmul.mubr.f32.gmra.mrb[0].mxu0 %v2422
  %v2424 = vpop.f32.mrb[0].mxu0
  %v2425 = vadd.f32 %v1863, %v2424
  %v2426 = vpop.f32.mrb[0].mxu0
  %2427 = vmatprep.mubr.f32.mxu0 0.0
  %v2428 = vand.u32 %v236, 4294901760
  %v2429 = vsub.f32 %v236, %v2428
  %v2430 = vand.u32 %v2429, 4294901760
  %2431 = vmatmul.mubr.f32.gmra.mrb[0].mxu0 %v2430
  %v2432 = vpop.f32.mrb[0].mxu0
  %v2433 = vadd.f32 %v1870, %v2432
  %v2434 = vpop.f32.mrb[0].mxu0
  %2435 = vmatprep.mubr.f32.mxu0 0.0
  %v2436 = vand.u32 %v239, 4294901760
  %v2437 = vsub.f32 %v239, %v2436
  %v2438 = vand.u32 %v2437, 4294901760
  %2439 = vmatmul.mubr.f32.gmra.mrb[0].mxu0 %v2438
  %v2440 = vpop.f32.mrb[0].mxu0
  %v2441 = vadd.f32 %v1877, %v2440
  %v2442 = vpop.f32.mrb[0].mxu0
  %2443 = vmatprep.mubr.f32.mxu0 0.0
  %v2444 = vand.u32 %v242, 4294901760
  %v2445 = vsub.f32 %v242, %v2444
  %v2446 = vand.u32 %v2445, 4294901760
  %2447 = vmatmul.mubr.f32.gmra.mrb[0].mxu0 %v2446
  %v2448 = vpop.f32.mrb[0].mxu0
  %v2449 = vadd.f32 %v1884, %v2448
  %v2450 = vpop.f32.mrb[0].mxu0
  %2451 = vmatprep.mubr.f32.mxu0 0.0
  %v2452 = vand.u32 %v245, 4294901760
  %v2453 = vsub.f32 %v245, %v2452
  %v2454 = vand.u32 %v2453, 4294901760
  %2455 = vmatmul.mubr.f32.gmra.mrb[0].mxu0 %v2454
  %v2456 = vpop.f32.mrb[0].mxu0
  %v2457 = vadd.f32 %v1891, %v2456
  %v2458 = vpop.f32.mrb[0].mxu0
  %2459 = vmatprep.mubr.f32.mxu0 0.0
  %v2460 = vand.u32 %v248, 4294901760
  %v2461 = vsub.f32 %v248, %v2460
  %v2462 = vand.u32 %v2461, 4294901760
  %2463 = vmatmul.mubr.f32.gmra.mrb[0].mxu0 %v2462
  %v2464 = vpop.f32.mrb[0].mxu0
  %v2465 = vadd.f32 %v1898, %v2464
  %v2466 = vpop.f32.mrb[0].mxu0
  %2467 = vmatprep.mubr.f32.mxu0 0.0
  %v2468 = vand.u32 %v251, 4294901760
  %v2469 = vsub.f32 %v251, %v2468
  %v2470 = vand.u32 %v2469, 4294901760
  %2471 = vmatmul.mubr.f32.gmra.mrb[0].mxu0 %v2470
  %v2472 = vpop.f32.mrb[0].mxu0
  %v2473 = vadd.f32 %v1905, %v2472
  %v2474 = vpop.f32.mrb[0].mxu0
  %2475 = vmatprep.mubr.f32.mxu0 0.0
  %v2476 = vand.u32 %v254, 4294901760
  %v2477 = vsub.f32 %v254, %v2476
  %v2478 = vand.u32 %v2477, 4294901760
  %2479 = vmatmul.mubr.f32.gmra.mrb[0].mxu0 %v2478
  %v2480 = vpop.f32.mrb[0].mxu0
  %v2481 = vadd.f32 %v1912, %v2480
  %v2482 = vpop.f32.mrb[0].mxu0
  %2483 = vmatprep.mubr.f32.mxu0 0.0
  %v2484 = vand.u32 %v257, 4294901760
  %v2485 = vsub.f32 %v257, %v2484
  %v2486 = vand.u32 %v2485, 4294901760
  %2487 = vmatmul.mubr.f32.gmra.mrb[0].mxu0 %v2486
  %v2488 = vpop.f32.mrb[0].mxu0
  %v2489 = vadd.f32 %v1919, %v2488
  %v2490 = vpop.f32.mrb[0].mxu0
  %2491 = vmatprep.mubr.f32.mxu0 0.0
  %v2492 = vand.u32 %v260, 4294901760
  %v2493 = vsub.f32 %v260, %v2492
  %v2494 = vand.u32 %v2493, 4294901760
  %2495 = vmatmul.mubr.f32.gmra.mrb[0].mxu0 %v2494
  %v2496 = vpop.f32.mrb[0].mxu0
  %v2497 = vadd.f32 %v1926, %v2496
  %v2498 = vpop.f32.mrb[0].mxu0
  %2499 = vmatprep.mubr.f32.mxu0 0.0
  %v2500 = vand.u32 %v263, 4294901760
  %v2501 = vsub.f32 %v263, %v2500
  %v2502 = vand.u32 %v2501, 4294901760
  %2503 = vmatmul.mubr.f32.gmra.mrb[0].mxu0 %v2502
  %v2504 = vpop.f32.mrb[0].mxu0
  %v2505 = vadd.f32 %v1933, %v2504
  %v2506 = vpop.f32.mrb[0].mxu0
  %2507 = vmatprep.mubr.f32.mxu0 0.0
  %v2508 = vand.u32 %v266, 4294901760
  %v2509 = vsub.f32 %v266, %v2508
  %v2510 = vand.u32 %v2509, 4294901760
  %2511 = vmatmul.mubr.f32.gmra.mrb[0].mxu0 %v2510
  %v2512 = vpop.f32.mrb[0].mxu0
  %v2513 = vadd.f32 %v1940, %v2512
  %v2514 = vpop.f32.mrb[0].mxu0
  %2515 = vmatprep.mubr.f32.mxu0 0.0
  %v2516 = vand.u32 %v269, 4294901760
  %v2517 = vsub.f32 %v269, %v2516
  %v2518 = vand.u32 %v2517, 4294901760
  %2519 = vmatmul.mubr.f32.gmra.mrb[0].mxu0 %v2518
  %v2520 = vpop.f32.mrb[0].mxu0
  %v2521 = vadd.f32 %v1947, %v2520
  %v2522 = vpop.f32.mrb[0].mxu0
  %2523 = vmatprep.mubr.f32.mxu0 0.0
  %v2524 = vand.u32 %v272, 4294901760
  %v2525 = vsub.f32 %v272, %v2524
  %v2526 = vand.u32 %v2525, 4294901760
  %2527 = vmatmul.mubr.f32.gmra.mrb[0].mxu0 %v2526
  %v2528 = vpop.f32.mrb[0].mxu0
  %v2529 = vadd.f32 %v1954, %v2528
  %v2530 = vpop.f32.mrb[0].mxu0
  %2531 = vmatprep.mubr.f32.mxu0 0.0
  %v2532 = vand.u32 %v275, 4294901760
  %v2533 = vsub.f32 %v275, %v2532
  %v2534 = vand.u32 %v2533, 4294901760
  %2535 = vmatmul.mubr.f32.gmra.mrb[0].mxu0 %v2534
  %v2536 = vpop.f32.mrb[0].mxu0
  %v2537 = vadd.f32 %v1961, %v2536
  %v2538 = vpop.f32.mrb[0].mxu0
  %2539 = vmatprep.mubr.f32.mxu0 0.0
  %v2540 = vand.u32 %v278, 4294901760
  %v2541 = vsub.f32 %v278, %v2540
  %v2542 = vand.u32 %v2541, 4294901760
  %2543 = vmatmul.mubr.f32.gmra.mrb[0].mxu0 %v2542
  %v2544 = vpop.f32.mrb[0].mxu0
  %v2545 = vadd.f32 %v1968, %v2544
  %v2546 = vpop.f32.mrb[0].mxu0
  %2547 = vmatprep.mubr.f32.mxu0 0.0
  %v2548 = vand.u32 %v281, 4294901760
  %v2549 = vsub.f32 %v281, %v2548
  %v2550 = vand.u32 %v2549, 4294901760
  %2551 = vmatmul.mubr.f32.gmra.mrb[0].mxu0 %v2550
  %v2552 = vpop.f32.mrb[0].mxu0
  %v2553 = vadd.f32 %v1975, %v2552
  %v2554 = vpop.f32.mrb[0].mxu0
  %2555 = vmatprep.mubr.f32.mxu0 0.0
  %v2556 = vand.u32 %v284, 4294901760
  %v2557 = vsub.f32 %v284, %v2556
  %v2558 = vand.u32 %v2557, 4294901760
  %2559 = vmatmul.mubr.f32.gmra.mrb[0].mxu0 %v2558
  %v2560 = vpop.f32.mrb[0].mxu0
  %v2561 = vadd.f32 %v1982, %v2560
  %v2562 = vpop.f32.mrb[0].mxu0
  %2563 = vmatprep.mubr.f32.mxu0 0.0
  %v2564 = vand.u32 %v287, 4294901760
  %v2565 = vsub.f32 %v287, %v2564
  %v2566 = vand.u32 %v2565, 4294901760
  %2567 = vmatmul.mubr.f32.gmra.mrb[0].mxu0 %v2566
  %v2568 = vpop.f32.mrb[0].mxu0
  %v2569 = vadd.f32 %v1989, %v2568
  %v2570 = vpop.f32.mrb[0].mxu0
  %2571 = vmatprep.mubr.f32.mxu0 0.0
  %v2572 = vand.u32 %v290, 4294901760
  %v2573 = vsub.f32 %v290, %v2572
  %v2574 = vand.u32 %v2573, 4294901760
  %2575 = vmatmul.mubr.f32.gmra.mrb[0].mxu0 %v2574
  %v2576 = vpop.f32.mrb[0].mxu0
  %v2577 = vadd.f32 %v1996, %v2576
  %v2578 = vpop.f32.mrb[0].mxu0
  %2579 = vmatprep.mubr.f32.mxu0 0.0
  %v2580 = vand.u32 %v293, 4294901760
  %v2581 = vsub.f32 %v293, %v2580
  %v2582 = vand.u32 %v2581, 4294901760
  %2583 = vmatmul.mubr.f32.gmra.mrb[0].mxu0 %v2582
  %v2584 = vpop.f32.mrb[0].mxu0
  %v2585 = vadd.f32 %v2003, %v2584
  %v2586 = vpop.f32.mrb[0].mxu0
  %2587 = vdwg.mxu0
  %2588 = vmatprep.subr.mxu0 0.0
  %v2589 = vand.u32 %v90, 4294901760
  %v2590 = vsub.f32 %v90, %v2589
  %v2591 = vand.u32 %v2590, 4294901760
  %2592 = vmatpush1.msra.mxu0 %v2591
  %2593 = vmatprep.subr.mxu0 0.0
  %v2594 = vand.u32 %v91, 4294901760
  %v2595 = vsub.f32 %v91, %v2594
  %v2596 = vand.u32 %v2595, 4294901760
  %2597 = vmatpush1.msra.mxu0 %v2596
  %2598 = vmatprep.subr.mxu0 0.0
  %v2599 = vand.u32 %v92, 4294901760
  %v2600 = vsub.f32 %v92, %v2599
  %v2601 = vand.u32 %v2600, 4294901760
  %2602 = vmatpush1.msra.mxu0 %v2601
  %2603 = vmatprep.subr.mxu0 0.0
  %v2604 = vand.u32 %v93, 4294901760
  %v2605 = vsub.f32 %v93, %v2604
  %v2606 = vand.u32 %v2605, 4294901760
  %2607 = vmatpush1.msra.mxu0 %v2606
  %2608 = vmatprep.subr.mxu0 0.0
  %v2609 = vand.u32 %v297, 4294901760
  %v2610 = vsub.f32 %v297, %v2609
  %v2611 = vand.u32 %v2610, 4294901760
  %2612 = vmatpush1.msra.mxu0 %v2611
  %2613 = vmatprep.subr.mxu0 0.0
  %2614 = vmatpush1.msra.mxu0 0.0
  %2615 = vmatprep.subr.mxu0 0.0
  %2616 = vmatpush1.msra.mxu0 0.0
  %2617 = vmatprep.subr.mxu0 0.0
  %2618 = vmatpush1.msra.mxu0 0.0
  %2619 = vmatprep.subr.mxu0 0.0
  %2620 = vmatpush1.msra.mxu0 0.0
  %2621 = vmatprep.subr.mxu0 0.0
  %2622 = vmatpush1.msra.mxu0 0.0
  %2623 = vmatprep.subr.mxu0 0.0
  %2624 = vmatpush1.msra.mxu0 0.0
  %2625 = vmatprep.subr.mxu0 0.0
  %2626 = vmatpush1.msra.mxu0 0.0
  %2627 = vmatprep.subr.mxu0 0.0
  %2628 = vmatpush1.msra.mxu0 0.0
  %2629 = vmatprep.subr.mxu0 0.0
  %2630 = vmatpush1.msra.mxu0 0.0
  %2631 = vmatprep.subr.mxu0 0.0
  %2632 = vmatpush1.msra.mxu0 0.0
  %2633 = vmatprep.subr.mxu0 0.0
  %2634 = vmatpush1.msra.mxu0 0.0
  %2635 = vmatprep.subr.mxu0 0.0
  %2636 = vmatpush1.msra.mxu0 0.0
  %2637 = vmatprep.subr.mxu0 0.0
  %2638 = vmatpush1.msra.mxu0 0.0
  %2639 = vmatprep.subr.mxu0 0.0
  %2640 = vmatpush1.msra.mxu0 0.0
  %2641 = vmatprep.subr.mxu0 0.0
  %2642 = vmatpush1.msra.mxu0 0.0
  %2643 = vmatprep.subr.mxu0 0.0
  %2644 = vmatpush1.msra.mxu0 0.0
  %2645 = vmatprep.subr.mxu0 0.0
  %2646 = vmatpush1.msra.mxu0 0.0
  %2647 = vmatprep.subr.mxu0 0.0
  %2648 = vmatpush1.msra.mxu0 0.0
  %2649 = vmatprep.subr.mxu0 0.0
  %2650 = vmatpush1.msra.mxu0 0.0
  %2651 = vmatprep.subr.mxu0 0.0
  %2652 = vmatpush1.msra.mxu0 0.0
  %2653 = vmatprep.subr.mxu0 0.0
  %2654 = vmatpush1.msra.mxu0 0.0
  %2655 = vmatprep.subr.mxu0 0.0
  %2656 = vmatpush1.msra.mxu0 0.0
  %2657 = vmatprep.subr.mxu0 0.0
  %2658 = vmatpush1.msra.mxu0 0.0
  %2659 = vmatprep.subr.mxu0 0.0
  %2660 = vmatpush1.msra.mxu0 0.0
  %2661 = vmatprep.subr.mxu0 0.0
  %2662 = vmatpush1.msra.mxu0 0.0
  %2663 = vmatprep.subr.mxu0 0.0
  %2664 = vmatpush1.msra.mxu0 0.0
  %2665 = vmatprep.subr.mxu0 0.0
  %2666 = vmatpush1.msra.mxu0 0.0
  %2667 = vmatprep.mubr.f32.mxu0 0.0
  %v2668 = vand.u32 %v104, 4294901760
  %2669 = vmatmul.mubr.f32.gmra.mrb[0].mxu0 %v2668
  %v2670 = vpop.f32.mrb[0].mxu0
  %v2671 = vadd.f32 %v2081, %v2670
  %v2672 = vpop.f32.mrb[0].mxu0
  %2673 = vmatprep.mubr.f32.mxu0 0.0
  %v2674 = vand.u32 %v107, 4294901760
  %2675 = vmatmul.mubr.f32.gmra.mrb[0].mxu0 %v2674
  %v2676 = vpop.f32.mrb[0].mxu0
  %v2677 = vadd.f32 %v2089, %v2676
  %v2678 = vpop.f32.mrb[0].mxu0
  %2679 = vmatprep.mubr.f32.mxu0 0.0
  %v2680 = vand.u32 %v110, 4294901760
  %2681 = vmatmul.mubr.f32.gmra.mrb[0].mxu0 %v2680
  %v2682 = vpop.f32.mrb[0].mxu0
  %v2683 = vadd.f32 %v2097, %v2682
  %v2684 = vpop.f32.mrb[0].mxu0
  %2685 = vmatprep.mubr.f32.mxu0 0.0
  %v2686 = vand.u32 %v113, 4294901760
  %2687 = vmatmul.mubr.f32.gmra.mrb[0].mxu0 %v2686
  %v2688 = vpop.f32.mrb[0].mxu0
  %v2689 = vadd.f32 %v2105, %v2688
  %v2690 = vpop.f32.mrb[0].mxu0
  %2691 = vmatprep.mubr.f32.mxu0 0.0
  %v2692 = vand.u32 %v116, 4294901760
  %2693 = vmatmul.mubr.f32.gmra.mrb[0].mxu0 %v2692
  %v2694 = vpop.f32.mrb[0].mxu0
  %v2695 = vadd.f32 %v2113, %v2694
  %v2696 = vpop.f32.mrb[0].mxu0
  %2697 = vmatprep.mubr.f32.mxu0 0.0
  %v2698 = vand.u32 %v119, 4294901760
  %2699 = vmatmul.mubr.f32.gmra.mrb[0].mxu0 %v2698
  %v2700 = vpop.f32.mrb[0].mxu0
  %v2701 = vadd.f32 %v2121, %v2700
  %v2702 = vpop.f32.mrb[0].mxu0
  %2703 = vmatprep.mubr.f32.mxu0 0.0
  %v2704 = vand.u32 %v122, 4294901760
  %2705 = vmatmul.mubr.f32.gmra.mrb[0].mxu0 %v2704
  %v2706 = vpop.f32.mrb[0].mxu0
  %v2707 = vadd.f32 %v2129, %v2706
  %v2708 = vpop.f32.mrb[0].mxu0
  %2709 = vmatprep.mubr.f32.mxu0 0.0
  %v2710 = vand.u32 %v125, 4294901760
  %2711 = vmatmul.mubr.f32.gmra.mrb[0].mxu0 %v2710
  %v2712 = vpop.f32.mrb[0].mxu0
  %v2713 = vadd.f32 %v2137, %v2712
  %v2714 = vpop.f32.mrb[0].mxu0
  %2715 = vmatprep.mubr.f32.mxu0 0.0
  %v2716 = vand.u32 %v128, 4294901760
  %2717 = vmatmul.mubr.f32.gmra.mrb[0].mxu0 %v2716
  %v2718 = vpop.f32.mrb[0].mxu0
  %v2719 = vadd.f32 %v2145, %v2718
  %v2720 = vpop.f32.mrb[0].mxu0
  %2721 = vmatprep.mubr.f32.mxu0 0.0
  %v2722 = vand.u32 %v131, 4294901760
  %2723 = vmatmul.mubr.f32.gmra.mrb[0].mxu0 %v2722
  %v2724 = vpop.f32.mrb[0].mxu0
  %v2725 = vadd.f32 %v2153, %v2724
  %v2726 = vpop.f32.mrb[0].mxu0
  %2727 = vmatprep.mubr.f32.mxu0 0.0
  %v2728 = vand.u32 %v134, 4294901760
  %2729 = vmatmul.mubr.f32.gmra.mrb[0].mxu0 %v2728
  %v2730 = vpop.f32.mrb[0].mxu0
  %v2731 = vadd.f32 %v2161, %v2730
  %v2732 = vpop.f32.mrb[0].mxu0
  %2733 = vmatprep.mubr.f32.mxu0 0.0
  %v2734 = vand.u32 %v137, 4294901760
  %2735 = vmatmul.mubr.f32.gmra.mrb[0].mxu0 %v2734
  %v2736 = vpop.f32.mrb[0].mxu0
  %v2737 = vadd.f32 %v2169, %v2736
  %v2738 = vpop.f32.mrb[0].mxu0
  %2739 = vmatprep.mubr.f32.mxu0 0.0
  %v2740 = vand.u32 %v140, 4294901760
  %2741 = vmatmul.mubr.f32.gmra.mrb[0].mxu0 %v2740
  %v2742 = vpop.f32.mrb[0].mxu0
  %v2743 = vadd.f32 %v2177, %v2742
  %v2744 = vpop.f32.mrb[0].mxu0
  %2745 = vmatprep.mubr.f32.mxu0 0.0
  %v2746 = vand.u32 %v143, 4294901760
  %2747 = vmatmul.mubr.f32.gmra.mrb[0].mxu0 %v2746
  %v2748 = vpop.f32.mrb[0].mxu0
  %v2749 = vadd.f32 %v2185, %v2748
  %v2750 = vpop.f32.mrb[0].mxu0
  %2751 = vmatprep.mubr.f32.mxu0 0.0
  %v2752 = vand.u32 %v146, 4294901760
  %2753 = vmatmul.mubr.f32.gmra.mrb[0].mxu0 %v2752
  %v2754 = vpop.f32.mrb[0].mxu0
  %v2755 = vadd.f32 %v2193, %v2754
  %v2756 = vpop.f32.mrb[0].mxu0
  %2757 = vmatprep.mubr.f32.mxu0 0.0
  %v2758 = vand.u32 %v149, 4294901760
  %2759 = vmatmul.mubr.f32.gmra.mrb[0].mxu0 %v2758
  %v2760 = vpop.f32.mrb[0].mxu0
  %v2761 = vadd.f32 %v2201, %v2760
  %v2762 = vpop.f32.mrb[0].mxu0
  %2763 = vmatprep.mubr.f32.mxu0 0.0
  %v2764 = vand.u32 %v152, 4294901760
  %2765 = vmatmul.mubr.f32.gmra.mrb[0].mxu0 %v2764
  %v2766 = vpop.f32.mrb[0].mxu0
  %v2767 = vadd.f32 %v2209, %v2766
  %v2768 = vpop.f32.mrb[0].mxu0
  %2769 = vmatprep.mubr.f32.mxu0 0.0
  %v2770 = vand.u32 %v155, 4294901760
  %2771 = vmatmul.mubr.f32.gmra.mrb[0].mxu0 %v2770
  %v2772 = vpop.f32.mrb[0].mxu0
  %v2773 = vadd.f32 %v2217, %v2772
  %v2774 = vpop.f32.mrb[0].mxu0
  %2775 = vmatprep.mubr.f32.mxu0 0.0
  %v2776 = vand.u32 %v158, 4294901760
  %2777 = vmatmul.mubr.f32.gmra.mrb[0].mxu0 %v2776
  %v2778 = vpop.f32.mrb[0].mxu0
  %v2779 = vadd.f32 %v2225, %v2778
  %v2780 = vpop.f32.mrb[0].mxu0
  %2781 = vmatprep.mubr.f32.mxu0 0.0
  %v2782 = vand.u32 %v161, 4294901760
  %2783 = vmatmul.mubr.f32.gmra.mrb[0].mxu0 %v2782
  %v2784 = vpop.f32.mrb[0].mxu0
  %v2785 = vadd.f32 %v2233, %v2784
  %v2786 = vpop.f32.mrb[0].mxu0
  %2787 = vmatprep.mubr.f32.mxu0 0.0
  %v2788 = vand.u32 %v164, 4294901760
  %2789 = vmatmul.mubr.f32.gmra.mrb[0].mxu0 %v2788
  %v2790 = vpop.f32.mrb[0].mxu0
  %v2791 = vadd.f32 %v2241, %v2790
  %v2792 = vpop.f32.mrb[0].mxu0
  %2793 = vmatprep.mubr.f32.mxu0 0.0
  %v2794 = vand.u32 %v167, 4294901760
  %2795 = vmatmul.mubr.f32.gmra.mrb[0].mxu0 %v2794
  %v2796 = vpop.f32.mrb[0].mxu0
  %v2797 = vadd.f32 %v2249, %v2796
  %v2798 = vpop.f32.mrb[0].mxu0
  %2799 = vmatprep.mubr.f32.mxu0 0.0
  %v2800 = vand.u32 %v170, 4294901760
  %2801 = vmatmul.mubr.f32.gmra.mrb[0].mxu0 %v2800
  %v2802 = vpop.f32.mrb[0].mxu0
  %v2803 = vadd.f32 %v2257, %v2802
  %v2804 = vpop.f32.mrb[0].mxu0
  %2805 = vmatprep.mubr.f32.mxu0 0.0
  %v2806 = vand.u32 %v173, 4294901760
  %2807 = vmatmul.mubr.f32.gmra.mrb[0].mxu0 %v2806
  %v2808 = vpop.f32.mrb[0].mxu0
  %v2809 = vadd.f32 %v2265, %v2808
  %v2810 = vpop.f32.mrb[0].mxu0
  %2811 = vmatprep.mubr.f32.mxu0 0.0
  %v2812 = vand.u32 %v176, 4294901760
  %2813 = vmatmul.mubr.f32.gmra.mrb[0].mxu0 %v2812
  %v2814 = vpop.f32.mrb[0].mxu0
  %v2815 = vadd.f32 %v2273, %v2814
  %v2816 = vpop.f32.mrb[0].mxu0
  %2817 = vmatprep.mubr.f32.mxu0 0.0
  %v2818 = vand.u32 %v179, 4294901760
  %2819 = vmatmul.mubr.f32.gmra.mrb[0].mxu0 %v2818
  %v2820 = vpop.f32.mrb[0].mxu0
  %v2821 = vadd.f32 %v2281, %v2820
  %v2822 = vpop.f32.mrb[0].mxu0
  %2823 = vmatprep.mubr.f32.mxu0 0.0
  %v2824 = vand.u32 %v182, 4294901760
  %2825 = vmatmul.mubr.f32.gmra.mrb[0].mxu0 %v2824
  %v2826 = vpop.f32.mrb[0].mxu0
  %v2827 = vadd.f32 %v2289, %v2826
  %v2828 = vpop.f32.mrb[0].mxu0
  %2829 = vmatprep.mubr.f32.mxu0 0.0
  %v2830 = vand.u32 %v185, 4294901760
  %2831 = vmatmul.mubr.f32.gmra.mrb[0].mxu0 %v2830
  %v2832 = vpop.f32.mrb[0].mxu0
  %v2833 = vadd.f32 %v2297, %v2832
  %v2834 = vpop.f32.mrb[0].mxu0
  %2835 = vmatprep.mubr.f32.mxu0 0.0
  %v2836 = vand.u32 %v188, 4294901760
  %2837 = vmatmul.mubr.f32.gmra.mrb[0].mxu0 %v2836
  %v2838 = vpop.f32.mrb[0].mxu0
  %v2839 = vadd.f32 %v2305, %v2838
  %v2840 = vpop.f32.mrb[0].mxu0
  %2841 = vmatprep.mubr.f32.mxu0 0.0
  %v2842 = vand.u32 %v191, 4294901760
  %2843 = vmatmul.mubr.f32.gmra.mrb[0].mxu0 %v2842
  %v2844 = vpop.f32.mrb[0].mxu0
  %v2845 = vadd.f32 %v2313, %v2844
  %v2846 = vpop.f32.mrb[0].mxu0
  %2847 = vmatprep.mubr.f32.mxu0 0.0
  %v2848 = vand.u32 %v194, 4294901760
  %2849 = vmatmul.mubr.f32.gmra.mrb[0].mxu0 %v2848
  %v2850 = vpop.f32.mrb[0].mxu0
  %v2851 = vadd.f32 %v2321, %v2850
  %v2852 = vpop.f32.mrb[0].mxu0
  %2853 = vmatprep.mubr.f32.mxu0 0.0
  %v2854 = vand.u32 %v197, 4294901760
  %2855 = vmatmul.mubr.f32.gmra.mrb[0].mxu0 %v2854
  %v2856 = vpop.f32.mrb[0].mxu0
  %v2857 = vadd.f32 %v2329, %v2856
  %v2858 = vpop.f32.mrb[0].mxu0
  %2859 = vmatprep.mubr.f32.mxu0 0.0
  %v2860 = vand.u32 %v200, 4294901760
  %2861 = vmatmul.mubr.f32.gmra.mrb[0].mxu0 %v2860
  %v2862 = vpop.f32.mrb[0].mxu0
  %v2863 = vadd.f32 %v2337, %v2862
  %v2864 = vpop.f32.mrb[0].mxu0
  %2865 = vmatprep.mubr.f32.mxu0 0.0
  %v2866 = vand.u32 %v203, 4294901760
  %2867 = vmatmul.mubr.f32.gmra.mrb[0].mxu0 %v2866
  %v2868 = vpop.f32.mrb[0].mxu0
  %v2869 = vadd.f32 %v2345, %v2868
  %v2870 = vpop.f32.mrb[0].mxu0
  %2871 = vmatprep.mubr.f32.mxu0 0.0
  %v2872 = vand.u32 %v206, 4294901760
  %2873 = vmatmul.mubr.f32.gmra.mrb[0].mxu0 %v2872
  %v2874 = vpop.f32.mrb[0].mxu0
  %v2875 = vadd.f32 %v2353, %v2874
  %v2876 = vpop.f32.mrb[0].mxu0
  %2877 = vmatprep.mubr.f32.mxu0 0.0
  %v2878 = vand.u32 %v209, 4294901760
  %2879 = vmatmul.mubr.f32.gmra.mrb[0].mxu0 %v2878
  %v2880 = vpop.f32.mrb[0].mxu0
  %v2881 = vadd.f32 %v2361, %v2880
  %v2882 = vpop.f32.mrb[0].mxu0
  %2883 = vmatprep.mubr.f32.mxu0 0.0
  %v2884 = vand.u32 %v212, 4294901760
  %2885 = vmatmul.mubr.f32.gmra.mrb[0].mxu0 %v2884
  %v2886 = vpop.f32.mrb[0].mxu0
  %v2887 = vadd.f32 %v2369, %v2886
  %v2888 = vpop.f32.mrb[0].mxu0
  %2889 = vmatprep.mubr.f32.mxu0 0.0
  %v2890 = vand.u32 %v215, 4294901760
  %2891 = vmatmul.mubr.f32.gmra.mrb[0].mxu0 %v2890
  %v2892 = vpop.f32.mrb[0].mxu0
  %v2893 = vadd.f32 %v2377, %v2892
  %v2894 = vpop.f32.mrb[0].mxu0
  %2895 = vmatprep.mubr.f32.mxu0 0.0
  %v2896 = vand.u32 %v218, 4294901760
  %2897 = vmatmul.mubr.f32.gmra.mrb[0].mxu0 %v2896
  %v2898 = vpop.f32.mrb[0].mxu0
  %v2899 = vadd.f32 %v2385, %v2898
  %v2900 = vpop.f32.mrb[0].mxu0
  %2901 = vmatprep.mubr.f32.mxu0 0.0
  %v2902 = vand.u32 %v221, 4294901760
  %2903 = vmatmul.mubr.f32.gmra.mrb[0].mxu0 %v2902
  %v2904 = vpop.f32.mrb[0].mxu0
  %v2905 = vadd.f32 %v2393, %v2904
  %v2906 = vpop.f32.mrb[0].mxu0
  %2907 = vmatprep.mubr.f32.mxu0 0.0
  %v2908 = vand.u32 %v224, 4294901760
  %2909 = vmatmul.mubr.f32.gmra.mrb[0].mxu0 %v2908
  %v2910 = vpop.f32.mrb[0].mxu0
  %v2911 = vadd.f32 %v2401, %v2910
  %v2912 = vpop.f32.mrb[0].mxu0
  %2913 = vmatprep.mubr.f32.mxu0 0.0
  %v2914 = vand.u32 %v227, 4294901760
  %2915 = vmatmul.mubr.f32.gmra.mrb[0].mxu0 %v2914
  %v2916 = vpop.f32.mrb[0].mxu0
  %v2917 = vadd.f32 %v2409, %v2916
  %v2918 = vpop.f32.mrb[0].mxu0
  %2919 = vmatprep.mubr.f32.mxu0 0.0
  %v2920 = vand.u32 %v230, 4294901760
  %2921 = vmatmul.mubr.f32.gmra.mrb[0].mxu0 %v2920
  %v2922 = vpop.f32.mrb[0].mxu0
  %v2923 = vadd.f32 %v2417, %v2922
  %v2924 = vpop.f32.mrb[0].mxu0
  %2925 = vmatprep.mubr.f32.mxu0 0.0
  %v2926 = vand.u32 %v233, 4294901760
  %2927 = vmatmul.mubr.f32.gmra.mrb[0].mxu0 %v2926
  %v2928 = vpop.f32.mrb[0].mxu0
  %v2929 = vadd.f32 %v2425, %v2928
  %v2930 = vpop.f32.mrb[0].mxu0
  %2931 = vmatprep.mubr.f32.mxu0 0.0
  %v2932 = vand.u32 %v236, 4294901760
  %2933 = vmatmul.mubr.f32.gmra.mrb[0].mxu0 %v2932
  %v2934 = vpop.f32.mrb[0].mxu0
  %v2935 = vadd.f32 %v2433, %v2934
  %v2936 = vpop.f32.mrb[0].mxu0
  %2937 = vmatprep.mubr.f32.mxu0 0.0
  %v2938 = vand.u32 %v239, 4294901760
  %2939 = vmatmul.mubr.f32.gmra.mrb[0].mxu0 %v2938
  %v2940 = vpop.f32.mrb[0].mxu0
  %v2941 = vadd.f32 %v2441, %v2940
  %v2942 = vpop.f32.mrb[0].mxu0
  %2943 = vmatprep.mubr.f32.mxu0 0.0
  %v2944 = vand.u32 %v242, 4294901760
  %2945 = vmatmul.mubr.f32.gmra.mrb[0].mxu0 %v2944
  %v2946 = vpop.f32.mrb[0].mxu0
  %v2947 = vadd.f32 %v2449, %v2946
  %v2948 = vpop.f32.mrb[0].mxu0
  %2949 = vmatprep.mubr.f32.mxu0 0.0
  %v2950 = vand.u32 %v245, 4294901760
  %2951 = vmatmul.mubr.f32.gmra.mrb[0].mxu0 %v2950
  %v2952 = vpop.f32.mrb[0].mxu0
  %v2953 = vadd.f32 %v2457, %v2952
  %v2954 = vpop.f32.mrb[0].mxu0
  %2955 = vmatprep.mubr.f32.mxu0 0.0
  %v2956 = vand.u32 %v248, 4294901760
  %2957 = vmatmul.mubr.f32.gmra.mrb[0].mxu0 %v2956
  %v2958 = vpop.f32.mrb[0].mxu0
  %v2959 = vadd.f32 %v2465, %v2958
  %v2960 = vpop.f32.mrb[0].mxu0
  %2961 = vmatprep.mubr.f32.mxu0 0.0
  %v2962 = vand.u32 %v251, 4294901760
  %2963 = vmatmul.mubr.f32.gmra.mrb[0].mxu0 %v2962
  %v2964 = vpop.f32.mrb[0].mxu0
  %v2965 = vadd.f32 %v2473, %v2964
  %v2966 = vpop.f32.mrb[0].mxu0
  %2967 = vmatprep.mubr.f32.mxu0 0.0
  %v2968 = vand.u32 %v254, 4294901760
  %2969 = vmatmul.mubr.f32.gmra.mrb[0].mxu0 %v2968
  %v2970 = vpop.f32.mrb[0].mxu0
  %v2971 = vadd.f32 %v2481, %v2970
  %v2972 = vpop.f32.mrb[0].mxu0
  %2973 = vmatprep.mubr.f32.mxu0 0.0
  %v2974 = vand.u32 %v257, 4294901760
  %2975 = vmatmul.mubr.f32.gmra.mrb[0].mxu0 %v2974
  %v2976 = vpop.f32.mrb[0].mxu0
  %v2977 = vadd.f32 %v2489, %v2976
  %v2978 = vpop.f32.mrb[0].mxu0
  %2979 = vmatprep.mubr.f32.mxu0 0.0
  %v2980 = vand.u32 %v260, 4294901760
  %2981 = vmatmul.mubr.f32.gmra.mrb[0].mxu0 %v2980
  %v2982 = vpop.f32.mrb[0].mxu0
  %v2983 = vadd.f32 %v2497, %v2982
  %v2984 = vpop.f32.mrb[0].mxu0
  %2985 = vmatprep.mubr.f32.mxu0 0.0
  %v2986 = vand.u32 %v263, 4294901760
  %2987 = vmatmul.mubr.f32.gmra.mrb[0].mxu0 %v2986
  %v2988 = vpop.f32.mrb[0].mxu0
  %v2989 = vadd.f32 %v2505, %v2988
  %v2990 = vpop.f32.mrb[0].mxu0
  %2991 = vmatprep.mubr.f32.mxu0 0.0
  %v2992 = vand.u32 %v266, 4294901760
  %2993 = vmatmul.mubr.f32.gmra.mrb[0].mxu0 %v2992
  %v2994 = vpop.f32.mrb[0].mxu0
  %v2995 = vadd.f32 %v2513, %v2994
  %v2996 = vpop.f32.mrb[0].mxu0
  %2997 = vmatprep.mubr.f32.mxu0 0.0
  %v2998 = vand.u32 %v269, 4294901760
  %2999 = vmatmul.mubr.f32.gmra.mrb[0].mxu0 %v2998
  %v3000 = vpop.f32.mrb[0].mxu0
  %v3001 = vadd.f32 %v2521, %v3000
  %v3002 = vpop.f32.mrb[0].mxu0
  %3003 = vmatprep.mubr.f32.mxu0 0.0
  %v3004 = vand.u32 %v272, 4294901760
  %3005 = vmatmul.mubr.f32.gmra.mrb[0].mxu0 %v3004
  %v3006 = vpop.f32.mrb[0].mxu0
  %v3007 = vadd.f32 %v2529, %v3006
  %v3008 = vpop.f32.mrb[0].mxu0
  %3009 = vmatprep.mubr.f32.mxu0 0.0
  %v3010 = vand.u32 %v275, 4294901760
  %3011 = vmatmul.mubr.f32.gmra.mrb[0].mxu0 %v3010
  %v3012 = vpop.f32.mrb[0].mxu0
  %v3013 = vadd.f32 %v2537, %v3012
  %v3014 = vpop.f32.mrb[0].mxu0
  %3015 = vmatprep.mubr.f32.mxu0 0.0
  %v3016 = vand.u32 %v278, 4294901760
  %3017 = vmatmul.mubr.f32.gmra.mrb[0].mxu0 %v3016
  %v3018 = vpop.f32.mrb[0].mxu0
  %v3019 = vadd.f32 %v2545, %v3018
  %v3020 = vpop.f32.mrb[0].mxu0
  %3021 = vmatprep.mubr.f32.mxu0 0.0
  %v3022 = vand.u32 %v281, 4294901760
  %3023 = vmatmul.mubr.f32.gmra.mrb[0].mxu0 %v3022
  %v3024 = vpop.f32.mrb[0].mxu0
  %v3025 = vadd.f32 %v2553, %v3024
  %v3026 = vpop.f32.mrb[0].mxu0
  %3027 = vmatprep.mubr.f32.mxu0 0.0
  %v3028 = vand.u32 %v284, 4294901760
  %3029 = vmatmul.mubr.f32.gmra.mrb[0].mxu0 %v3028
  %v3030 = vpop.f32.mrb[0].mxu0
  %v3031 = vadd.f32 %v2561, %v3030
  %v3032 = vpop.f32.mrb[0].mxu0
  %3033 = vmatprep.mubr.f32.mxu0 0.0
  %v3034 = vand.u32 %v287, 4294901760
  %3035 = vmatmul.mubr.f32.gmra.mrb[0].mxu0 %v3034
  %v3036 = vpop.f32.mrb[0].mxu0
  %v3037 = vadd.f32 %v2569, %v3036
  %v3038 = vpop.f32.mrb[0].mxu0
  %3039 = vmatprep.mubr.f32.mxu0 0.0
  %v3040 = vand.u32 %v290, 4294901760
  %3041 = vmatmul.mubr.f32.gmra.mrb[0].mxu0 %v3040
  %v3042 = vpop.f32.mrb[0].mxu0
  %v3043 = vadd.f32 %v2577, %v3042
  %v3044 = vpop.f32.mrb[0].mxu0
  %3045 = vmatprep.mubr.f32.mxu0 0.0
  %v3046 = vand.u32 %v293, 4294901760
  %3047 = vmatmul.mubr.f32.gmra.mrb[0].mxu0 %v3046
  %v3048 = vpop.f32.mrb[0].mxu0
  %v3049 = vadd.f32 %v2585, %v3048
  %v3050 = vpop.f32.mrb[0].mxu0
  %3051 = vdwg.mxu0
  %3052 = vmatprep.subr.mxu0 0.0
  %v3053 = vand.u32 %v90, 4294901760
  %3054 = vmatpush1.msra.mxu0 %v3053
  %3055 = vmatprep.subr.mxu0 0.0
  %v3056 = vand.u32 %v91, 4294901760
  %3057 = vmatpush1.msra.mxu0 %v3056
  %3058 = vmatprep.subr.mxu0 0.0
  %v3059 = vand.u32 %v92, 4294901760
  %3060 = vmatpush1.msra.mxu0 %v3059
  %3061 = vmatprep.subr.mxu0 0.0
  %v3062 = vand.u32 %v93, 4294901760
  %3063 = vmatpush1.msra.mxu0 %v3062
  %3064 = vmatprep.subr.mxu0 0.0
  %v3065 = vand.u32 %v297, 4294901760
  %3066 = vmatpush1.msra.mxu0 %v3065
  %3067 = vmatprep.subr.mxu0 0.0
  %3068 = vmatpush1.msra.mxu0 0.0
  %3069 = vmatprep.subr.mxu0 0.0
  %3070 = vmatpush1.msra.mxu0 0.0
  %3071 = vmatprep.subr.mxu0 0.0
  %3072 = vmatpush1.msra.mxu0 0.0
  %3073 = vmatprep.subr.mxu0 0.0
  %3074 = vmatpush1.msra.mxu0 0.0
  %3075 = vmatprep.subr.mxu0 0.0
  %3076 = vmatpush1.msra.mxu0 0.0
  %3077 = vmatprep.subr.mxu0 0.0
  %3078 = vmatpush1.msra.mxu0 0.0
  %3079 = vmatprep.subr.mxu0 0.0
  %3080 = vmatpush1.msra.mxu0 0.0
  %3081 = vmatprep.subr.mxu0 0.0
  %3082 = vmatpush1.msra.mxu0 0.0
  %3083 = vmatprep.subr.mxu0 0.0
  %3084 = vmatpush1.msra.mxu0 0.0
  %3085 = vmatprep.subr.mxu0 0.0
  %3086 = vmatpush1.msra.mxu0 0.0
  %3087 = vmatprep.subr.mxu0 0.0
  %3088 = vmatpush1.msra.mxu0 0.0
  %3089 = vmatprep.subr.mxu0 0.0
  %3090 = vmatpush1.msra.mxu0 0.0
  %3091 = vmatprep.subr.mxu0 0.0
  %3092 = vmatpush1.msra.mxu0 0.0
  %3093 = vmatprep.subr.mxu0 0.0
  %3094 = vmatpush1.msra.mxu0 0.0
  %3095 = vmatprep.subr.mxu0 0.0
  %3096 = vmatpush1.msra.mxu0 0.0
  %3097 = vmatprep.subr.mxu0 0.0
  %3098 = vmatpush1.msra.mxu0 0.0
  %3099 = vmatprep.subr.mxu0 0.0
  %3100 = vmatpush1.msra.mxu0 0.0
  %3101 = vmatprep.subr.mxu0 0.0
  %3102 = vmatpush1.msra.mxu0 0.0
  %3103 = vmatprep.subr.mxu0 0.0
  %3104 = vmatpush1.msra.mxu0 0.0
  %3105 = vmatprep.subr.mxu0 0.0
  %3106 = vmatpush1.msra.mxu0 0.0
  %3107 = vmatprep.subr.mxu0 0.0
  %3108 = vmatpush1.msra.mxu0 0.0
  %3109 = vmatprep.subr.mxu0 0.0
  %3110 = vmatpush1.msra.mxu0 0.0
  %3111 = vmatprep.subr.mxu0 0.0
  %3112 = vmatpush1.msra.mxu0 0.0
  %3113 = vmatprep.subr.mxu0 0.0
  %3114 = vmatpush1.msra.mxu0 0.0
  %3115 = vmatprep.subr.mxu0 0.0
  %3116 = vmatpush1.msra.mxu0 0.0
  %3117 = vmatprep.subr.mxu0 0.0
  %3118 = vmatpush1.msra.mxu0 0.0
  %3119 = vmatprep.subr.mxu0 0.0
  %3120 = vmatpush1.msra.mxu0 0.0
  %3121 = vmatprep.mubr.f32.mxu0 0.0
  %v3122 = vand.u32 %v104, 4294901760
  %3123 = vmatmul.mubr.f32.gmra.mrb[0].mxu0 %v3122
  %v3124 = vpop.f32.mrb[0].mxu0
  %v3125 = vadd.f32 %v2671, %v3124
  %v3126 = vpop.f32.mrb[0].mxu0
  %3127 = vmatprep.mubr.f32.mxu0 0.0
  %v3128 = vand.u32 %v107, 4294901760
  %3129 = vmatmul.mubr.f32.gmra.mrb[0].mxu0 %v3128
  %v3130 = vpop.f32.mrb[0].mxu0
  %v3131 = vadd.f32 %v2677, %v3130
  %v3132 = vpop.f32.mrb[0].mxu0
  %3133 = vmatprep.mubr.f32.mxu0 0.0
  %v3134 = vand.u32 %v110, 4294901760
  %3135 = vmatmul.mubr.f32.gmra.mrb[0].mxu0 %v3134
  %v3136 = vpop.f32.mrb[0].mxu0
  %v3137 = vadd.f32 %v2683, %v3136
  %v3138 = vpop.f32.mrb[0].mxu0
  %3139 = vmatprep.mubr.f32.mxu0 0.0
  %v3140 = vand.u32 %v113, 4294901760
  %3141 = vmatmul.mubr.f32.gmra.mrb[0].mxu0 %v3140
  %v3142 = vpop.f32.mrb[0].mxu0
  %v3143 = vadd.f32 %v2689, %v3142
  %v3144 = vpop.f32.mrb[0].mxu0
  %3145 = vmatprep.mubr.f32.mxu0 0.0
  %v3146 = vand.u32 %v116, 4294901760
  %3147 = vmatmul.mubr.f32.gmra.mrb[0].mxu0 %v3146
  %v3148 = vpop.f32.mrb[0].mxu0
  %v3149 = vadd.f32 %v2695, %v3148
  %v3150 = vpop.f32.mrb[0].mxu0
  %3151 = vmatprep.mubr.f32.mxu0 0.0
  %v3152 = vand.u32 %v119, 4294901760
  %3153 = vmatmul.mubr.f32.gmra.mrb[0].mxu0 %v3152
  %v3154 = vpop.f32.mrb[0].mxu0
  %v3155 = vadd.f32 %v2701, %v3154
  %v3156 = vpop.f32.mrb[0].mxu0
  %3157 = vmatprep.mubr.f32.mxu0 0.0
  %v3158 = vand.u32 %v122, 4294901760
  %3159 = vmatmul.mubr.f32.gmra.mrb[0].mxu0 %v3158
  %v3160 = vpop.f32.mrb[0].mxu0
  %v3161 = vadd.f32 %v2707, %v3160
  %v3162 = vpop.f32.mrb[0].mxu0
  %3163 = vmatprep.mubr.f32.mxu0 0.0
  %v3164 = vand.u32 %v125, 4294901760
  %3165 = vmatmul.mubr.f32.gmra.mrb[0].mxu0 %v3164
  %v3166 = vpop.f32.mrb[0].mxu0
  %v3167 = vadd.f32 %v2713, %v3166
  %v3168 = vpop.f32.mrb[0].mxu0
  %3169 = vmatprep.mubr.f32.mxu0 0.0
  %v3170 = vand.u32 %v128, 4294901760
  %3171 = vmatmul.mubr.f32.gmra.mrb[0].mxu0 %v3170
  %v3172 = vpop.f32.mrb[0].mxu0
  %v3173 = vadd.f32 %v2719, %v3172
  %v3174 = vpop.f32.mrb[0].mxu0
  %3175 = vmatprep.mubr.f32.mxu0 0.0
  %v3176 = vand.u32 %v131, 4294901760
  %3177 = vmatmul.mubr.f32.gmra.mrb[0].mxu0 %v3176
  %v3178 = vpop.f32.mrb[0].mxu0
  %v3179 = vadd.f32 %v2725, %v3178
  %v3180 = vpop.f32.mrb[0].mxu0
  %3181 = vmatprep.mubr.f32.mxu0 0.0
  %v3182 = vand.u32 %v134, 4294901760
  %3183 = vmatmul.mubr.f32.gmra.mrb[0].mxu0 %v3182
  %v3184 = vpop.f32.mrb[0].mxu0
  %v3185 = vadd.f32 %v2731, %v3184
  %v3186 = vpop.f32.mrb[0].mxu0
  %3187 = vmatprep.mubr.f32.mxu0 0.0
  %v3188 = vand.u32 %v137, 4294901760
  %3189 = vmatmul.mubr.f32.gmra.mrb[0].mxu0 %v3188
  %v3190 = vpop.f32.mrb[0].mxu0
  %v3191 = vadd.f32 %v2737, %v3190
  %v3192 = vpop.f32.mrb[0].mxu0
  %3193 = vmatprep.mubr.f32.mxu0 0.0
  %v3194 = vand.u32 %v140, 4294901760
  %3195 = vmatmul.mubr.f32.gmra.mrb[0].mxu0 %v3194
  %v3196 = vpop.f32.mrb[0].mxu0
  %v3197 = vadd.f32 %v2743, %v3196
  %v3198 = vpop.f32.mrb[0].mxu0
  %3199 = vmatprep.mubr.f32.mxu0 0.0
  %v3200 = vand.u32 %v143, 4294901760
  %3201 = vmatmul.mubr.f32.gmra.mrb[0].mxu0 %v3200
  %v3202 = vpop.f32.mrb[0].mxu0
  %v3203 = vadd.f32 %v2749, %v3202
  %v3204 = vpop.f32.mrb[0].mxu0
  %3205 = vmatprep.mubr.f32.mxu0 0.0
  %v3206 = vand.u32 %v146, 4294901760
  %3207 = vmatmul.mubr.f32.gmra.mrb[0].mxu0 %v3206
  %v3208 = vpop.f32.mrb[0].mxu0
  %v3209 = vadd.f32 %v2755, %v3208
  %v3210 = vpop.f32.mrb[0].mxu0
  %3211 = vmatprep.mubr.f32.mxu0 0.0
  %v3212 = vand.u32 %v149, 4294901760
  %3213 = vmatmul.mubr.f32.gmra.mrb[0].mxu0 %v3212
  %v3214 = vpop.f32.mrb[0].mxu0
  %v3215 = vadd.f32 %v2761, %v3214
  %v3216 = vpop.f32.mrb[0].mxu0
  %3217 = vmatprep.mubr.f32.mxu0 0.0
  %v3218 = vand.u32 %v152, 4294901760
  %3219 = vmatmul.mubr.f32.gmra.mrb[0].mxu0 %v3218
  %v3220 = vpop.f32.mrb[0].mxu0
  %v3221 = vadd.f32 %v2767, %v3220
  %v3222 = vpop.f32.mrb[0].mxu0
  %3223 = vmatprep.mubr.f32.mxu0 0.0
  %v3224 = vand.u32 %v155, 4294901760
  %3225 = vmatmul.mubr.f32.gmra.mrb[0].mxu0 %v3224
  %v3226 = vpop.f32.mrb[0].mxu0
  %v3227 = vadd.f32 %v2773, %v3226
  %v3228 = vpop.f32.mrb[0].mxu0
  %3229 = vmatprep.mubr.f32.mxu0 0.0
  %v3230 = vand.u32 %v158, 4294901760
  %3231 = vmatmul.mubr.f32.gmra.mrb[0].mxu0 %v3230
  %v3232 = vpop.f32.mrb[0].mxu0
  %v3233 = vadd.f32 %v2779, %v3232
  %v3234 = vpop.f32.mrb[0].mxu0
  %3235 = vmatprep.mubr.f32.mxu0 0.0
  %v3236 = vand.u32 %v161, 4294901760
  %3237 = vmatmul.mubr.f32.gmra.mrb[0].mxu0 %v3236
  %v3238 = vpop.f32.mrb[0].mxu0
  %v3239 = vadd.f32 %v2785, %v3238
  %v3240 = vpop.f32.mrb[0].mxu0
  %3241 = vmatprep.mubr.f32.mxu0 0.0
  %v3242 = vand.u32 %v164, 4294901760
  %3243 = vmatmul.mubr.f32.gmra.mrb[0].mxu0 %v3242
  %v3244 = vpop.f32.mrb[0].mxu0
  %v3245 = vadd.f32 %v2791, %v3244
  %v3246 = vpop.f32.mrb[0].mxu0
  %3247 = vmatprep.mubr.f32.mxu0 0.0
  %v3248 = vand.u32 %v167, 4294901760
  %3249 = vmatmul.mubr.f32.gmra.mrb[0].mxu0 %v3248
  %v3250 = vpop.f32.mrb[0].mxu0
  %v3251 = vadd.f32 %v2797, %v3250
  %v3252 = vpop.f32.mrb[0].mxu0
  %3253 = vmatprep.mubr.f32.mxu0 0.0
  %v3254 = vand.u32 %v170, 4294901760
  %3255 = vmatmul.mubr.f32.gmra.mrb[0].mxu0 %v3254
  %v3256 = vpop.f32.mrb[0].mxu0
  %v3257 = vadd.f32 %v2803, %v3256
  %v3258 = vpop.f32.mrb[0].mxu0
  %3259 = vmatprep.mubr.f32.mxu0 0.0
  %v3260 = vand.u32 %v173, 4294901760
  %3261 = vmatmul.mubr.f32.gmra.mrb[0].mxu0 %v3260
  %v3262 = vpop.f32.mrb[0].mxu0
  %v3263 = vadd.f32 %v2809, %v3262
  %v3264 = vpop.f32.mrb[0].mxu0
  %3265 = vmatprep.mubr.f32.mxu0 0.0
  %v3266 = vand.u32 %v176, 4294901760
  %3267 = vmatmul.mubr.f32.gmra.mrb[0].mxu0 %v3266
  %v3268 = vpop.f32.mrb[0].mxu0
  %v3269 = vadd.f32 %v2815, %v3268
  %v3270 = vpop.f32.mrb[0].mxu0
  %3271 = vmatprep.mubr.f32.mxu0 0.0
  %v3272 = vand.u32 %v179, 4294901760
  %3273 = vmatmul.mubr.f32.gmra.mrb[0].mxu0 %v3272
  %v3274 = vpop.f32.mrb[0].mxu0
  %v3275 = vadd.f32 %v2821, %v3274
  %v3276 = vpop.f32.mrb[0].mxu0
  %3277 = vmatprep.mubr.f32.mxu0 0.0
  %v3278 = vand.u32 %v182, 4294901760
  %3279 = vmatmul.mubr.f32.gmra.mrb[0].mxu0 %v3278
  %v3280 = vpop.f32.mrb[0].mxu0
  %v3281 = vadd.f32 %v2827, %v3280
  %v3282 = vpop.f32.mrb[0].mxu0
  %3283 = vmatprep.mubr.f32.mxu0 0.0
  %v3284 = vand.u32 %v185, 4294901760
  %3285 = vmatmul.mubr.f32.gmra.mrb[0].mxu0 %v3284
  %v3286 = vpop.f32.mrb[0].mxu0
  %v3287 = vadd.f32 %v2833, %v3286
  %v3288 = vpop.f32.mrb[0].mxu0
  %3289 = vmatprep.mubr.f32.mxu0 0.0
  %v3290 = vand.u32 %v188, 4294901760
  %3291 = vmatmul.mubr.f32.gmra.mrb[0].mxu0 %v3290
  %v3292 = vpop.f32.mrb[0].mxu0
  %v3293 = vadd.f32 %v2839, %v3292
  %v3294 = vpop.f32.mrb[0].mxu0
  %3295 = vmatprep.mubr.f32.mxu0 0.0
  %v3296 = vand.u32 %v191, 4294901760
  %3297 = vmatmul.mubr.f32.gmra.mrb[0].mxu0 %v3296
  %v3298 = vpop.f32.mrb[0].mxu0
  %v3299 = vadd.f32 %v2845, %v3298
  %v3300 = vpop.f32.mrb[0].mxu0
  %3301 = vmatprep.mubr.f32.mxu0 0.0
  %v3302 = vand.u32 %v194, 4294901760
  %3303 = vmatmul.mubr.f32.gmra.mrb[0].mxu0 %v3302
  %v3304 = vpop.f32.mrb[0].mxu0
  %v3305 = vadd.f32 %v2851, %v3304
  %v3306 = vpop.f32.mrb[0].mxu0
  %3307 = vmatprep.mubr.f32.mxu0 0.0
  %v3308 = vand.u32 %v197, 4294901760
  %3309 = vmatmul.mubr.f32.gmra.mrb[0].mxu0 %v3308
  %v3310 = vpop.f32.mrb[0].mxu0
  %v3311 = vadd.f32 %v2857, %v3310
  %v3312 = vpop.f32.mrb[0].mxu0
  %3313 = vmatprep.mubr.f32.mxu0 0.0
  %v3314 = vand.u32 %v200, 4294901760
  %3315 = vmatmul.mubr.f32.gmra.mrb[0].mxu0 %v3314
  %v3316 = vpop.f32.mrb[0].mxu0
  %v3317 = vadd.f32 %v2863, %v3316
  %v3318 = vpop.f32.mrb[0].mxu0
  %3319 = vmatprep.mubr.f32.mxu0 0.0
  %v3320 = vand.u32 %v203, 4294901760
  %3321 = vmatmul.mubr.f32.gmra.mrb[0].mxu0 %v3320
  %v3322 = vpop.f32.mrb[0].mxu0
  %v3323 = vadd.f32 %v2869, %v3322
  %v3324 = vpop.f32.mrb[0].mxu0
  %3325 = vmatprep.mubr.f32.mxu0 0.0
  %v3326 = vand.u32 %v206, 4294901760
  %3327 = vmatmul.mubr.f32.gmra.mrb[0].mxu0 %v3326
  %v3328 = vpop.f32.mrb[0].mxu0
  %v3329 = vadd.f32 %v2875, %v3328
  %v3330 = vpop.f32.mrb[0].mxu0
  %3331 = vmatprep.mubr.f32.mxu0 0.0
  %v3332 = vand.u32 %v209, 4294901760
  %3333 = vmatmul.mubr.f32.gmra.mrb[0].mxu0 %v3332
  %v3334 = vpop.f32.mrb[0].mxu0
  %v3335 = vadd.f32 %v2881, %v3334
  %v3336 = vpop.f32.mrb[0].mxu0
  %3337 = vmatprep.mubr.f32.mxu0 0.0
  %v3338 = vand.u32 %v212, 4294901760
  %3339 = vmatmul.mubr.f32.gmra.mrb[0].mxu0 %v3338
  %v3340 = vpop.f32.mrb[0].mxu0
  %v3341 = vadd.f32 %v2887, %v3340
  %v3342 = vpop.f32.mrb[0].mxu0
  %3343 = vmatprep.mubr.f32.mxu0 0.0
  %v3344 = vand.u32 %v215, 4294901760
  %3345 = vmatmul.mubr.f32.gmra.mrb[0].mxu0 %v3344
  %v3346 = vpop.f32.mrb[0].mxu0
  %v3347 = vadd.f32 %v2893, %v3346
  %v3348 = vpop.f32.mrb[0].mxu0
  %3349 = vmatprep.mubr.f32.mxu0 0.0
  %v3350 = vand.u32 %v218, 4294901760
  %3351 = vmatmul.mubr.f32.gmra.mrb[0].mxu0 %v3350
  %v3352 = vpop.f32.mrb[0].mxu0
  %v3353 = vadd.f32 %v2899, %v3352
  %v3354 = vpop.f32.mrb[0].mxu0
  %3355 = vmatprep.mubr.f32.mxu0 0.0
  %v3356 = vand.u32 %v221, 4294901760
  %3357 = vmatmul.mubr.f32.gmra.mrb[0].mxu0 %v3356
  %v3358 = vpop.f32.mrb[0].mxu0
  %v3359 = vadd.f32 %v2905, %v3358
  %v3360 = vpop.f32.mrb[0].mxu0
  %3361 = vmatprep.mubr.f32.mxu0 0.0
  %v3362 = vand.u32 %v224, 4294901760
  %3363 = vmatmul.mubr.f32.gmra.mrb[0].mxu0 %v3362
  %v3364 = vpop.f32.mrb[0].mxu0
  %v3365 = vadd.f32 %v2911, %v3364
  %v3366 = vpop.f32.mrb[0].mxu0
  %3367 = vmatprep.mubr.f32.mxu0 0.0
  %v3368 = vand.u32 %v227, 4294901760
  %3369 = vmatmul.mubr.f32.gmra.mrb[0].mxu0 %v3368
  %v3370 = vpop.f32.mrb[0].mxu0
  %v3371 = vadd.f32 %v2917, %v3370
  %v3372 = vpop.f32.mrb[0].mxu0
  %3373 = vmatprep.mubr.f32.mxu0 0.0
  %v3374 = vand.u32 %v230, 4294901760
  %3375 = vmatmul.mubr.f32.gmra.mrb[0].mxu0 %v3374
  %v3376 = vpop.f32.mrb[0].mxu0
  %v3377 = vadd.f32 %v2923, %v3376
  %v3378 = vpop.f32.mrb[0].mxu0
  %3379 = vmatprep.mubr.f32.mxu0 0.0
  %v3380 = vand.u32 %v233, 4294901760
  %3381 = vmatmul.mubr.f32.gmra.mrb[0].mxu0 %v3380
  %v3382 = vpop.f32.mrb[0].mxu0
  %v3383 = vadd.f32 %v2929, %v3382
  %v3384 = vpop.f32.mrb[0].mxu0
  %3385 = vmatprep.mubr.f32.mxu0 0.0
  %v3386 = vand.u32 %v236, 4294901760
  %3387 = vmatmul.mubr.f32.gmra.mrb[0].mxu0 %v3386
  %v3388 = vpop.f32.mrb[0].mxu0
  %v3389 = vadd.f32 %v2935, %v3388
  %v3390 = vpop.f32.mrb[0].mxu0
  %3391 = vmatprep.mubr.f32.mxu0 0.0
  %v3392 = vand.u32 %v239, 4294901760
  %3393 = vmatmul.mubr.f32.gmra.mrb[0].mxu0 %v3392
  %v3394 = vpop.f32.mrb[0].mxu0
  %v3395 = vadd.f32 %v2941, %v3394
  %v3396 = vpop.f32.mrb[0].mxu0
  %3397 = vmatprep.mubr.f32.mxu0 0.0
  %v3398 = vand.u32 %v242, 4294901760
  %3399 = vmatmul.mubr.f32.gmra.mrb[0].mxu0 %v3398
  %v3400 = vpop.f32.mrb[0].mxu0
  %v3401 = vadd.f32 %v2947, %v3400
  %v3402 = vpop.f32.mrb[0].mxu0
  %3403 = vmatprep.mubr.f32.mxu0 0.0
  %v3404 = vand.u32 %v245, 4294901760
  %3405 = vmatmul.mubr.f32.gmra.mrb[0].mxu0 %v3404
  %v3406 = vpop.f32.mrb[0].mxu0
  %v3407 = vadd.f32 %v2953, %v3406
  %v3408 = vpop.f32.mrb[0].mxu0
  %3409 = vmatprep.mubr.f32.mxu0 0.0
  %v3410 = vand.u32 %v248, 4294901760
  %3411 = vmatmul.mubr.f32.gmra.mrb[0].mxu0 %v3410
  %v3412 = vpop.f32.mrb[0].mxu0
  %v3413 = vadd.f32 %v2959, %v3412
  %v3414 = vpop.f32.mrb[0].mxu0
  %3415 = vmatprep.mubr.f32.mxu0 0.0
  %v3416 = vand.u32 %v251, 4294901760
  %3417 = vmatmul.mubr.f32.gmra.mrb[0].mxu0 %v3416
  %v3418 = vpop.f32.mrb[0].mxu0
  %v3419 = vadd.f32 %v2965, %v3418
  %v3420 = vpop.f32.mrb[0].mxu0
  %3421 = vmatprep.mubr.f32.mxu0 0.0
  %v3422 = vand.u32 %v254, 4294901760
  %3423 = vmatmul.mubr.f32.gmra.mrb[0].mxu0 %v3422
  %v3424 = vpop.f32.mrb[0].mxu0
  %v3425 = vadd.f32 %v2971, %v3424
  %v3426 = vpop.f32.mrb[0].mxu0
  %3427 = vmatprep.mubr.f32.mxu0 0.0
  %v3428 = vand.u32 %v257, 4294901760
  %3429 = vmatmul.mubr.f32.gmra.mrb[0].mxu0 %v3428
  %v3430 = vpop.f32.mrb[0].mxu0
  %v3431 = vadd.f32 %v2977, %v3430
  %v3432 = vpop.f32.mrb[0].mxu0
  %3433 = vmatprep.mubr.f32.mxu0 0.0
  %v3434 = vand.u32 %v260, 4294901760
  %3435 = vmatmul.mubr.f32.gmra.mrb[0].mxu0 %v3434
  %v3436 = vpop.f32.mrb[0].mxu0
  %v3437 = vadd.f32 %v2983, %v3436
  %v3438 = vpop.f32.mrb[0].mxu0
  %3439 = vmatprep.mubr.f32.mxu0 0.0
  %v3440 = vand.u32 %v263, 4294901760
  %3441 = vmatmul.mubr.f32.gmra.mrb[0].mxu0 %v3440
  %v3442 = vpop.f32.mrb[0].mxu0
  %v3443 = vadd.f32 %v2989, %v3442
  %v3444 = vpop.f32.mrb[0].mxu0
  %3445 = vmatprep.mubr.f32.mxu0 0.0
  %v3446 = vand.u32 %v266, 4294901760
  %3447 = vmatmul.mubr.f32.gmra.mrb[0].mxu0 %v3446
  %v3448 = vpop.f32.mrb[0].mxu0
  %v3449 = vadd.f32 %v2995, %v3448
  %v3450 = vpop.f32.mrb[0].mxu0
  %3451 = vmatprep.mubr.f32.mxu0 0.0
  %v3452 = vand.u32 %v269, 4294901760
  %3453 = vmatmul.mubr.f32.gmra.mrb[0].mxu0 %v3452
  %v3454 = vpop.f32.mrb[0].mxu0
  %v3455 = vadd.f32 %v3001, %v3454
  %v3456 = vpop.f32.mrb[0].mxu0
  %3457 = vmatprep.mubr.f32.mxu0 0.0
  %v3458 = vand.u32 %v272, 4294901760
  %3459 = vmatmul.mubr.f32.gmra.mrb[0].mxu0 %v3458
  %v3460 = vpop.f32.mrb[0].mxu0
  %v3461 = vadd.f32 %v3007, %v3460
  %v3462 = vpop.f32.mrb[0].mxu0
  %3463 = vmatprep.mubr.f32.mxu0 0.0
  %v3464 = vand.u32 %v275, 4294901760
  %3465 = vmatmul.mubr.f32.gmra.mrb[0].mxu0 %v3464
  %v3466 = vpop.f32.mrb[0].mxu0
  %v3467 = vadd.f32 %v3013, %v3466
  %v3468 = vpop.f32.mrb[0].mxu0
  %3469 = vmatprep.mubr.f32.mxu0 0.0
  %v3470 = vand.u32 %v278, 4294901760
  %3471 = vmatmul.mubr.f32.gmra.mrb[0].mxu0 %v3470
  %v3472 = vpop.f32.mrb[0].mxu0
  %v3473 = vadd.f32 %v3019, %v3472
  %v3474 = vpop.f32.mrb[0].mxu0
  %3475 = vmatprep.mubr.f32.mxu0 0.0
  %v3476 = vand.u32 %v281, 4294901760
  %3477 = vmatmul.mubr.f32.gmra.mrb[0].mxu0 %v3476
  %v3478 = vpop.f32.mrb[0].mxu0
  %v3479 = vadd.f32 %v3025, %v3478
  %v3480 = vpop.f32.mrb[0].mxu0
  %3481 = vmatprep.mubr.f32.mxu0 0.0
  %v3482 = vand.u32 %v284, 4294901760
  %3483 = vmatmul.mubr.f32.gmra.mrb[0].mxu0 %v3482
  %v3484 = vpop.f32.mrb[0].mxu0
  %v3485 = vadd.f32 %v3031, %v3484
  %v3486 = vpop.f32.mrb[0].mxu0
  %3487 = vmatprep.mubr.f32.mxu0 0.0
  %v3488 = vand.u32 %v287, 4294901760
  %3489 = vmatmul.mubr.f32.gmra.mrb[0].mxu0 %v3488
  %v3490 = vpop.f32.mrb[0].mxu0
  %v3491 = vadd.f32 %v3037, %v3490
  %v3492 = vpop.f32.mrb[0].mxu0
  %3493 = vmatprep.mubr.f32.mxu0 0.0
  %v3494 = vand.u32 %v290, 4294901760
  %3495 = vmatmul.mubr.f32.gmra.mrb[0].mxu0 %v3494
  %v3496 = vpop.f32.mrb[0].mxu0
  %v3497 = vadd.f32 %v3043, %v3496
  %v3498 = vpop.f32.mrb[0].mxu0
  %3499 = vmatprep.mubr.f32.mxu0 0.0
  %v3500 = vand.u32 %v293, 4294901760
  %3501 = vmatmul.mubr.f32.gmra.mrb[0].mxu0 %v3500
  %v3502 = vpop.f32.mrb[0].mxu0
  %v3503 = vadd.f32 %v3049, %v3502
  %v3504 = vpop.f32.mrb[0].mxu0
  %3505 = vdwg.mxu0
  %v3506 = vmax.f32 %v3125, 0.0
  %v3507 = vmax.f32 %v3131, 0.0
  %v3508 = vmax.f32 %v3137, 0.0
  %v3509 = vmax.f32 %v3143, 0.0
  %v3510 = vmax.f32 %v3149, 0.0
  %v3511 = vmax.f32 %v3155, 0.0
  %v3512 = vmax.f32 %v3161, 0.0
  %v3513 = vmax.f32 %v3167, 0.0
  %v3514 = vmax.f32 %v3173, 0.0
  %v3515 = vmax.f32 %v3179, 0.0
  %v3516 = vmax.f32 %v3185, 0.0
  %v3517 = vmax.f32 %v3191, 0.0
  %v3518 = vmax.f32 %v3197, 0.0
  %v3519 = vmax.f32 %v3203, 0.0
  %v3520 = vmax.f32 %v3209, 0.0
  %v3521 = vmax.f32 %v3215, 0.0
  %v3522 = vmax.f32 %v3221, 0.0
  %v3523 = vmax.f32 %v3227, 0.0
  %v3524 = vmax.f32 %v3233, 0.0
  %v3525 = vmax.f32 %v3239, 0.0
  %v3526 = vmax.f32 %v3245, 0.0
  %v3527 = vmax.f32 %v3251, 0.0
  %v3528 = vmax.f32 %v3257, 0.0
  %v3529 = vmax.f32 %v3263, 0.0
  %v3530 = vmax.f32 %v3269, 0.0
  %v3531 = vmax.f32 %v3275, 0.0
  %v3532 = vmax.f32 %v3281, 0.0
  %v3533 = vmax.f32 %v3287, 0.0
  %v3534 = vmax.f32 %v3293, 0.0
  %v3535 = vmax.f32 %v3299, 0.0
  %v3536 = vmax.f32 %v3305, 0.0
  %v3537 = vmax.f32 %v3311, 0.0
  %v3538 = vmax.f32 %v3317, 0.0
  %v3539 = vmax.f32 %v3323, 0.0
  %v3540 = vmax.f32 %v3329, 0.0
  %v3541 = vmax.f32 %v3335, 0.0
  %v3542 = vmax.f32 %v3341, 0.0
  %v3543 = vmax.f32 %v3347, 0.0
  %v3544 = vmax.f32 %v3353, 0.0
  %v3545 = vmax.f32 %v3359, 0.0
  %v3546 = vmax.f32 %v3365, 0.0
  %v3547 = vmax.f32 %v3371, 0.0
  %v3548 = vmax.f32 %v3377, 0.0
  %v3549 = vmax.f32 %v3383, 0.0
  %v3550 = vmax.f32 %v3389, 0.0
  %v3551 = vmax.f32 %v3395, 0.0
  %v3552 = vmax.f32 %v3401, 0.0
  %v3553 = vmax.f32 %v3407, 0.0
  %v3554 = vmax.f32 %v3413, 0.0
  %v3555 = vmax.f32 %v3419, 0.0
  %v3556 = vmax.f32 %v3425, 0.0
  %v3557 = vmax.f32 %v3431, 0.0
  %v3558 = vmax.f32 %v3437, 0.0
  %v3559 = vmax.f32 %v3443, 0.0
  %v3560 = vmax.f32 %v3449, 0.0
  %v3561 = vmax.f32 %v3455, 0.0
  %v3562 = vmax.f32 %v3461, 0.0
  %v3563 = vmax.f32 %v3467, 0.0
  %v3564 = vmax.f32 %v3473, 0.0
  %v3565 = vmax.f32 %v3479, 0.0
  %v3566 = vmax.f32 %v3485, 0.0
  %v3567 = vmax.f32 %v3491, 0.0
  %v3568 = vmax.f32 %v3497, 0.0
  %v3569 = vmax.f32 %v3503, 0.0
  %v3570 = vld [vmem:[%s3] sm:$0xff]
  %v3572 = vcombine.high %v3570, %v3570
  %v3574 = vunpack.c.l.s4 1983009808
  %v3575 = vunpack.c.0.s8 %v3574
  %v3576 = vlaneseq
  %v3577 = vshrl.u32 %v3576, 7
  %v3578 = vsub.s32 %v3575, %v3577
  %v3579 = vrot.slane %v3570, %v3578
  %v3581 = vunpack.c.l.s4 1983009808
  %v3582 = vunpack.c.0.s8 %v3581
  %v3583 = vlaneseq
  %v3584 = vshrl.u32 %v3583, 7
  %v3585 = vsub.s32 %v3582, %v3584
  %v3586 = vrot.slane %v3572, %v3585
  %v3587 = vcombine.high %v3579, %v3579
  %v3588 = vcombine.high %v3586, %v3586
  %3593 = vmatprep.subr.mxu0 0.0
  %v3594 = vand.u32 %v3506, 4294901760
  %3595 = vmatpush1.msra.mxu0 %v3594
  %3596 = vmatprep.subr.mxu0 0.0
  %v3597 = vand.u32 %v3507, 4294901760
  %3598 = vmatpush1.msra.mxu0 %v3597
  %3599 = vmatprep.subr.mxu0 0.0
  %v3600 = vand.u32 %v3508, 4294901760
  %3601 = vmatpush1.msra.mxu0 %v3600
  %3602 = vmatprep.subr.mxu0 0.0
  %v3603 = vand.u32 %v3509, 4294901760
  %3604 = vmatpush1.msra.mxu0 %v3603
  %3605 = vmatprep.subr.mxu0 0.0
  %v3606 = vand.u32 %v3510, 4294901760
  %3607 = vmatpush1.msra.mxu0 %v3606
  %3608 = vmatprep.subr.mxu0 0.0
  %v3609 = vand.u32 %v3511, 4294901760
  %3610 = vmatpush1.msra.mxu0 %v3609
  %3611 = vmatprep.subr.mxu0 0.0
  %v3612 = vand.u32 %v3512, 4294901760
  %3613 = vmatpush1.msra.mxu0 %v3612
  %3614 = vmatprep.subr.mxu0 0.0
  %v3615 = vand.u32 %v3513, 4294901760
  %3616 = vmatpush1.msra.mxu0 %v3615
  %3617 = vmatprep.subr.mxu0 0.0
  %v3618 = vand.u32 %v3514, 4294901760
  %3619 = vmatpush1.msra.mxu0 %v3618
  %3620 = vmatprep.subr.mxu0 0.0
  %v3621 = vand.u32 %v3515, 4294901760
  %3622 = vmatpush1.msra.mxu0 %v3621
  %3623 = vmatprep.subr.mxu0 0.0
  %v3624 = vand.u32 %v3516, 4294901760
  %3625 = vmatpush1.msra.mxu0 %v3624
  %3626 = vmatprep.subr.mxu0 0.0
  %v3627 = vand.u32 %v3517, 4294901760
  %3628 = vmatpush1.msra.mxu0 %v3627
  %3629 = vmatprep.subr.mxu0 0.0
  %v3630 = vand.u32 %v3518, 4294901760
  %3631 = vmatpush1.msra.mxu0 %v3630
  %3632 = vmatprep.subr.mxu0 0.0
  %v3633 = vand.u32 %v3519, 4294901760
  %3634 = vmatpush1.msra.mxu0 %v3633
  %3635 = vmatprep.subr.mxu0 0.0
  %v3636 = vand.u32 %v3520, 4294901760
  %3637 = vmatpush1.msra.mxu0 %v3636
  %3638 = vmatprep.subr.mxu0 0.0
  %v3639 = vand.u32 %v3521, 4294901760
  %3640 = vmatpush1.msra.mxu0 %v3639
  %3641 = vmatprep.subr.mxu0 0.0
  %v3642 = vand.u32 %v3522, 4294901760
  %3643 = vmatpush1.msra.mxu0 %v3642
  %3644 = vmatprep.subr.mxu0 0.0
  %v3645 = vand.u32 %v3523, 4294901760
  %3646 = vmatpush1.msra.mxu0 %v3645
  %3647 = vmatprep.subr.mxu0 0.0
  %v3648 = vand.u32 %v3524, 4294901760
  %3649 = vmatpush1.msra.mxu0 %v3648
  %3650 = vmatprep.subr.mxu0 0.0
  %v3651 = vand.u32 %v3525, 4294901760
  %3652 = vmatpush1.msra.mxu0 %v3651
  %3653 = vmatprep.subr.mxu0 0.0
  %v3654 = vand.u32 %v3526, 4294901760
  %3655 = vmatpush1.msra.mxu0 %v3654
  %3656 = vmatprep.subr.mxu0 0.0
  %v3657 = vand.u32 %v3527, 4294901760
  %3658 = vmatpush1.msra.mxu0 %v3657
  %3659 = vmatprep.subr.mxu0 0.0
  %v3660 = vand.u32 %v3528, 4294901760
  %3661 = vmatpush1.msra.mxu0 %v3660
  %3662 = vmatprep.subr.mxu0 0.0
  %v3663 = vand.u32 %v3529, 4294901760
  %3664 = vmatpush1.msra.mxu0 %v3663
  %3665 = vmatprep.subr.mxu0 0.0
  %v3666 = vand.u32 %v3530, 4294901760
  %3667 = vmatpush1.msra.mxu0 %v3666
  %3668 = vmatprep.subr.mxu0 0.0
  %v3669 = vand.u32 %v3531, 4294901760
  %3670 = vmatpush1.msra.mxu0 %v3669
  %3671 = vmatprep.subr.mxu0 0.0
  %v3672 = vand.u32 %v3532, 4294901760
  %3673 = vmatpush1.msra.mxu0 %v3672
  %3674 = vmatprep.subr.mxu0 0.0
  %v3675 = vand.u32 %v3533, 4294901760
  %3676 = vmatpush1.msra.mxu0 %v3675
  %3677 = vmatprep.subr.mxu0 0.0
  %v3678 = vand.u32 %v3534, 4294901760
  %3679 = vmatpush1.msra.mxu0 %v3678
  %3680 = vmatprep.subr.mxu0 0.0
  %v3681 = vand.u32 %v3535, 4294901760
  %3682 = vmatpush1.msra.mxu0 %v3681
  %3683 = vmatprep.subr.mxu0 0.0
  %v3684 = vand.u32 %v3536, 4294901760
  %3685 = vmatpush1.msra.mxu0 %v3684
  %3686 = vmatprep.subr.mxu0 0.0
  %v3687 = vand.u32 %v3537, 4294901760
  %3688 = vmatpush1.msra.mxu0 %v3687
  %v3689 = vand.u32 %v3587, 4294901760
  %v3690 = vsub.f32 %v3587, %v3689
  %v3691 = vand.u32 %v3690, 4294901760
  %v3692 = vsub.f32 %v3690, %v3691
  %v3693 = vand.u32 %v3692, 4294901760
  %3694 = vmatprep.mubr.f32.mxu0 %v3693
  %v3695 = vand.u32 %v3579, 4294901760
  %v3696 = vsub.f32 %v3579, %v3695
  %v3697 = vand.u32 %v3696, 4294901760
  %v3698 = vsub.f32 %v3696, %v3697
  %v3699 = vand.u32 %v3698, 4294901760
  %3700 = vmatmul.mubr.f32.gmra.mrb[0].mxu0 %v3699
  %v3701 = vpop.f32.mrb[0].mxu0
  %v3702 = vadd.f32 0.0, %v3701
  %v3703 = vpop.f32.mrb[0].mxu0
  %3704 = vdwg.mxu0
  %3705 = vmatprep.subr.mxu0 0.0
  %v3706 = vand.u32 %v3506, 4294901760
  %v3707 = vsub.f32 %v3506, %v3706
  %v3708 = vand.u32 %v3707, 4294901760
  %v3709 = vsub.f32 %v3707, %v3708
  %v3710 = vand.u32 %v3709, 4294901760
  %3711 = vmatpush1.msra.mxu0 %v3710
  %3712 = vmatprep.subr.mxu0 0.0
  %v3713 = vand.u32 %v3507, 4294901760
  %v3714 = vsub.f32 %v3507, %v3713
  %v3715 = vand.u32 %v3714, 4294901760
  %v3716 = vsub.f32 %v3714, %v3715
  %v3717 = vand.u32 %v3716, 4294901760
  %3718 = vmatpush1.msra.mxu0 %v3717
  %3719 = vmatprep.subr.mxu0 0.0
  %v3720 = vand.u32 %v3508, 4294901760
  %v3721 = vsub.f32 %v3508, %v3720
  %v3722 = vand.u32 %v3721, 4294901760
  %v3723 = vsub.f32 %v3721, %v3722
  %v3724 = vand.u32 %v3723, 4294901760
  %3725 = vmatpush1.msra.mxu0 %v3724
  %3726 = vmatprep.subr.mxu0 0.0
  %v3727 = vand.u32 %v3509, 4294901760
  %v3728 = vsub.f32 %v3509, %v3727
  %v3729 = vand.u32 %v3728, 4294901760
  %v3730 = vsub.f32 %v3728, %v3729
  %v3731 = vand.u32 %v3730, 4294901760
  %3732 = vmatpush1.msra.mxu0 %v3731
  %3733 = vmatprep.subr.mxu0 0.0
  %v3734 = vand.u32 %v3510, 4294901760
  %v3735 = vsub.f32 %v3510, %v3734
  %v3736 = vand.u32 %v3735, 4294901760
  %v3737 = vsub.f32 %v3735, %v3736
  %v3738 = vand.u32 %v3737, 4294901760
  %3739 = vmatpush1.msra.mxu0 %v3738
  %3740 = vmatprep.subr.mxu0 0.0
  %v3741 = vand.u32 %v3511, 4294901760
  %v3742 = vsub.f32 %v3511, %v3741
  %v3743 = vand.u32 %v3742, 4294901760
  %v3744 = vsub.f32 %v3742, %v3743
  %v3745 = vand.u32 %v3744, 4294901760
  %3746 = vmatpush1.msra.mxu0 %v3745
  %3747 = vmatprep.subr.mxu0 0.0
  %v3748 = vand.u32 %v3512, 4294901760
  %v3749 = vsub.f32 %v3512, %v3748
  %v3750 = vand.u32 %v3749, 4294901760
  %v3751 = vsub.f32 %v3749, %v3750
  %v3752 = vand.u32 %v3751, 4294901760
  %3753 = vmatpush1.msra.mxu0 %v3752
  %3754 = vmatprep.subr.mxu0 0.0
  %v3755 = vand.u32 %v3513, 4294901760
  %v3756 = vsub.f32 %v3513, %v3755
  %v3757 = vand.u32 %v3756, 4294901760
  %v3758 = vsub.f32 %v3756, %v3757
  %v3759 = vand.u32 %v3758, 4294901760
  %3760 = vmatpush1.msra.mxu0 %v3759
  %3761 = vmatprep.subr.mxu0 0.0
  %v3762 = vand.u32 %v3514, 4294901760
  %v3763 = vsub.f32 %v3514, %v3762
  %v3764 = vand.u32 %v3763, 4294901760
  %v3765 = vsub.f32 %v3763, %v3764
  %v3766 = vand.u32 %v3765, 4294901760
  %3767 = vmatpush1.msra.mxu0 %v3766
  %3768 = vmatprep.subr.mxu0 0.0
  %v3769 = vand.u32 %v3515, 4294901760
  %v3770 = vsub.f32 %v3515, %v3769
  %v3771 = vand.u32 %v3770, 4294901760
  %v3772 = vsub.f32 %v3770, %v3771
  %v3773 = vand.u32 %v3772, 4294901760
  %3774 = vmatpush1.msra.mxu0 %v3773
  %3775 = vmatprep.subr.mxu0 0.0
  %v3776 = vand.u32 %v3516, 4294901760
  %v3777 = vsub.f32 %v3516, %v3776
  %v3778 = vand.u32 %v3777, 4294901760
  %v3779 = vsub.f32 %v3777, %v3778
  %v3780 = vand.u32 %v3779, 4294901760
  %3781 = vmatpush1.msra.mxu0 %v3780
  %3782 = vmatprep.subr.mxu0 0.0
  %v3783 = vand.u32 %v3517, 4294901760
  %v3784 = vsub.f32 %v3517, %v3783
  %v3785 = vand.u32 %v3784, 4294901760
  %v3786 = vsub.f32 %v3784, %v3785
  %v3787 = vand.u32 %v3786, 4294901760
  %3788 = vmatpush1.msra.mxu0 %v3787
  %3789 = vmatprep.subr.mxu0 0.0
  %v3790 = vand.u32 %v3518, 4294901760
  %v3791 = vsub.f32 %v3518, %v3790
  %v3792 = vand.u32 %v3791, 4294901760
  %v3793 = vsub.f32 %v3791, %v3792
  %v3794 = vand.u32 %v3793, 4294901760
  %3795 = vmatpush1.msra.mxu0 %v3794
  %3796 = vmatprep.subr.mxu0 0.0
  %v3797 = vand.u32 %v3519, 4294901760
  %v3798 = vsub.f32 %v3519, %v3797
  %v3799 = vand.u32 %v3798, 4294901760
  %v3800 = vsub.f32 %v3798, %v3799
  %v3801 = vand.u32 %v3800, 4294901760
  %3802 = vmatpush1.msra.mxu0 %v3801
  %3803 = vmatprep.subr.mxu0 0.0
  %v3804 = vand.u32 %v3520, 4294901760
  %v3805 = vsub.f32 %v3520, %v3804
  %v3806 = vand.u32 %v3805, 4294901760
  %v3807 = vsub.f32 %v3805, %v3806
  %v3808 = vand.u32 %v3807, 4294901760
  %3809 = vmatpush1.msra.mxu0 %v3808
  %3810 = vmatprep.subr.mxu0 0.0
  %v3811 = vand.u32 %v3521, 4294901760
  %v3812 = vsub.f32 %v3521, %v3811
  %v3813 = vand.u32 %v3812, 4294901760
  %v3814 = vsub.f32 %v3812, %v3813
  %v3815 = vand.u32 %v3814, 4294901760
  %3816 = vmatpush1.msra.mxu0 %v3815
  %3817 = vmatprep.subr.mxu0 0.0
  %v3818 = vand.u32 %v3522, 4294901760
  %v3819 = vsub.f32 %v3522, %v3818
  %v3820 = vand.u32 %v3819, 4294901760
  %v3821 = vsub.f32 %v3819, %v3820
  %v3822 = vand.u32 %v3821, 4294901760
  %3823 = vmatpush1.msra.mxu0 %v3822
  %3824 = vmatprep.subr.mxu0 0.0
  %v3825 = vand.u32 %v3523, 4294901760
  %v3826 = vsub.f32 %v3523, %v3825
  %v3827 = vand.u32 %v3826, 4294901760
  %v3828 = vsub.f32 %v3826, %v3827
  %v3829 = vand.u32 %v3828, 4294901760
  %3830 = vmatpush1.msra.mxu0 %v3829
  %3831 = vmatprep.subr.mxu0 0.0
  %v3832 = vand.u32 %v3524, 4294901760
  %v3833 = vsub.f32 %v3524, %v3832
  %v3834 = vand.u32 %v3833, 4294901760
  %v3835 = vsub.f32 %v3833, %v3834
  %v3836 = vand.u32 %v3835, 4294901760
  %3837 = vmatpush1.msra.mxu0 %v3836
  %3838 = vmatprep.subr.mxu0 0.0
  %v3839 = vand.u32 %v3525, 4294901760
  %v3840 = vsub.f32 %v3525, %v3839
  %v3841 = vand.u32 %v3840, 4294901760
  %v3842 = vsub.f32 %v3840, %v3841
  %v3843 = vand.u32 %v3842, 4294901760
  %3844 = vmatpush1.msra.mxu0 %v3843
  %3845 = vmatprep.subr.mxu0 0.0
  %v3846 = vand.u32 %v3526, 4294901760
  %v3847 = vsub.f32 %v3526, %v3846
  %v3848 = vand.u32 %v3847, 4294901760
  %v3849 = vsub.f32 %v3847, %v3848
  %v3850 = vand.u32 %v3849, 4294901760
  %3851 = vmatpush1.msra.mxu0 %v3850
  %3852 = vmatprep.subr.mxu0 0.0
  %v3853 = vand.u32 %v3527, 4294901760
  %v3854 = vsub.f32 %v3527, %v3853
  %v3855 = vand.u32 %v3854, 4294901760
  %v3856 = vsub.f32 %v3854, %v3855
  %v3857 = vand.u32 %v3856, 4294901760
  %3858 = vmatpush1.msra.mxu0 %v3857
  %3859 = vmatprep.subr.mxu0 0.0
  %v3860 = vand.u32 %v3528, 4294901760
  %v3861 = vsub.f32 %v3528, %v3860
  %v3862 = vand.u32 %v3861, 4294901760
  %v3863 = vsub.f32 %v3861, %v3862
  %v3864 = vand.u32 %v3863, 4294901760
  %3865 = vmatpush1.msra.mxu0 %v3864
  %3866 = vmatprep.subr.mxu0 0.0
  %v3867 = vand.u32 %v3529, 4294901760
  %v3868 = vsub.f32 %v3529, %v3867
  %v3869 = vand.u32 %v3868, 4294901760
  %v3870 = vsub.f32 %v3868, %v3869
  %v3871 = vand.u32 %v3870, 4294901760
  %3872 = vmatpush1.msra.mxu0 %v3871
  %3873 = vmatprep.subr.mxu0 0.0
  %v3874 = vand.u32 %v3530, 4294901760
  %v3875 = vsub.f32 %v3530, %v3874
  %v3876 = vand.u32 %v3875, 4294901760
  %v3877 = vsub.f32 %v3875, %v3876
  %v3878 = vand.u32 %v3877, 4294901760
  %3879 = vmatpush1.msra.mxu0 %v3878
  %3880 = vmatprep.subr.mxu0 0.0
  %v3881 = vand.u32 %v3531, 4294901760
  %v3882 = vsub.f32 %v3531, %v3881
  %v3883 = vand.u32 %v3882, 4294901760
  %v3884 = vsub.f32 %v3882, %v3883
  %v3885 = vand.u32 %v3884, 4294901760
  %3886 = vmatpush1.msra.mxu0 %v3885
  %3887 = vmatprep.subr.mxu0 0.0
  %v3888 = vand.u32 %v3532, 4294901760
  %v3889 = vsub.f32 %v3532, %v3888
  %v3890 = vand.u32 %v3889, 4294901760
  %v3891 = vsub.f32 %v3889, %v3890
  %v3892 = vand.u32 %v3891, 4294901760
  %3893 = vmatpush1.msra.mxu0 %v3892
  %3894 = vmatprep.subr.mxu0 0.0
  %v3895 = vand.u32 %v3533, 4294901760
  %v3896 = vsub.f32 %v3533, %v3895
  %v3897 = vand.u32 %v3896, 4294901760
  %v3898 = vsub.f32 %v3896, %v3897
  %v3899 = vand.u32 %v3898, 4294901760
  %3900 = vmatpush1.msra.mxu0 %v3899
  %3901 = vmatprep.subr.mxu0 0.0
  %v3902 = vand.u32 %v3534, 4294901760
  %v3903 = vsub.f32 %v3534, %v3902
  %v3904 = vand.u32 %v3903, 4294901760
  %v3905 = vsub.f32 %v3903, %v3904
  %v3906 = vand.u32 %v3905, 4294901760
  %3907 = vmatpush1.msra.mxu0 %v3906
  %3908 = vmatprep.subr.mxu0 0.0
  %v3909 = vand.u32 %v3535, 4294901760
  %v3910 = vsub.f32 %v3535, %v3909
  %v3911 = vand.u32 %v3910, 4294901760
  %v3912 = vsub.f32 %v3910, %v3911
  %v3913 = vand.u32 %v3912, 4294901760
  %3914 = vmatpush1.msra.mxu0 %v3913
  %3915 = vmatprep.subr.mxu0 0.0
  %v3916 = vand.u32 %v3536, 4294901760
  %v3917 = vsub.f32 %v3536, %v3916
  %v3918 = vand.u32 %v3917, 4294901760
  %v3919 = vsub.f32 %v3917, %v3918
  %v3920 = vand.u32 %v3919, 4294901760
  %3921 = vmatpush1.msra.mxu0 %v3920
  %3922 = vmatprep.subr.mxu0 0.0
  %v3923 = vand.u32 %v3537, 4294901760
  %v3924 = vsub.f32 %v3537, %v3923
  %v3925 = vand.u32 %v3924, 4294901760
  %v3926 = vsub.f32 %v3924, %v3925
  %v3927 = vand.u32 %v3926, 4294901760
  %3928 = vmatpush1.msra.mxu0 %v3927
  %v3929 = vand.u32 %v3587, 4294901760
  %3930 = vmatprep.mubr.f32.mxu0 %v3929
  %v3931 = vand.u32 %v3579, 4294901760
  %3932 = vmatmul.mubr.f32.gmra.mrb[0].mxu0 %v3931
  %v3933 = vpop.f32.mrb[0].mxu0
  %v3934 = vadd.f32 %v3702, %v3933
  %v3935 = vpop.f32.mrb[0].mxu0
  %3936 = vdwg.mxu0
  %3937 = vmatprep.subr.mxu0 0.0
  %v3938 = vand.u32 %v3506, 4294901760
  %v3939 = vsub.f32 %v3506, %v3938
  %3940 = vmatpush1.msra.mxu0 %v3939
  %3941 = vmatprep.subr.mxu0 0.0
  %v3942 = vand.u32 %v3507, 4294901760
  %v3943 = vsub.f32 %v3507, %v3942
  %3944 = vmatpush1.msra.mxu0 %v3943
  %3945 = vmatprep.subr.mxu0 0.0
  %v3946 = vand.u32 %v3508, 4294901760
  %v3947 = vsub.f32 %v3508, %v3946
  %3948 = vmatpush1.msra.mxu0 %v3947
  %3949 = vmatprep.subr.mxu0 0.0
  %v3950 = vand.u32 %v3509, 4294901760
  %v3951 = vsub.f32 %v3509, %v3950
  %3952 = vmatpush1.msra.mxu0 %v3951
  %3953 = vmatprep.subr.mxu0 0.0
  %v3954 = vand.u32 %v3510, 4294901760
  %v3955 = vsub.f32 %v3510, %v3954
  %3956 = vmatpush1.msra.mxu0 %v3955
  %3957 = vmatprep.subr.mxu0 0.0
  %v3958 = vand.u32 %v3511, 4294901760
  %v3959 = vsub.f32 %v3511, %v3958
  %3960 = vmatpush1.msra.mxu0 %v3959
  %3961 = vmatprep.subr.mxu0 0.0
  %v3962 = vand.u32 %v3512, 4294901760
  %v3963 = vsub.f32 %v3512, %v3962
  %3964 = vmatpush1.msra.mxu0 %v3963
  %3965 = vmatprep.subr.mxu0 0.0
  %v3966 = vand.u32 %v3513, 4294901760
  %v3967 = vsub.f32 %v3513, %v3966
  %3968 = vmatpush1.msra.mxu0 %v3967
  %3969 = vmatprep.subr.mxu0 0.0
  %v3970 = vand.u32 %v3514, 4294901760
  %v3971 = vsub.f32 %v3514, %v3970
  %3972 = vmatpush1.msra.mxu0 %v3971
  %3973 = vmatprep.subr.mxu0 0.0
  %v3974 = vand.u32 %v3515, 4294901760
  %v3975 = vsub.f32 %v3515, %v3974
  %3976 = vmatpush1.msra.mxu0 %v3975
  %3977 = vmatprep.subr.mxu0 0.0
  %v3978 = vand.u32 %v3516, 4294901760
  %v3979 = vsub.f32 %v3516, %v3978
  %3980 = vmatpush1.msra.mxu0 %v3979
  %3981 = vmatprep.subr.mxu0 0.0
  %v3982 = vand.u32 %v3517, 4294901760
  %v3983 = vsub.f32 %v3517, %v3982
  %3984 = vmatpush1.msra.mxu0 %v3983
  %3985 = vmatprep.subr.mxu0 0.0
  %v3986 = vand.u32 %v3518, 4294901760
  %v3987 = vsub.f32 %v3518, %v3986
  %3988 = vmatpush1.msra.mxu0 %v3987
  %3989 = vmatprep.subr.mxu0 0.0
  %v3990 = vand.u32 %v3519, 4294901760
  %v3991 = vsub.f32 %v3519, %v3990
  %3992 = vmatpush1.msra.mxu0 %v3991
  %3993 = vmatprep.subr.mxu0 0.0
  %v3994 = vand.u32 %v3520, 4294901760
  %v3995 = vsub.f32 %v3520, %v3994
  %3996 = vmatpush1.msra.mxu0 %v3995
  %3997 = vmatprep.subr.mxu0 0.0
  %v3998 = vand.u32 %v3521, 4294901760
  %v3999 = vsub.f32 %v3521, %v3998
  %4000 = vmatpush1.msra.mxu0 %v3999
  %4001 = vmatprep.subr.mxu0 0.0
  %v4002 = vand.u32 %v3522, 4294901760
  %v4003 = vsub.f32 %v3522, %v4002
  %4004 = vmatpush1.msra.mxu0 %v4003
  %4005 = vmatprep.subr.mxu0 0.0
  %v4006 = vand.u32 %v3523, 4294901760
  %v4007 = vsub.f32 %v3523, %v4006
  %4008 = vmatpush1.msra.mxu0 %v4007
  %4009 = vmatprep.subr.mxu0 0.0
  %v4010 = vand.u32 %v3524, 4294901760
  %v4011 = vsub.f32 %v3524, %v4010
  %4012 = vmatpush1.msra.mxu0 %v4011
  %4013 = vmatprep.subr.mxu0 0.0
  %v4014 = vand.u32 %v3525, 4294901760
  %v4015 = vsub.f32 %v3525, %v4014
  %4016 = vmatpush1.msra.mxu0 %v4015
  %4017 = vmatprep.subr.mxu0 0.0
  %v4018 = vand.u32 %v3526, 4294901760
  %v4019 = vsub.f32 %v3526, %v4018
  %4020 = vmatpush1.msra.mxu0 %v4019
  %4021 = vmatprep.subr.mxu0 0.0
  %v4022 = vand.u32 %v3527, 4294901760
  %v4023 = vsub.f32 %v3527, %v4022
  %4024 = vmatpush1.msra.mxu0 %v4023
  %4025 = vmatprep.subr.mxu0 0.0
  %v4026 = vand.u32 %v3528, 4294901760
  %v4027 = vsub.f32 %v3528, %v4026
  %4028 = vmatpush1.msra.mxu0 %v4027
  %4029 = vmatprep.subr.mxu0 0.0
  %v4030 = vand.u32 %v3529, 4294901760
  %v4031 = vsub.f32 %v3529, %v4030
  %4032 = vmatpush1.msra.mxu0 %v4031
  %4033 = vmatprep.subr.mxu0 0.0
  %v4034 = vand.u32 %v3530, 4294901760
  %v4035 = vsub.f32 %v3530, %v4034
  %4036 = vmatpush1.msra.mxu0 %v4035
  %4037 = vmatprep.subr.mxu0 0.0
  %v4038 = vand.u32 %v3531, 4294901760
  %v4039 = vsub.f32 %v3531, %v4038
  %4040 = vmatpush1.msra.mxu0 %v4039
  %4041 = vmatprep.subr.mxu0 0.0
  %v4042 = vand.u32 %v3532, 4294901760
  %v4043 = vsub.f32 %v3532, %v4042
  %4044 = vmatpush1.msra.mxu0 %v4043
  %4045 = vmatprep.subr.mxu0 0.0
  %v4046 = vand.u32 %v3533, 4294901760
  %v4047 = vsub.f32 %v3533, %v4046
  %4048 = vmatpush1.msra.mxu0 %v4047
  %4049 = vmatprep.subr.mxu0 0.0
  %v4050 = vand.u32 %v3534, 4294901760
  %v4051 = vsub.f32 %v3534, %v4050
  %4052 = vmatpush1.msra.mxu0 %v4051
  %4053 = vmatprep.subr.mxu0 0.0
  %v4054 = vand.u32 %v3535, 4294901760
  %v4055 = vsub.f32 %v3535, %v4054
  %4056 = vmatpush1.msra.mxu0 %v4055
  %4057 = vmatprep.subr.mxu0 0.0
  %v4058 = vand.u32 %v3536, 4294901760
  %v4059 = vsub.f32 %v3536, %v4058
  %4060 = vmatpush1.msra.mxu0 %v4059
  %4061 = vmatprep.subr.mxu0 0.0
  %v4062 = vand.u32 %v3537, 4294901760
  %v4063 = vsub.f32 %v3537, %v4062
  %4064 = vmatpush1.msra.mxu0 %v4063
  %v4065 = vand.u32 %v3587, 4294901760
  %v4066 = vsub.f32 %v3587, %v4065
  %4067 = vmatprep.mubr.f32.mxu0 %v4066
  %v4068 = vand.u32 %v3579, 4294901760
  %v4069 = vsub.f32 %v3579, %v4068
  %4070 = vmatmul.mubr.f32.gmra.mrb[0].mxu0 %v4069
  %v4071 = vpop.f32.mrb[0].mxu0
  %v4072 = vadd.f32 %v3934, %v4071
  %v4073 = vpop.f32.mrb[0].mxu0
  %4074 = vdwg.mxu0
  %4075 = vmatprep.subr.mxu0 0.0
  %v4076 = vand.u32 %v3506, 4294901760
  %4077 = vmatpush1.msra.mxu0 %v4076
  %4078 = vmatprep.subr.mxu0 0.0
  %v4079 = vand.u32 %v3507, 4294901760
  %4080 = vmatpush1.msra.mxu0 %v4079
  %4081 = vmatprep.subr.mxu0 0.0
  %v4082 = vand.u32 %v3508, 4294901760
  %4083 = vmatpush1.msra.mxu0 %v4082
  %4084 = vmatprep.subr.mxu0 0.0
  %v4085 = vand.u32 %v3509, 4294901760
  %4086 = vmatpush1.msra.mxu0 %v4085
  %4087 = vmatprep.subr.mxu0 0.0
  %v4088 = vand.u32 %v3510, 4294901760
  %4089 = vmatpush1.msra.mxu0 %v4088
  %4090 = vmatprep.subr.mxu0 0.0
  %v4091 = vand.u32 %v3511, 4294901760
  %4092 = vmatpush1.msra.mxu0 %v4091
  %4093 = vmatprep.subr.mxu0 0.0
  %v4094 = vand.u32 %v3512, 4294901760
  %4095 = vmatpush1.msra.mxu0 %v4094
  %4096 = vmatprep.subr.mxu0 0.0
  %v4097 = vand.u32 %v3513, 4294901760
  %4098 = vmatpush1.msra.mxu0 %v4097
  %4099 = vmatprep.subr.mxu0 0.0
  %v4100 = vand.u32 %v3514, 4294901760
  %4101 = vmatpush1.msra.mxu0 %v4100
  %4102 = vmatprep.subr.mxu0 0.0
  %v4103 = vand.u32 %v3515, 4294901760
  %4104 = vmatpush1.msra.mxu0 %v4103
  %4105 = vmatprep.subr.mxu0 0.0
  %v4106 = vand.u32 %v3516, 4294901760
  %4107 = vmatpush1.msra.mxu0 %v4106
  %4108 = vmatprep.subr.mxu0 0.0
  %v4109 = vand.u32 %v3517, 4294901760
  %4110 = vmatpush1.msra.mxu0 %v4109
  %4111 = vmatprep.subr.mxu0 0.0
  %v4112 = vand.u32 %v3518, 4294901760
  %4113 = vmatpush1.msra.mxu0 %v4112
  %4114 = vmatprep.subr.mxu0 0.0
  %v4115 = vand.u32 %v3519, 4294901760
  %4116 = vmatpush1.msra.mxu0 %v4115
  %4117 = vmatprep.subr.mxu0 0.0
  %v4118 = vand.u32 %v3520, 4294901760
  %4119 = vmatpush1.msra.mxu0 %v4118
  %4120 = vmatprep.subr.mxu0 0.0
  %v4121 = vand.u32 %v3521, 4294901760
  %4122 = vmatpush1.msra.mxu0 %v4121
  %4123 = vmatprep.subr.mxu0 0.0
  %v4124 = vand.u32 %v3522, 4294901760
  %4125 = vmatpush1.msra.mxu0 %v4124
  %4126 = vmatprep.subr.mxu0 0.0
  %v4127 = vand.u32 %v3523, 4294901760
  %4128 = vmatpush1.msra.mxu0 %v4127
  %4129 = vmatprep.subr.mxu0 0.0
  %v4130 = vand.u32 %v3524, 4294901760
  %4131 = vmatpush1.msra.mxu0 %v4130
  %4132 = vmatprep.subr.mxu0 0.0
  %v4133 = vand.u32 %v3525, 4294901760
  %4134 = vmatpush1.msra.mxu0 %v4133
  %4135 = vmatprep.subr.mxu0 0.0
  %v4136 = vand.u32 %v3526, 4294901760
  %4137 = vmatpush1.msra.mxu0 %v4136
  %4138 = vmatprep.subr.mxu0 0.0
  %v4139 = vand.u32 %v3527, 4294901760
  %4140 = vmatpush1.msra.mxu0 %v4139
  %4141 = vmatprep.subr.mxu0 0.0
  %v4142 = vand.u32 %v3528, 4294901760
  %4143 = vmatpush1.msra.mxu0 %v4142
  %4144 = vmatprep.subr.mxu0 0.0
  %v4145 = vand.u32 %v3529, 4294901760
  %4146 = vmatpush1.msra.mxu0 %v4145
  %4147 = vmatprep.subr.mxu0 0.0
  %v4148 = vand.u32 %v3530, 4294901760
  %4149 = vmatpush1.msra.mxu0 %v4148
  %4150 = vmatprep.subr.mxu0 0.0
  %v4151 = vand.u32 %v3531, 4294901760
  %4152 = vmatpush1.msra.mxu0 %v4151
  %4153 = vmatprep.subr.mxu0 0.0
  %v4154 = vand.u32 %v3532, 4294901760
  %4155 = vmatpush1.msra.mxu0 %v4154
  %4156 = vmatprep.subr.mxu0 0.0
  %v4157 = vand.u32 %v3533, 4294901760
  %4158 = vmatpush1.msra.mxu0 %v4157
  %4159 = vmatprep.subr.mxu0 0.0
  %v4160 = vand.u32 %v3534, 4294901760
  %4161 = vmatpush1.msra.mxu0 %v4160
  %4162 = vmatprep.subr.mxu0 0.0
  %v4163 = vand.u32 %v3535, 4294901760
  %4164 = vmatpush1.msra.mxu0 %v4163
  %4165 = vmatprep.subr.mxu0 0.0
  %v4166 = vand.u32 %v3536, 4294901760
  %4167 = vmatpush1.msra.mxu0 %v4166
  %4168 = vmatprep.subr.mxu0 0.0
  %v4169 = vand.u32 %v3537, 4294901760
  %4170 = vmatpush1.msra.mxu0 %v4169
  %v4171 = vand.u32 %v3587, 4294901760
  %v4172 = vsub.f32 %v3587, %v4171
  %v4173 = vand.u32 %v4172, 4294901760
  %4174 = vmatprep.mubr.f32.mxu0 %v4173
  %v4175 = vand.u32 %v3579, 4294901760
  %v4176 = vsub.f32 %v3579, %v4175
  %v4177 = vand.u32 %v4176, 4294901760
  %4178 = vmatmul.mubr.f32.gmra.mrb[0].mxu0 %v4177
  %v4179 = vpop.f32.mrb[0].mxu0
  %v4180 = vadd.f32 %v4072, %v4179
  %v4181 = vpop.f32.mrb[0].mxu0
  %4182 = vdwg.mxu0
  %4183 = vmatprep.subr.mxu0 0.0
  %v4184 = vand.u32 %v3506, 4294901760
  %v4185 = vsub.f32 %v3506, %v4184
  %v4186 = vand.u32 %v4185, 4294901760
  %4187 = vmatpush1.msra.mxu0 %v4186
  %4188 = vmatprep.subr.mxu0 0.0
  %v4189 = vand.u32 %v3507, 4294901760
  %v4190 = vsub.f32 %v3507, %v4189
  %v4191 = vand.u32 %v4190, 4294901760
  %4192 = vmatpush1.msra.mxu0 %v4191
  %4193 = vmatprep.subr.mxu0 0.0
  %v4194 = vand.u32 %v3508, 4294901760
  %v4195 = vsub.f32 %v3508, %v4194
  %v4196 = vand.u32 %v4195, 4294901760
  %4197 = vmatpush1.msra.mxu0 %v4196
  %4198 = vmatprep.subr.mxu0 0.0
  %v4199 = vand.u32 %v3509, 4294901760
  %v4200 = vsub.f32 %v3509, %v4199
  %v4201 = vand.u32 %v4200, 4294901760
  %4202 = vmatpush1.msra.mxu0 %v4201
  %4203 = vmatprep.subr.mxu0 0.0
  %v4204 = vand.u32 %v3510, 4294901760
  %v4205 = vsub.f32 %v3510, %v4204
  %v4206 = vand.u32 %v4205, 4294901760
  %4207 = vmatpush1.msra.mxu0 %v4206
  %4208 = vmatprep.subr.mxu0 0.0
  %v4209 = vand.u32 %v3511, 4294901760
  %v4210 = vsub.f32 %v3511, %v4209
  %v4211 = vand.u32 %v4210, 4294901760
  %4212 = vmatpush1.msra.mxu0 %v4211
  %4213 = vmatprep.subr.mxu0 0.0
  %v4214 = vand.u32 %v3512, 4294901760
  %v4215 = vsub.f32 %v3512, %v4214
  %v4216 = vand.u32 %v4215, 4294901760
  %4217 = vmatpush1.msra.mxu0 %v4216
  %4218 = vmatprep.subr.mxu0 0.0
  %v4219 = vand.u32 %v3513, 4294901760
  %v4220 = vsub.f32 %v3513, %v4219
  %v4221 = vand.u32 %v4220, 4294901760
  %4222 = vmatpush1.msra.mxu0 %v4221
  %4223 = vmatprep.subr.mxu0 0.0
  %v4224 = vand.u32 %v3514, 4294901760
  %v4225 = vsub.f32 %v3514, %v4224
  %v4226 = vand.u32 %v4225, 4294901760
  %4227 = vmatpush1.msra.mxu0 %v4226
  %4228 = vmatprep.subr.mxu0 0.0
  %v4229 = vand.u32 %v3515, 4294901760
  %v4230 = vsub.f32 %v3515, %v4229
  %v4231 = vand.u32 %v4230, 4294901760
  %4232 = vmatpush1.msra.mxu0 %v4231
  %4233 = vmatprep.subr.mxu0 0.0
  %v4234 = vand.u32 %v3516, 4294901760
  %v4235 = vsub.f32 %v3516, %v4234
  %v4236 = vand.u32 %v4235, 4294901760
  %4237 = vmatpush1.msra.mxu0 %v4236
  %4238 = vmatprep.subr.mxu0 0.0
  %v4239 = vand.u32 %v3517, 4294901760
  %v4240 = vsub.f32 %v3517, %v4239
  %v4241 = vand.u32 %v4240, 4294901760
  %4242 = vmatpush1.msra.mxu0 %v4241
  %4243 = vmatprep.subr.mxu0 0.0
  %v4244 = vand.u32 %v3518, 4294901760
  %v4245 = vsub.f32 %v3518, %v4244
  %v4246 = vand.u32 %v4245, 4294901760
  %4247 = vmatpush1.msra.mxu0 %v4246
  %4248 = vmatprep.subr.mxu0 0.0
  %v4249 = vand.u32 %v3519, 4294901760
  %v4250 = vsub.f32 %v3519, %v4249
  %v4251 = vand.u32 %v4250, 4294901760
  %4252 = vmatpush1.msra.mxu0 %v4251
  %4253 = vmatprep.subr.mxu0 0.0
  %v4254 = vand.u32 %v3520, 4294901760
  %v4255 = vsub.f32 %v3520, %v4254
  %v4256 = vand.u32 %v4255, 4294901760
  %4257 = vmatpush1.msra.mxu0 %v4256
  %4258 = vmatprep.subr.mxu0 0.0
  %v4259 = vand.u32 %v3521, 4294901760
  %v4260 = vsub.f32 %v3521, %v4259
  %v4261 = vand.u32 %v4260, 4294901760
  %4262 = vmatpush1.msra.mxu0 %v4261
  %4263 = vmatprep.subr.mxu0 0.0
  %v4264 = vand.u32 %v3522, 4294901760
  %v4265 = vsub.f32 %v3522, %v4264
  %v4266 = vand.u32 %v4265, 4294901760
  %4267 = vmatpush1.msra.mxu0 %v4266
  %4268 = vmatprep.subr.mxu0 0.0
  %v4269 = vand.u32 %v3523, 4294901760
  %v4270 = vsub.f32 %v3523, %v4269
  %v4271 = vand.u32 %v4270, 4294901760
  %4272 = vmatpush1.msra.mxu0 %v4271
  %4273 = vmatprep.subr.mxu0 0.0
  %v4274 = vand.u32 %v3524, 4294901760
  %v4275 = vsub.f32 %v3524, %v4274
  %v4276 = vand.u32 %v4275, 4294901760
  %4277 = vmatpush1.msra.mxu0 %v4276
  %4278 = vmatprep.subr.mxu0 0.0
  %v4279 = vand.u32 %v3525, 4294901760
  %v4280 = vsub.f32 %v3525, %v4279
  %v4281 = vand.u32 %v4280, 4294901760
  %4282 = vmatpush1.msra.mxu0 %v4281
  %4283 = vmatprep.subr.mxu0 0.0
  %v4284 = vand.u32 %v3526, 4294901760
  %v4285 = vsub.f32 %v3526, %v4284
  %v4286 = vand.u32 %v4285, 4294901760
  %4287 = vmatpush1.msra.mxu0 %v4286
  %4288 = vmatprep.subr.mxu0 0.0
  %v4289 = vand.u32 %v3527, 4294901760
  %v4290 = vsub.f32 %v3527, %v4289
  %v4291 = vand.u32 %v4290, 4294901760
  %4292 = vmatpush1.msra.mxu0 %v4291
  %4293 = vmatprep.subr.mxu0 0.0
  %v4294 = vand.u32 %v3528, 4294901760
  %v4295 = vsub.f32 %v3528, %v4294
  %v4296 = vand.u32 %v4295, 4294901760
  %4297 = vmatpush1.msra.mxu0 %v4296
  %4298 = vmatprep.subr.mxu0 0.0
  %v4299 = vand.u32 %v3529, 4294901760
  %v4300 = vsub.f32 %v3529, %v4299
  %v4301 = vand.u32 %v4300, 4294901760
  %4302 = vmatpush1.msra.mxu0 %v4301
  %4303 = vmatprep.subr.mxu0 0.0
  %v4304 = vand.u32 %v3530, 4294901760
  %v4305 = vsub.f32 %v3530, %v4304
  %v4306 = vand.u32 %v4305, 4294901760
  %4307 = vmatpush1.msra.mxu0 %v4306
  %4308 = vmatprep.subr.mxu0 0.0
  %v4309 = vand.u32 %v3531, 4294901760
  %v4310 = vsub.f32 %v3531, %v4309
  %v4311 = vand.u32 %v4310, 4294901760
  %4312 = vmatpush1.msra.mxu0 %v4311
  %4313 = vmatprep.subr.mxu0 0.0
  %v4314 = vand.u32 %v3532, 4294901760
  %v4315 = vsub.f32 %v3532, %v4314
  %v4316 = vand.u32 %v4315, 4294901760
  %4317 = vmatpush1.msra.mxu0 %v4316
  %4318 = vmatprep.subr.mxu0 0.0
  %v4319 = vand.u32 %v3533, 4294901760
  %v4320 = vsub.f32 %v3533, %v4319
  %v4321 = vand.u32 %v4320, 4294901760
  %4322 = vmatpush1.msra.mxu0 %v4321
  %4323 = vmatprep.subr.mxu0 0.0
  %v4324 = vand.u32 %v3534, 4294901760
  %v4325 = vsub.f32 %v3534, %v4324
  %v4326 = vand.u32 %v4325, 4294901760
  %4327 = vmatpush1.msra.mxu0 %v4326
  %4328 = vmatprep.subr.mxu0 0.0
  %v4329 = vand.u32 %v3535, 4294901760
  %v4330 = vsub.f32 %v3535, %v4329
  %v4331 = vand.u32 %v4330, 4294901760
  %4332 = vmatpush1.msra.mxu0 %v4331
  %4333 = vmatprep.subr.mxu0 0.0
  %v4334 = vand.u32 %v3536, 4294901760
  %v4335 = vsub.f32 %v3536, %v4334
  %v4336 = vand.u32 %v4335, 4294901760
  %4337 = vmatpush1.msra.mxu0 %v4336
  %4338 = vmatprep.subr.mxu0 0.0
  %v4339 = vand.u32 %v3537, 4294901760
  %v4340 = vsub.f32 %v3537, %v4339
  %v4341 = vand.u32 %v4340, 4294901760
  %4342 = vmatpush1.msra.mxu0 %v4341
  %v4343 = vand.u32 %v3587, 4294901760
  %4344 = vmatprep.mubr.f32.mxu0 %v4343
  %v4345 = vand.u32 %v3579, 4294901760
  %4346 = vmatmul.mubr.f32.gmra.mrb[0].mxu0 %v4345
  %v4347 = vpop.f32.mrb[0].mxu0
  %v4348 = vadd.f32 %v4180, %v4347
  %v4349 = vpop.f32.mrb[0].mxu0
  %4350 = vdwg.mxu0
  %4351 = vmatprep.subr.mxu0 0.0
  %v4352 = vand.u32 %v3506, 4294901760
  %4353 = vmatpush1.msra.mxu0 %v4352
  %4354 = vmatprep.subr.mxu0 0.0
  %v4355 = vand.u32 %v3507, 4294901760
  %4356 = vmatpush1.msra.mxu0 %v4355
  %4357 = vmatprep.subr.mxu0 0.0
  %v4358 = vand.u32 %v3508, 4294901760
  %4359 = vmatpush1.msra.mxu0 %v4358
  %4360 = vmatprep.subr.mxu0 0.0
  %v4361 = vand.u32 %v3509, 4294901760
  %4362 = vmatpush1.msra.mxu0 %v4361
  %4363 = vmatprep.subr.mxu0 0.0
  %v4364 = vand.u32 %v3510, 4294901760
  %4365 = vmatpush1.msra.mxu0 %v4364
  %4366 = vmatprep.subr.mxu0 0.0
  %v4367 = vand.u32 %v3511, 4294901760
  %4368 = vmatpush1.msra.mxu0 %v4367
  %4369 = vmatprep.subr.mxu0 0.0
  %v4370 = vand.u32 %v3512, 4294901760
  %4371 = vmatpush1.msra.mxu0 %v4370
  %4372 = vmatprep.subr.mxu0 0.0
  %v4373 = vand.u32 %v3513, 4294901760
  %4374 = vmatpush1.msra.mxu0 %v4373
  %4375 = vmatprep.subr.mxu0 0.0
  %v4376 = vand.u32 %v3514, 4294901760
  %4377 = vmatpush1.msra.mxu0 %v4376
  %4378 = vmatprep.subr.mxu0 0.0
  %v4379 = vand.u32 %v3515, 4294901760
  %4380 = vmatpush1.msra.mxu0 %v4379
  %4381 = vmatprep.subr.mxu0 0.0
  %v4382 = vand.u32 %v3516, 4294901760
  %4383 = vmatpush1.msra.mxu0 %v4382
  %4384 = vmatprep.subr.mxu0 0.0
  %v4385 = vand.u32 %v3517, 4294901760
  %4386 = vmatpush1.msra.mxu0 %v4385
  %4387 = vmatprep.subr.mxu0 0.0
  %v4388 = vand.u32 %v3518, 4294901760
  %4389 = vmatpush1.msra.mxu0 %v4388
  %4390 = vmatprep.subr.mxu0 0.0
  %v4391 = vand.u32 %v3519, 4294901760
  %4392 = vmatpush1.msra.mxu0 %v4391
  %4393 = vmatprep.subr.mxu0 0.0
  %v4394 = vand.u32 %v3520, 4294901760
  %4395 = vmatpush1.msra.mxu0 %v4394
  %4396 = vmatprep.subr.mxu0 0.0
  %v4397 = vand.u32 %v3521, 4294901760
  %4398 = vmatpush1.msra.mxu0 %v4397
  %4399 = vmatprep.subr.mxu0 0.0
  %v4400 = vand.u32 %v3522, 4294901760
  %4401 = vmatpush1.msra.mxu0 %v4400
  %4402 = vmatprep.subr.mxu0 0.0
  %v4403 = vand.u32 %v3523, 4294901760
  %4404 = vmatpush1.msra.mxu0 %v4403
  %4405 = vmatprep.subr.mxu0 0.0
  %v4406 = vand.u32 %v3524, 4294901760
  %4407 = vmatpush1.msra.mxu0 %v4406
  %4408 = vmatprep.subr.mxu0 0.0
  %v4409 = vand.u32 %v3525, 4294901760
  %4410 = vmatpush1.msra.mxu0 %v4409
  %4411 = vmatprep.subr.mxu0 0.0
  %v4412 = vand.u32 %v3526, 4294901760
  %4413 = vmatpush1.msra.mxu0 %v4412
  %4414 = vmatprep.subr.mxu0 0.0
  %v4415 = vand.u32 %v3527, 4294901760
  %4416 = vmatpush1.msra.mxu0 %v4415
  %4417 = vmatprep.subr.mxu0 0.0
  %v4418 = vand.u32 %v3528, 4294901760
  %4419 = vmatpush1.msra.mxu0 %v4418
  %4420 = vmatprep.subr.mxu0 0.0
  %v4421 = vand.u32 %v3529, 4294901760
  %4422 = vmatpush1.msra.mxu0 %v4421
  %4423 = vmatprep.subr.mxu0 0.0
  %v4424 = vand.u32 %v3530, 4294901760
  %4425 = vmatpush1.msra.mxu0 %v4424
  %4426 = vmatprep.subr.mxu0 0.0
  %v4427 = vand.u32 %v3531, 4294901760
  %4428 = vmatpush1.msra.mxu0 %v4427
  %4429 = vmatprep.subr.mxu0 0.0
  %v4430 = vand.u32 %v3532, 4294901760
  %4431 = vmatpush1.msra.mxu0 %v4430
  %4432 = vmatprep.subr.mxu0 0.0
  %v4433 = vand.u32 %v3533, 4294901760
  %4434 = vmatpush1.msra.mxu0 %v4433
  %4435 = vmatprep.subr.mxu0 0.0
  %v4436 = vand.u32 %v3534, 4294901760
  %4437 = vmatpush1.msra.mxu0 %v4436
  %4438 = vmatprep.subr.mxu0 0.0
  %v4439 = vand.u32 %v3535, 4294901760
  %4440 = vmatpush1.msra.mxu0 %v4439
  %4441 = vmatprep.subr.mxu0 0.0
  %v4442 = vand.u32 %v3536, 4294901760
  %4443 = vmatpush1.msra.mxu0 %v4442
  %4444 = vmatprep.subr.mxu0 0.0
  %v4445 = vand.u32 %v3537, 4294901760
  %4446 = vmatpush1.msra.mxu0 %v4445
  %v4447 = vand.u32 %v3587, 4294901760
  %4448 = vmatprep.mubr.f32.mxu0 %v4447
  %v4449 = vand.u32 %v3579, 4294901760
  %4450 = vmatmul.mubr.f32.gmra.mrb[0].mxu0 %v4449
  %v4451 = vpop.f32.mrb[0].mxu0
  %v4452 = vadd.f32 %v4348, %v4451
  %v4453 = vpop.f32.mrb[0].mxu0
  %4454 = vdwg.mxu0
  %4455 = vmatprep.subr.mxu0 0.0
  %v4456 = vand.u32 %v3538, 4294901760
  %4457 = vmatpush1.msra.mxu0 %v4456
  %4458 = vmatprep.subr.mxu0 0.0
  %v4459 = vand.u32 %v3539, 4294901760
  %4460 = vmatpush1.msra.mxu0 %v4459
  %4461 = vmatprep.subr.mxu0 0.0
  %v4462 = vand.u32 %v3540, 4294901760
  %4463 = vmatpush1.msra.mxu0 %v4462
  %4464 = vmatprep.subr.mxu0 0.0
  %v4465 = vand.u32 %v3541, 4294901760
  %4466 = vmatpush1.msra.mxu0 %v4465
  %4467 = vmatprep.subr.mxu0 0.0
  %v4468 = vand.u32 %v3542, 4294901760
  %4469 = vmatpush1.msra.mxu0 %v4468
  %4470 = vmatprep.subr.mxu0 0.0
  %v4471 = vand.u32 %v3543, 4294901760
  %4472 = vmatpush1.msra.mxu0 %v4471
  %4473 = vmatprep.subr.mxu0 0.0
  %v4474 = vand.u32 %v3544, 4294901760
  %4475 = vmatpush1.msra.mxu0 %v4474
  %4476 = vmatprep.subr.mxu0 0.0
  %v4477 = vand.u32 %v3545, 4294901760
  %4478 = vmatpush1.msra.mxu0 %v4477
  %4479 = vmatprep.subr.mxu0 0.0
  %v4480 = vand.u32 %v3546, 4294901760
  %4481 = vmatpush1.msra.mxu0 %v4480
  %4482 = vmatprep.subr.mxu0 0.0
  %v4483 = vand.u32 %v3547, 4294901760
  %4484 = vmatpush1.msra.mxu0 %v4483
  %4485 = vmatprep.subr.mxu0 0.0
  %v4486 = vand.u32 %v3548, 4294901760
  %4487 = vmatpush1.msra.mxu0 %v4486
  %4488 = vmatprep.subr.mxu0 0.0
  %v4489 = vand.u32 %v3549, 4294901760
  %4490 = vmatpush1.msra.mxu0 %v4489
  %4491 = vmatprep.subr.mxu0 0.0
  %v4492 = vand.u32 %v3550, 4294901760
  %4493 = vmatpush1.msra.mxu0 %v4492
  %4494 = vmatprep.subr.mxu0 0.0
  %v4495 = vand.u32 %v3551, 4294901760
  %4496 = vmatpush1.msra.mxu0 %v4495
  %4497 = vmatprep.subr.mxu0 0.0
  %v4498 = vand.u32 %v3552, 4294901760
  %4499 = vmatpush1.msra.mxu0 %v4498
  %4500 = vmatprep.subr.mxu0 0.0
  %v4501 = vand.u32 %v3553, 4294901760
  %4502 = vmatpush1.msra.mxu0 %v4501
  %4503 = vmatprep.subr.mxu0 0.0
  %v4504 = vand.u32 %v3554, 4294901760
  %4505 = vmatpush1.msra.mxu0 %v4504
  %4506 = vmatprep.subr.mxu0 0.0
  %v4507 = vand.u32 %v3555, 4294901760
  %4508 = vmatpush1.msra.mxu0 %v4507
  %4509 = vmatprep.subr.mxu0 0.0
  %v4510 = vand.u32 %v3556, 4294901760
  %4511 = vmatpush1.msra.mxu0 %v4510
  %4512 = vmatprep.subr.mxu0 0.0
  %v4513 = vand.u32 %v3557, 4294901760
  %4514 = vmatpush1.msra.mxu0 %v4513
  %4515 = vmatprep.subr.mxu0 0.0
  %v4516 = vand.u32 %v3558, 4294901760
  %4517 = vmatpush1.msra.mxu0 %v4516
  %4518 = vmatprep.subr.mxu0 0.0
  %v4519 = vand.u32 %v3559, 4294901760
  %4520 = vmatpush1.msra.mxu0 %v4519
  %4521 = vmatprep.subr.mxu0 0.0
  %v4522 = vand.u32 %v3560, 4294901760
  %4523 = vmatpush1.msra.mxu0 %v4522
  %4524 = vmatprep.subr.mxu0 0.0
  %v4525 = vand.u32 %v3561, 4294901760
  %4526 = vmatpush1.msra.mxu0 %v4525
  %4527 = vmatprep.subr.mxu0 0.0
  %v4528 = vand.u32 %v3562, 4294901760
  %4529 = vmatpush1.msra.mxu0 %v4528
  %4530 = vmatprep.subr.mxu0 0.0
  %v4531 = vand.u32 %v3563, 4294901760
  %4532 = vmatpush1.msra.mxu0 %v4531
  %4533 = vmatprep.subr.mxu0 0.0
  %v4534 = vand.u32 %v3564, 4294901760
  %4535 = vmatpush1.msra.mxu0 %v4534
  %4536 = vmatprep.subr.mxu0 0.0
  %v4537 = vand.u32 %v3565, 4294901760
  %4538 = vmatpush1.msra.mxu0 %v4537
  %4539 = vmatprep.subr.mxu0 0.0
  %v4540 = vand.u32 %v3566, 4294901760
  %4541 = vmatpush1.msra.mxu0 %v4540
  %4542 = vmatprep.subr.mxu0 0.0
  %v4543 = vand.u32 %v3567, 4294901760
  %4544 = vmatpush1.msra.mxu0 %v4543
  %4545 = vmatprep.subr.mxu0 0.0
  %v4546 = vand.u32 %v3568, 4294901760
  %4547 = vmatpush1.msra.mxu0 %v4546
  %4548 = vmatprep.subr.mxu0 0.0
  %v4549 = vand.u32 %v3569, 4294901760
  %4550 = vmatpush1.msra.mxu0 %v4549
  %v4551 = vand.u32 %v3588, 4294901760
  %v4552 = vsub.f32 %v3588, %v4551
  %v4553 = vand.u32 %v4552, 4294901760
  %v4554 = vsub.f32 %v4552, %v4553
  %v4555 = vand.u32 %v4554, 4294901760
  %4556 = vmatprep.mubr.f32.mxu0 %v4555
  %v4557 = vand.u32 %v3586, 4294901760
  %v4558 = vsub.f32 %v3586, %v4557
  %v4559 = vand.u32 %v4558, 4294901760
  %v4560 = vsub.f32 %v4558, %v4559
  %v4561 = vand.u32 %v4560, 4294901760
  %4562 = vmatmul.mubr.f32.gmra.mrb[0].mxu0 %v4561
  %v4563 = vpop.f32.mrb[0].mxu0
  %v4564 = vadd.f32 %v4452, %v4563
  %v4565 = vpop.f32.mrb[0].mxu0
  %4566 = vdwg.mxu0
  %4567 = vmatprep.subr.mxu0 0.0
  %v4568 = vand.u32 %v3538, 4294901760
  %v4569 = vsub.f32 %v3538, %v4568
  %v4570 = vand.u32 %v4569, 4294901760
  %v4571 = vsub.f32 %v4569, %v4570
  %v4572 = vand.u32 %v4571, 4294901760
  %4573 = vmatpush1.msra.mxu0 %v4572
  %4574 = vmatprep.subr.mxu0 0.0
  %v4575 = vand.u32 %v3539, 4294901760
  %v4576 = vsub.f32 %v3539, %v4575
  %v4577 = vand.u32 %v4576, 4294901760
  %v4578 = vsub.f32 %v4576, %v4577
  %v4579 = vand.u32 %v4578, 4294901760
  %4580 = vmatpush1.msra.mxu0 %v4579
  %4581 = vmatprep.subr.mxu0 0.0
  %v4582 = vand.u32 %v3540, 4294901760
  %v4583 = vsub.f32 %v3540, %v4582
  %v4584 = vand.u32 %v4583, 4294901760
  %v4585 = vsub.f32 %v4583, %v4584
  %v4586 = vand.u32 %v4585, 4294901760
  %4587 = vmatpush1.msra.mxu0 %v4586
  %4588 = vmatprep.subr.mxu0 0.0
  %v4589 = vand.u32 %v3541, 4294901760
  %v4590 = vsub.f32 %v3541, %v4589
  %v4591 = vand.u32 %v4590, 4294901760
  %v4592 = vsub.f32 %v4590, %v4591
  %v4593 = vand.u32 %v4592, 4294901760
  %4594 = vmatpush1.msra.mxu0 %v4593
  %4595 = vmatprep.subr.mxu0 0.0
  %v4596 = vand.u32 %v3542, 4294901760
  %v4597 = vsub.f32 %v3542, %v4596
  %v4598 = vand.u32 %v4597, 4294901760
  %v4599 = vsub.f32 %v4597, %v4598
  %v4600 = vand.u32 %v4599, 4294901760
  %4601 = vmatpush1.msra.mxu0 %v4600
  %4602 = vmatprep.subr.mxu0 0.0
  %v4603 = vand.u32 %v3543, 4294901760
  %v4604 = vsub.f32 %v3543, %v4603
  %v4605 = vand.u32 %v4604, 4294901760
  %v4606 = vsub.f32 %v4604, %v4605
  %v4607 = vand.u32 %v4606, 4294901760
  %4608 = vmatpush1.msra.mxu0 %v4607
  %4609 = vmatprep.subr.mxu0 0.0
  %v4610 = vand.u32 %v3544, 4294901760
  %v4611 = vsub.f32 %v3544, %v4610
  %v4612 = vand.u32 %v4611, 4294901760
  %v4613 = vsub.f32 %v4611, %v4612
  %v4614 = vand.u32 %v4613, 4294901760
  %4615 = vmatpush1.msra.mxu0 %v4614
  %4616 = vmatprep.subr.mxu0 0.0
  %v4617 = vand.u32 %v3545, 4294901760
  %v4618 = vsub.f32 %v3545, %v4617
  %v4619 = vand.u32 %v4618, 4294901760
  %v4620 = vsub.f32 %v4618, %v4619
  %v4621 = vand.u32 %v4620, 4294901760
  %4622 = vmatpush1.msra.mxu0 %v4621
  %4623 = vmatprep.subr.mxu0 0.0
  %v4624 = vand.u32 %v3546, 4294901760
  %v4625 = vsub.f32 %v3546, %v4624
  %v4626 = vand.u32 %v4625, 4294901760
  %v4627 = vsub.f32 %v4625, %v4626
  %v4628 = vand.u32 %v4627, 4294901760
  %4629 = vmatpush1.msra.mxu0 %v4628
  %4630 = vmatprep.subr.mxu0 0.0
  %v4631 = vand.u32 %v3547, 4294901760
  %v4632 = vsub.f32 %v3547, %v4631
  %v4633 = vand.u32 %v4632, 4294901760
  %v4634 = vsub.f32 %v4632, %v4633
  %v4635 = vand.u32 %v4634, 4294901760
  %4636 = vmatpush1.msra.mxu0 %v4635
  %4637 = vmatprep.subr.mxu0 0.0
  %v4638 = vand.u32 %v3548, 4294901760
  %v4639 = vsub.f32 %v3548, %v4638
  %v4640 = vand.u32 %v4639, 4294901760
  %v4641 = vsub.f32 %v4639, %v4640
  %v4642 = vand.u32 %v4641, 4294901760
  %4643 = vmatpush1.msra.mxu0 %v4642
  %4644 = vmatprep.subr.mxu0 0.0
  %v4645 = vand.u32 %v3549, 4294901760
  %v4646 = vsub.f32 %v3549, %v4645
  %v4647 = vand.u32 %v4646, 4294901760
  %v4648 = vsub.f32 %v4646, %v4647
  %v4649 = vand.u32 %v4648, 4294901760
  %4650 = vmatpush1.msra.mxu0 %v4649
  %4651 = vmatprep.subr.mxu0 0.0
  %v4652 = vand.u32 %v3550, 4294901760
  %v4653 = vsub.f32 %v3550, %v4652
  %v4654 = vand.u32 %v4653, 4294901760
  %v4655 = vsub.f32 %v4653, %v4654
  %v4656 = vand.u32 %v4655, 4294901760
  %4657 = vmatpush1.msra.mxu0 %v4656
  %4658 = vmatprep.subr.mxu0 0.0
  %v4659 = vand.u32 %v3551, 4294901760
  %v4660 = vsub.f32 %v3551, %v4659
  %v4661 = vand.u32 %v4660, 4294901760
  %v4662 = vsub.f32 %v4660, %v4661
  %v4663 = vand.u32 %v4662, 4294901760
  %4664 = vmatpush1.msra.mxu0 %v4663
  %4665 = vmatprep.subr.mxu0 0.0
  %v4666 = vand.u32 %v3552, 4294901760
  %v4667 = vsub.f32 %v3552, %v4666
  %v4668 = vand.u32 %v4667, 4294901760
  %v4669 = vsub.f32 %v4667, %v4668
  %v4670 = vand.u32 %v4669, 4294901760
  %4671 = vmatpush1.msra.mxu0 %v4670
  %4672 = vmatprep.subr.mxu0 0.0
  %v4673 = vand.u32 %v3553, 4294901760
  %v4674 = vsub.f32 %v3553, %v4673
  %v4675 = vand.u32 %v4674, 4294901760
  %v4676 = vsub.f32 %v4674, %v4675
  %v4677 = vand.u32 %v4676, 4294901760
  %4678 = vmatpush1.msra.mxu0 %v4677
  %4679 = vmatprep.subr.mxu0 0.0
  %v4680 = vand.u32 %v3554, 4294901760
  %v4681 = vsub.f32 %v3554, %v4680
  %v4682 = vand.u32 %v4681, 4294901760
  %v4683 = vsub.f32 %v4681, %v4682
  %v4684 = vand.u32 %v4683, 4294901760
  %4685 = vmatpush1.msra.mxu0 %v4684
  %4686 = vmatprep.subr.mxu0 0.0
  %v4687 = vand.u32 %v3555, 4294901760
  %v4688 = vsub.f32 %v3555, %v4687
  %v4689 = vand.u32 %v4688, 4294901760
  %v4690 = vsub.f32 %v4688, %v4689
  %v4691 = vand.u32 %v4690, 4294901760
  %4692 = vmatpush1.msra.mxu0 %v4691
  %4693 = vmatprep.subr.mxu0 0.0
  %v4694 = vand.u32 %v3556, 4294901760
  %v4695 = vsub.f32 %v3556, %v4694
  %v4696 = vand.u32 %v4695, 4294901760
  %v4697 = vsub.f32 %v4695, %v4696
  %v4698 = vand.u32 %v4697, 4294901760
  %4699 = vmatpush1.msra.mxu0 %v4698
  %4700 = vmatprep.subr.mxu0 0.0
  %v4701 = vand.u32 %v3557, 4294901760
  %v4702 = vsub.f32 %v3557, %v4701
  %v4703 = vand.u32 %v4702, 4294901760
  %v4704 = vsub.f32 %v4702, %v4703
  %v4705 = vand.u32 %v4704, 4294901760
  %4706 = vmatpush1.msra.mxu0 %v4705
  %4707 = vmatprep.subr.mxu0 0.0
  %v4708 = vand.u32 %v3558, 4294901760
  %v4709 = vsub.f32 %v3558, %v4708
  %v4710 = vand.u32 %v4709, 4294901760
  %v4711 = vsub.f32 %v4709, %v4710
  %v4712 = vand.u32 %v4711, 4294901760
  %4713 = vmatpush1.msra.mxu0 %v4712
  %4714 = vmatprep.subr.mxu0 0.0
  %v4715 = vand.u32 %v3559, 4294901760
  %v4716 = vsub.f32 %v3559, %v4715
  %v4717 = vand.u32 %v4716, 4294901760
  %v4718 = vsub.f32 %v4716, %v4717
  %v4719 = vand.u32 %v4718, 4294901760
  %4720 = vmatpush1.msra.mxu0 %v4719
  %4721 = vmatprep.subr.mxu0 0.0
  %v4722 = vand.u32 %v3560, 4294901760
  %v4723 = vsub.f32 %v3560, %v4722
  %v4724 = vand.u32 %v4723, 4294901760
  %v4725 = vsub.f32 %v4723, %v4724
  %v4726 = vand.u32 %v4725, 4294901760
  %4727 = vmatpush1.msra.mxu0 %v4726
  %4728 = vmatprep.subr.mxu0 0.0
  %v4729 = vand.u32 %v3561, 4294901760
  %v4730 = vsub.f32 %v3561, %v4729
  %v4731 = vand.u32 %v4730, 4294901760
  %v4732 = vsub.f32 %v4730, %v4731
  %v4733 = vand.u32 %v4732, 4294901760
  %4734 = vmatpush1.msra.mxu0 %v4733
  %4735 = vmatprep.subr.mxu0 0.0
  %v4736 = vand.u32 %v3562, 4294901760
  %v4737 = vsub.f32 %v3562, %v4736
  %v4738 = vand.u32 %v4737, 4294901760
  %v4739 = vsub.f32 %v4737, %v4738
  %v4740 = vand.u32 %v4739, 4294901760
  %4741 = vmatpush1.msra.mxu0 %v4740
  %4742 = vmatprep.subr.mxu0 0.0
  %v4743 = vand.u32 %v3563, 4294901760
  %v4744 = vsub.f32 %v3563, %v4743
  %v4745 = vand.u32 %v4744, 4294901760
  %v4746 = vsub.f32 %v4744, %v4745
  %v4747 = vand.u32 %v4746, 4294901760
  %4748 = vmatpush1.msra.mxu0 %v4747
  %4749 = vmatprep.subr.mxu0 0.0
  %v4750 = vand.u32 %v3564, 4294901760
  %v4751 = vsub.f32 %v3564, %v4750
  %v4752 = vand.u32 %v4751, 4294901760
  %v4753 = vsub.f32 %v4751, %v4752
  %v4754 = vand.u32 %v4753, 4294901760
  %4755 = vmatpush1.msra.mxu0 %v4754
  %4756 = vmatprep.subr.mxu0 0.0
  %v4757 = vand.u32 %v3565, 4294901760
  %v4758 = vsub.f32 %v3565, %v4757
  %v4759 = vand.u32 %v4758, 4294901760
  %v4760 = vsub.f32 %v4758, %v4759
  %v4761 = vand.u32 %v4760, 4294901760
  %4762 = vmatpush1.msra.mxu0 %v4761
  %4763 = vmatprep.subr.mxu0 0.0
  %v4764 = vand.u32 %v3566, 4294901760
  %v4765 = vsub.f32 %v3566, %v4764
  %v4766 = vand.u32 %v4765, 4294901760
  %v4767 = vsub.f32 %v4765, %v4766
  %v4768 = vand.u32 %v4767, 4294901760
  %4769 = vmatpush1.msra.mxu0 %v4768
  %4770 = vmatprep.subr.mxu0 0.0
  %v4771 = vand.u32 %v3567, 4294901760
  %v4772 = vsub.f32 %v3567, %v4771
  %v4773 = vand.u32 %v4772, 4294901760
  %v4774 = vsub.f32 %v4772, %v4773
  %v4775 = vand.u32 %v4774, 4294901760
  %4776 = vmatpush1.msra.mxu0 %v4775
  %4777 = vmatprep.subr.mxu0 0.0
  %v4778 = vand.u32 %v3568, 4294901760
  %v4779 = vsub.f32 %v3568, %v4778
  %v4780 = vand.u32 %v4779, 4294901760
  %v4781 = vsub.f32 %v4779, %v4780
  %v4782 = vand.u32 %v4781, 4294901760
  %4783 = vmatpush1.msra.mxu0 %v4782
  %4784 = vmatprep.subr.mxu0 0.0
  %v4785 = vand.u32 %v3569, 4294901760
  %v4786 = vsub.f32 %v3569, %v4785
  %v4787 = vand.u32 %v4786, 4294901760
  %v4788 = vsub.f32 %v4786, %v4787
  %v4789 = vand.u32 %v4788, 4294901760
  %4790 = vmatpush1.msra.mxu0 %v4789
  %v4791 = vand.u32 %v3588, 4294901760
  %4792 = vmatprep.mubr.f32.mxu0 %v4791
  %v4793 = vand.u32 %v3586, 4294901760
  %4794 = vmatmul.mubr.f32.gmra.mrb[0].mxu0 %v4793
  %v4795 = vpop.f32.mrb[0].mxu0
  %v4796 = vadd.f32 %v4564, %v4795
  %v4797 = vpop.f32.mrb[0].mxu0
  %4798 = vdwg.mxu0
  %4799 = vmatprep.subr.mxu0 0.0
  %v4800 = vand.u32 %v3538, 4294901760
  %v4801 = vsub.f32 %v3538, %v4800
  %4802 = vmatpush1.msra.mxu0 %v4801
  %4803 = vmatprep.subr.mxu0 0.0
  %v4804 = vand.u32 %v3539, 4294901760
  %v4805 = vsub.f32 %v3539, %v4804
  %4806 = vmatpush1.msra.mxu0 %v4805
  %4807 = vmatprep.subr.mxu0 0.0
  %v4808 = vand.u32 %v3540, 4294901760
  %v4809 = vsub.f32 %v3540, %v4808
  %4810 = vmatpush1.msra.mxu0 %v4809
  %4811 = vmatprep.subr.mxu0 0.0
  %v4812 = vand.u32 %v3541, 4294901760
  %v4813 = vsub.f32 %v3541, %v4812
  %4814 = vmatpush1.msra.mxu0 %v4813
  %4815 = vmatprep.subr.mxu0 0.0
  %v4816 = vand.u32 %v3542, 4294901760
  %v4817 = vsub.f32 %v3542, %v4816
  %4818 = vmatpush1.msra.mxu0 %v4817
  %4819 = vmatprep.subr.mxu0 0.0
  %v4820 = vand.u32 %v3543, 4294901760
  %v4821 = vsub.f32 %v3543, %v4820
  %4822 = vmatpush1.msra.mxu0 %v4821
  %4823 = vmatprep.subr.mxu0 0.0
  %v4824 = vand.u32 %v3544, 4294901760
  %v4825 = vsub.f32 %v3544, %v4824
  %4826 = vmatpush1.msra.mxu0 %v4825
  %4827 = vmatprep.subr.mxu0 0.0
  %v4828 = vand.u32 %v3545, 4294901760
  %v4829 = vsub.f32 %v3545, %v4828
  %4830 = vmatpush1.msra.mxu0 %v4829
  %4831 = vmatprep.subr.mxu0 0.0
  %v4832 = vand.u32 %v3546, 4294901760
  %v4833 = vsub.f32 %v3546, %v4832
  %4834 = vmatpush1.msra.mxu0 %v4833
  %4835 = vmatprep.subr.mxu0 0.0
  %v4836 = vand.u32 %v3547, 4294901760
  %v4837 = vsub.f32 %v3547, %v4836
  %4838 = vmatpush1.msra.mxu0 %v4837
  %4839 = vmatprep.subr.mxu0 0.0
  %v4840 = vand.u32 %v3548, 4294901760
  %v4841 = vsub.f32 %v3548, %v4840
  %4842 = vmatpush1.msra.mxu0 %v4841
  %4843 = vmatprep.subr.mxu0 0.0
  %v4844 = vand.u32 %v3549, 4294901760
  %v4845 = vsub.f32 %v3549, %v4844
  %4846 = vmatpush1.msra.mxu0 %v4845
  %4847 = vmatprep.subr.mxu0 0.0
  %v4848 = vand.u32 %v3550, 4294901760
  %v4849 = vsub.f32 %v3550, %v4848
  %4850 = vmatpush1.msra.mxu0 %v4849
  %4851 = vmatprep.subr.mxu0 0.0
  %v4852 = vand.u32 %v3551, 4294901760
  %v4853 = vsub.f32 %v3551, %v4852
  %4854 = vmatpush1.msra.mxu0 %v4853
  %4855 = vmatprep.subr.mxu0 0.0
  %v4856 = vand.u32 %v3552, 4294901760
  %v4857 = vsub.f32 %v3552, %v4856
  %4858 = vmatpush1.msra.mxu0 %v4857
  %4859 = vmatprep.subr.mxu0 0.0
  %v4860 = vand.u32 %v3553, 4294901760
  %v4861 = vsub.f32 %v3553, %v4860
  %4862 = vmatpush1.msra.mxu0 %v4861
  %4863 = vmatprep.subr.mxu0 0.0
  %v4864 = vand.u32 %v3554, 4294901760
  %v4865 = vsub.f32 %v3554, %v4864
  %4866 = vmatpush1.msra.mxu0 %v4865
  %4867 = vmatprep.subr.mxu0 0.0
  %v4868 = vand.u32 %v3555, 4294901760
  %v4869 = vsub.f32 %v3555, %v4868
  %4870 = vmatpush1.msra.mxu0 %v4869
  %4871 = vmatprep.subr.mxu0 0.0
  %v4872 = vand.u32 %v3556, 4294901760
  %v4873 = vsub.f32 %v3556, %v4872
  %4874 = vmatpush1.msra.mxu0 %v4873
  %4875 = vmatprep.subr.mxu0 0.0
  %v4876 = vand.u32 %v3557, 4294901760
  %v4877 = vsub.f32 %v3557, %v4876
  %4878 = vmatpush1.msra.mxu0 %v4877
  %4879 = vmatprep.subr.mxu0 0.0
  %v4880 = vand.u32 %v3558, 4294901760
  %v4881 = vsub.f32 %v3558, %v4880
  %4882 = vmatpush1.msra.mxu0 %v4881
  %4883 = vmatprep.subr.mxu0 0.0
  %v4884 = vand.u32 %v3559, 4294901760
  %v4885 = vsub.f32 %v3559, %v4884
  %4886 = vmatpush1.msra.mxu0 %v4885
  %4887 = vmatprep.subr.mxu0 0.0
  %v4888 = vand.u32 %v3560, 4294901760
  %v4889 = vsub.f32 %v3560, %v4888
  %4890 = vmatpush1.msra.mxu0 %v4889
  %4891 = vmatprep.subr.mxu0 0.0
  %v4892 = vand.u32 %v3561, 4294901760
  %v4893 = vsub.f32 %v3561, %v4892
  %4894 = vmatpush1.msra.mxu0 %v4893
  %4895 = vmatprep.subr.mxu0 0.0
  %v4896 = vand.u32 %v3562, 4294901760
  %v4897 = vsub.f32 %v3562, %v4896
  %4898 = vmatpush1.msra.mxu0 %v4897
  %4899 = vmatprep.subr.mxu0 0.0
  %v4900 = vand.u32 %v3563, 4294901760
  %v4901 = vsub.f32 %v3563, %v4900
  %4902 = vmatpush1.msra.mxu0 %v4901
  %4903 = vmatprep.subr.mxu0 0.0
  %v4904 = vand.u32 %v3564, 4294901760
  %v4905 = vsub.f32 %v3564, %v4904
  %4906 = vmatpush1.msra.mxu0 %v4905
  %4907 = vmatprep.subr.mxu0 0.0
  %v4908 = vand.u32 %v3565, 4294901760
  %v4909 = vsub.f32 %v3565, %v4908
  %4910 = vmatpush1.msra.mxu0 %v4909
  %4911 = vmatprep.subr.mxu0 0.0
  %v4912 = vand.u32 %v3566, 4294901760
  %v4913 = vsub.f32 %v3566, %v4912
  %4914 = vmatpush1.msra.mxu0 %v4913
  %4915 = vmatprep.subr.mxu0 0.0
  %v4916 = vand.u32 %v3567, 4294901760
  %v4917 = vsub.f32 %v3567, %v4916
  %4918 = vmatpush1.msra.mxu0 %v4917
  %4919 = vmatprep.subr.mxu0 0.0
  %v4920 = vand.u32 %v3568, 4294901760
  %v4921 = vsub.f32 %v3568, %v4920
  %4922 = vmatpush1.msra.mxu0 %v4921
  %4923 = vmatprep.subr.mxu0 0.0
  %v4924 = vand.u32 %v3569, 4294901760
  %v4925 = vsub.f32 %v3569, %v4924
  %4926 = vmatpush1.msra.mxu0 %v4925
  %v4927 = vand.u32 %v3588, 4294901760
  %v4928 = vsub.f32 %v3588, %v4927
  %4929 = vmatprep.mubr.f32.mxu0 %v4928
  %v4930 = vand.u32 %v3586, 4294901760
  %v4931 = vsub.f32 %v3586, %v4930
  %4932 = vmatmul.mubr.f32.gmra.mrb[0].mxu0 %v4931
  %v4933 = vpop.f32.mrb[0].mxu0
  %v4934 = vadd.f32 %v4796, %v4933
  %v4935 = vpop.f32.mrb[0].mxu0
  %4936 = vdwg.mxu0
  %4937 = vmatprep.subr.mxu0 0.0
  %v4938 = vand.u32 %v3538, 4294901760
  %4939 = vmatpush1.msra.mxu0 %v4938
  %4940 = vmatprep.subr.mxu0 0.0
  %v4941 = vand.u32 %v3539, 4294901760
  %4942 = vmatpush1.msra.mxu0 %v4941
  %4943 = vmatprep.subr.mxu0 0.0
  %v4944 = vand.u32 %v3540, 4294901760
  %4945 = vmatpush1.msra.mxu0 %v4944
  %4946 = vmatprep.subr.mxu0 0.0
  %v4947 = vand.u32 %v3541, 4294901760
  %4948 = vmatpush1.msra.mxu0 %v4947
  %4949 = vmatprep.subr.mxu0 0.0
  %v4950 = vand.u32 %v3542, 4294901760
  %4951 = vmatpush1.msra.mxu0 %v4950
  %4952 = vmatprep.subr.mxu0 0.0
  %v4953 = vand.u32 %v3543, 4294901760
  %4954 = vmatpush1.msra.mxu0 %v4953
  %4955 = vmatprep.subr.mxu0 0.0
  %v4956 = vand.u32 %v3544, 4294901760
  %4957 = vmatpush1.msra.mxu0 %v4956
  %4958 = vmatprep.subr.mxu0 0.0
  %v4959 = vand.u32 %v3545, 4294901760
  %4960 = vmatpush1.msra.mxu0 %v4959
  %4961 = vmatprep.subr.mxu0 0.0
  %v4962 = vand.u32 %v3546, 4294901760
  %4963 = vmatpush1.msra.mxu0 %v4962
  %4964 = vmatprep.subr.mxu0 0.0
  %v4965 = vand.u32 %v3547, 4294901760
  %4966 = vmatpush1.msra.mxu0 %v4965
  %4967 = vmatprep.subr.mxu0 0.0
  %v4968 = vand.u32 %v3548, 4294901760
  %4969 = vmatpush1.msra.mxu0 %v4968
  %4970 = vmatprep.subr.mxu0 0.0
  %v4971 = vand.u32 %v3549, 4294901760
  %4972 = vmatpush1.msra.mxu0 %v4971
  %4973 = vmatprep.subr.mxu0 0.0
  %v4974 = vand.u32 %v3550, 4294901760
  %4975 = vmatpush1.msra.mxu0 %v4974
  %4976 = vmatprep.subr.mxu0 0.0
  %v4977 = vand.u32 %v3551, 4294901760
  %4978 = vmatpush1.msra.mxu0 %v4977
  %4979 = vmatprep.subr.mxu0 0.0
  %v4980 = vand.u32 %v3552, 4294901760
  %4981 = vmatpush1.msra.mxu0 %v4980
  %4982 = vmatprep.subr.mxu0 0.0
  %v4983 = vand.u32 %v3553, 4294901760
  %4984 = vmatpush1.msra.mxu0 %v4983
  %4985 = vmatprep.subr.mxu0 0.0
  %v4986 = vand.u32 %v3554, 4294901760
  %4987 = vmatpush1.msra.mxu0 %v4986
  %4988 = vmatprep.subr.mxu0 0.0
  %v4989 = vand.u32 %v3555, 4294901760
  %4990 = vmatpush1.msra.mxu0 %v4989
  %4991 = vmatprep.subr.mxu0 0.0
  %v4992 = vand.u32 %v3556, 4294901760
  %4993 = vmatpush1.msra.mxu0 %v4992
  %4994 = vmatprep.subr.mxu0 0.0
  %v4995 = vand.u32 %v3557, 4294901760
  %4996 = vmatpush1.msra.mxu0 %v4995
  %4997 = vmatprep.subr.mxu0 0.0
  %v4998 = vand.u32 %v3558, 4294901760
  %4999 = vmatpush1.msra.mxu0 %v4998
  %5000 = vmatprep.subr.mxu0 0.0
  %v5001 = vand.u32 %v3559, 4294901760
  %5002 = vmatpush1.msra.mxu0 %v5001
  %5003 = vmatprep.subr.mxu0 0.0
  %v5004 = vand.u32 %v3560, 4294901760
  %5005 = vmatpush1.msra.mxu0 %v5004
  %5006 = vmatprep.subr.mxu0 0.0
  %v5007 = vand.u32 %v3561, 4294901760
  %5008 = vmatpush1.msra.mxu0 %v5007
  %5009 = vmatprep.subr.mxu0 0.0
  %v5010 = vand.u32 %v3562, 4294901760
  %5011 = vmatpush1.msra.mxu0 %v5010
  %5012 = vmatprep.subr.mxu0 0.0
  %v5013 = vand.u32 %v3563, 4294901760
  %5014 = vmatpush1.msra.mxu0 %v5013
  %5015 = vmatprep.subr.mxu0 0.0
  %v5016 = vand.u32 %v3564, 4294901760
  %5017 = vmatpush1.msra.mxu0 %v5016
  %5018 = vmatprep.subr.mxu0 0.0
  %v5019 = vand.u32 %v3565, 4294901760
  %5020 = vmatpush1.msra.mxu0 %v5019
  %5021 = vmatprep.subr.mxu0 0.0
  %v5022 = vand.u32 %v3566, 4294901760
  %5023 = vmatpush1.msra.mxu0 %v5022
  %5024 = vmatprep.subr.mxu0 0.0
  %v5025 = vand.u32 %v3567, 4294901760
  %5026 = vmatpush1.msra.mxu0 %v5025
  %5027 = vmatprep.subr.mxu0 0.0
  %v5028 = vand.u32 %v3568, 4294901760
  %5029 = vmatpush1.msra.mxu0 %v5028
  %5030 = vmatprep.subr.mxu0 0.0
  %v5031 = vand.u32 %v3569, 4294901760
  %5032 = vmatpush1.msra.mxu0 %v5031
  %v5033 = vand.u32 %v3588, 4294901760
  %v5034 = vsub.f32 %v3588, %v5033
  %v5035 = vand.u32 %v5034, 4294901760
  %5036 = vmatprep.mubr.f32.mxu0 %v5035
  %v5037 = vand.u32 %v3586, 4294901760
  %v5038 = vsub.f32 %v3586, %v5037
  %v5039 = vand.u32 %v5038, 4294901760
  %5040 = vmatmul.mubr.f32.gmra.mrb[0].mxu0 %v5039
  %v5041 = vpop.f32.mrb[0].mxu0
  %v5042 = vadd.f32 %v4934, %v5041
  %v5043 = vpop.f32.mrb[0].mxu0
  %5044 = vdwg.mxu0
  %5045 = vmatprep.subr.mxu0 0.0
  %v5046 = vand.u32 %v3538, 4294901760
  %v5047 = vsub.f32 %v3538, %v5046
  %v5048 = vand.u32 %v5047, 4294901760
  %5049 = vmatpush1.msra.mxu0 %v5048
  %5050 = vmatprep.subr.mxu0 0.0
  %v5051 = vand.u32 %v3539, 4294901760
  %v5052 = vsub.f32 %v3539, %v5051
  %v5053 = vand.u32 %v5052, 4294901760
  %5054 = vmatpush1.msra.mxu0 %v5053
  %5055 = vmatprep.subr.mxu0 0.0
  %v5056 = vand.u32 %v3540, 4294901760
  %v5057 = vsub.f32 %v3540, %v5056
  %v5058 = vand.u32 %v5057, 4294901760
  %5059 = vmatpush1.msra.mxu0 %v5058
  %5060 = vmatprep.subr.mxu0 0.0
  %v5061 = vand.u32 %v3541, 4294901760
  %v5062 = vsub.f32 %v3541, %v5061
  %v5063 = vand.u32 %v5062, 4294901760
  %5064 = vmatpush1.msra.mxu0 %v5063
  %5065 = vmatprep.subr.mxu0 0.0
  %v5066 = vand.u32 %v3542, 4294901760
  %v5067 = vsub.f32 %v3542, %v5066
  %v5068 = vand.u32 %v5067, 4294901760
  %5069 = vmatpush1.msra.mxu0 %v5068
  %5070 = vmatprep.subr.mxu0 0.0
  %v5071 = vand.u32 %v3543, 4294901760
  %v5072 = vsub.f32 %v3543, %v5071
  %v5073 = vand.u32 %v5072, 4294901760
  %5074 = vmatpush1.msra.mxu0 %v5073
  %5075 = vmatprep.subr.mxu0 0.0
  %v5076 = vand.u32 %v3544, 4294901760
  %v5077 = vsub.f32 %v3544, %v5076
  %v5078 = vand.u32 %v5077, 4294901760
  %5079 = vmatpush1.msra.mxu0 %v5078
  %5080 = vmatprep.subr.mxu0 0.0
  %v5081 = vand.u32 %v3545, 4294901760
  %v5082 = vsub.f32 %v3545, %v5081
  %v5083 = vand.u32 %v5082, 4294901760
  %5084 = vmatpush1.msra.mxu0 %v5083
  %5085 = vmatprep.subr.mxu0 0.0
  %v5086 = vand.u32 %v3546, 4294901760
  %v5087 = vsub.f32 %v3546, %v5086
  %v5088 = vand.u32 %v5087, 4294901760
  %5089 = vmatpush1.msra.mxu0 %v5088
  %5090 = vmatprep.subr.mxu0 0.0
  %v5091 = vand.u32 %v3547, 4294901760
  %v5092 = vsub.f32 %v3547, %v5091
  %v5093 = vand.u32 %v5092, 4294901760
  %5094 = vmatpush1.msra.mxu0 %v5093
  %5095 = vmatprep.subr.mxu0 0.0
  %v5096 = vand.u32 %v3548, 4294901760
  %v5097 = vsub.f32 %v3548, %v5096
  %v5098 = vand.u32 %v5097, 4294901760
  %5099 = vmatpush1.msra.mxu0 %v5098
  %5100 = vmatprep.subr.mxu0 0.0
  %v5101 = vand.u32 %v3549, 4294901760
  %v5102 = vsub.f32 %v3549, %v5101
  %v5103 = vand.u32 %v5102, 4294901760
  %5104 = vmatpush1.msra.mxu0 %v5103
  %5105 = vmatprep.subr.mxu0 0.0
  %v5106 = vand.u32 %v3550, 4294901760
  %v5107 = vsub.f32 %v3550, %v5106
  %v5108 = vand.u32 %v5107, 4294901760
  %5109 = vmatpush1.msra.mxu0 %v5108
  %5110 = vmatprep.subr.mxu0 0.0
  %v5111 = vand.u32 %v3551, 4294901760
  %v5112 = vsub.f32 %v3551, %v5111
  %v5113 = vand.u32 %v5112, 4294901760
  %5114 = vmatpush1.msra.mxu0 %v5113
  %5115 = vmatprep.subr.mxu0 0.0
  %v5116 = vand.u32 %v3552, 4294901760
  %v5117 = vsub.f32 %v3552, %v5116
  %v5118 = vand.u32 %v5117, 4294901760
  %5119 = vmatpush1.msra.mxu0 %v5118
  %5120 = vmatprep.subr.mxu0 0.0
  %v5121 = vand.u32 %v3553, 4294901760
  %v5122 = vsub.f32 %v3553, %v5121
  %v5123 = vand.u32 %v5122, 4294901760
  %5124 = vmatpush1.msra.mxu0 %v5123
  %5125 = vmatprep.subr.mxu0 0.0
  %v5126 = vand.u32 %v3554, 4294901760
  %v5127 = vsub.f32 %v3554, %v5126
  %v5128 = vand.u32 %v5127, 4294901760
  %5129 = vmatpush1.msra.mxu0 %v5128
  %5130 = vmatprep.subr.mxu0 0.0
  %v5131 = vand.u32 %v3555, 4294901760
  %v5132 = vsub.f32 %v3555, %v5131
  %v5133 = vand.u32 %v5132, 4294901760
  %5134 = vmatpush1.msra.mxu0 %v5133
  %5135 = vmatprep.subr.mxu0 0.0
  %v5136 = vand.u32 %v3556, 4294901760
  %v5137 = vsub.f32 %v3556, %v5136
  %v5138 = vand.u32 %v5137, 4294901760
  %5139 = vmatpush1.msra.mxu0 %v5138
  %5140 = vmatprep.subr.mxu0 0.0
  %v5141 = vand.u32 %v3557, 4294901760
  %v5142 = vsub.f32 %v3557, %v5141
  %v5143 = vand.u32 %v5142, 4294901760
  %5144 = vmatpush1.msra.mxu0 %v5143
  %5145 = vmatprep.subr.mxu0 0.0
  %v5146 = vand.u32 %v3558, 4294901760
  %v5147 = vsub.f32 %v3558, %v5146
  %v5148 = vand.u32 %v5147, 4294901760
  %5149 = vmatpush1.msra.mxu0 %v5148
  %5150 = vmatprep.subr.mxu0 0.0
  %v5151 = vand.u32 %v3559, 4294901760
  %v5152 = vsub.f32 %v3559, %v5151
  %v5153 = vand.u32 %v5152, 4294901760
  %5154 = vmatpush1.msra.mxu0 %v5153
  %5155 = vmatprep.subr.mxu0 0.0
  %v5156 = vand.u32 %v3560, 4294901760
  %v5157 = vsub.f32 %v3560, %v5156
  %v5158 = vand.u32 %v5157, 4294901760
  %5159 = vmatpush1.msra.mxu0 %v5158
  %5160 = vmatprep.subr.mxu0 0.0
  %v5161 = vand.u32 %v3561, 4294901760
  %v5162 = vsub.f32 %v3561, %v5161
  %v5163 = vand.u32 %v5162, 4294901760
  %5164 = vmatpush1.msra.mxu0 %v5163
  %5165 = vmatprep.subr.mxu0 0.0
  %v5166 = vand.u32 %v3562, 4294901760
  %v5167 = vsub.f32 %v3562, %v5166
  %v5168 = vand.u32 %v5167, 4294901760
  %5169 = vmatpush1.msra.mxu0 %v5168
  %5170 = vmatprep.subr.mxu0 0.0
  %v5171 = vand.u32 %v3563, 4294901760
  %v5172 = vsub.f32 %v3563, %v5171
  %v5173 = vand.u32 %v5172, 4294901760
  %5174 = vmatpush1.msra.mxu0 %v5173
  %5175 = vmatprep.subr.mxu0 0.0
  %v5176 = vand.u32 %v3564, 4294901760
  %v5177 = vsub.f32 %v3564, %v5176
  %v5178 = vand.u32 %v5177, 4294901760
  %5179 = vmatpush1.msra.mxu0 %v5178
  %5180 = vmatprep.subr.mxu0 0.0
  %v5181 = vand.u32 %v3565, 4294901760
  %v5182 = vsub.f32 %v3565, %v5181
  %v5183 = vand.u32 %v5182, 4294901760
  %5184 = vmatpush1.msra.mxu0 %v5183
  %5185 = vmatprep.subr.mxu0 0.0
  %v5186 = vand.u32 %v3566, 4294901760
  %v5187 = vsub.f32 %v3566, %v5186
  %v5188 = vand.u32 %v5187, 4294901760
  %5189 = vmatpush1.msra.mxu0 %v5188
  %5190 = vmatprep.subr.mxu0 0.0
  %v5191 = vand.u32 %v3567, 4294901760
  %v5192 = vsub.f32 %v3567, %v5191
  %v5193 = vand.u32 %v5192, 4294901760
  %5194 = vmatpush1.msra.mxu0 %v5193
  %5195 = vmatprep.subr.mxu0 0.0
  %v5196 = vand.u32 %v3568, 4294901760
  %v5197 = vsub.f32 %v3568, %v5196
  %v5198 = vand.u32 %v5197, 4294901760
  %5199 = vmatpush1.msra.mxu0 %v5198
  %5200 = vmatprep.subr.mxu0 0.0
  %v5201 = vand.u32 %v3569, 4294901760
  %v5202 = vsub.f32 %v3569, %v5201
  %v5203 = vand.u32 %v5202, 4294901760
  %5204 = vmatpush1.msra.mxu0 %v5203
  %v5205 = vand.u32 %v3588, 4294901760
  %5206 = vmatprep.mubr.f32.mxu0 %v5205
  %v5207 = vand.u32 %v3586, 4294901760
  %5208 = vmatmul.mubr.f32.gmra.mrb[0].mxu0 %v5207
  %v5209 = vpop.f32.mrb[0].mxu0
  %v5210 = vadd.f32 %v5042, %v5209
  %v5211 = vpop.f32.mrb[0].mxu0
  %5212 = vdwg.mxu0
  %5213 = vmatprep.subr.mxu0 0.0
  %v5214 = vand.u32 %v3538, 4294901760
  %5215 = vmatpush1.msra.mxu0 %v5214
  %5216 = vmatprep.subr.mxu0 0.0
  %v5217 = vand.u32 %v3539, 4294901760
  %5218 = vmatpush1.msra.mxu0 %v5217
  %5219 = vmatprep.subr.mxu0 0.0
  %v5220 = vand.u32 %v3540, 4294901760
  %5221 = vmatpush1.msra.mxu0 %v5220
  %5222 = vmatprep.subr.mxu0 0.0
  %v5223 = vand.u32 %v3541, 4294901760
  %5224 = vmatpush1.msra.mxu0 %v5223
  %5225 = vmatprep.subr.mxu0 0.0
  %v5226 = vand.u32 %v3542, 4294901760
  %5227 = vmatpush1.msra.mxu0 %v5226
  %5228 = vmatprep.subr.mxu0 0.0
  %v5229 = vand.u32 %v3543, 4294901760
  %5230 = vmatpush1.msra.mxu0 %v5229
  %5231 = vmatprep.subr.mxu0 0.0
  %v5232 = vand.u32 %v3544, 4294901760
  %5233 = vmatpush1.msra.mxu0 %v5232
  %5234 = vmatprep.subr.mxu0 0.0
  %v5235 = vand.u32 %v3545, 4294901760
  %5236 = vmatpush1.msra.mxu0 %v5235
  %5237 = vmatprep.subr.mxu0 0.0
  %v5238 = vand.u32 %v3546, 4294901760
  %5239 = vmatpush1.msra.mxu0 %v5238
  %5240 = vmatprep.subr.mxu0 0.0
  %v5241 = vand.u32 %v3547, 4294901760
  %5242 = vmatpush1.msra.mxu0 %v5241
  %5243 = vmatprep.subr.mxu0 0.0
  %v5244 = vand.u32 %v3548, 4294901760
  %5245 = vmatpush1.msra.mxu0 %v5244
  %5246 = vmatprep.subr.mxu0 0.0
  %v5247 = vand.u32 %v3549, 4294901760
  %5248 = vmatpush1.msra.mxu0 %v5247
  %5249 = vmatprep.subr.mxu0 0.0
  %v5250 = vand.u32 %v3550, 4294901760
  %5251 = vmatpush1.msra.mxu0 %v5250
  %5252 = vmatprep.subr.mxu0 0.0
  %v5253 = vand.u32 %v3551, 4294901760
  %5254 = vmatpush1.msra.mxu0 %v5253
  %5255 = vmatprep.subr.mxu0 0.0
  %v5256 = vand.u32 %v3552, 4294901760
  %5257 = vmatpush1.msra.mxu0 %v5256
  %5258 = vmatprep.subr.mxu0 0.0
  %v5259 = vand.u32 %v3553, 4294901760
  %5260 = vmatpush1.msra.mxu0 %v5259
  %5261 = vmatprep.subr.mxu0 0.0
  %v5262 = vand.u32 %v3554, 4294901760
  %5263 = vmatpush1.msra.mxu0 %v5262
  %5264 = vmatprep.subr.mxu0 0.0
  %v5265 = vand.u32 %v3555, 4294901760
  %5266 = vmatpush1.msra.mxu0 %v5265
  %5267 = vmatprep.subr.mxu0 0.0
  %v5268 = vand.u32 %v3556, 4294901760
  %5269 = vmatpush1.msra.mxu0 %v5268
  %5270 = vmatprep.subr.mxu0 0.0
  %v5271 = vand.u32 %v3557, 4294901760
  %5272 = vmatpush1.msra.mxu0 %v5271
  %5273 = vmatprep.subr.mxu0 0.0
  %v5274 = vand.u32 %v3558, 4294901760
  %5275 = vmatpush1.msra.mxu0 %v5274
  %5276 = vmatprep.subr.mxu0 0.0
  %v5277 = vand.u32 %v3559, 4294901760
  %5278 = vmatpush1.msra.mxu0 %v5277
  %5279 = vmatprep.subr.mxu0 0.0
  %v5280 = vand.u32 %v3560, 4294901760
  %5281 = vmatpush1.msra.mxu0 %v5280
  %5282 = vmatprep.subr.mxu0 0.0
  %v5283 = vand.u32 %v3561, 4294901760
  %5284 = vmatpush1.msra.mxu0 %v5283
  %5285 = vmatprep.subr.mxu0 0.0
  %v5286 = vand.u32 %v3562, 4294901760
  %5287 = vmatpush1.msra.mxu0 %v5286
  %5288 = vmatprep.subr.mxu0 0.0
  %v5289 = vand.u32 %v3563, 4294901760
  %5290 = vmatpush1.msra.mxu0 %v5289
  %5291 = vmatprep.subr.mxu0 0.0
  %v5292 = vand.u32 %v3564, 4294901760
  %5293 = vmatpush1.msra.mxu0 %v5292
  %5294 = vmatprep.subr.mxu0 0.0
  %v5295 = vand.u32 %v3565, 4294901760
  %5296 = vmatpush1.msra.mxu0 %v5295
  %5297 = vmatprep.subr.mxu0 0.0
  %v5298 = vand.u32 %v3566, 4294901760
  %5299 = vmatpush1.msra.mxu0 %v5298
  %5300 = vmatprep.subr.mxu0 0.0
  %v5301 = vand.u32 %v3567, 4294901760
  %5302 = vmatpush1.msra.mxu0 %v5301
  %5303 = vmatprep.subr.mxu0 0.0
  %v5304 = vand.u32 %v3568, 4294901760
  %5305 = vmatpush1.msra.mxu0 %v5304
  %5306 = vmatprep.subr.mxu0 0.0
  %v5307 = vand.u32 %v3569, 4294901760
  %5308 = vmatpush1.msra.mxu0 %v5307
  %v5309 = vand.u32 %v3588, 4294901760
  %5310 = vmatprep.mubr.f32.mxu0 %v5309
  %v5311 = vand.u32 %v3586, 4294901760
  %5312 = vmatmul.mubr.f32.gmra.mrb[0].mxu0 %v5311
  %v5313 = vpop.f32.mrb[0].mxu0
  %v5314 = vadd.f32 %v5210, %v5313
  %v5315 = vpop.f32.mrb[0].mxu0
  %5316 = vdwg.mxu0
  %v5317 = vld [vmem:[%s4] sm:$0xff]
  %v5318 = vld [vmem:[%s4 + $0x8] sm:$0xff]
  %v5319 = vld [vmem:[%s4 + $0x10] sm:$0xff]
  %v5320 = vld [vmem:[%s4 + $0x18] sm:$0xff]
  %v5321 = vld [vmem:[%s5] sm:$0x1]
  %v5323 = vlaneseq
  %v5324 = vshrl.u32 %v5323, 7
  %v5325 = vsub.s32 0, %v5324
  %v5326 = vrot.slane %v5321, %v5325
  %vm5328 = vcmask 261120
  %v5330 = vsel %vm5328, %v5314, 0
  %5332 = vmatprep.subr.mxu0 0.0
  %v5333 = vand.u32 %v5317, 4294901760
  %5334 = vmatpush1.msra.mxu0 %v5333
  %5335 = vmatprep.subr.mxu0 0.0
  %v5336 = vand.u32 %v5318, 4294901760
  %5337 = vmatpush1.msra.mxu0 %v5336
  %5338 = vmatprep.subr.mxu0 0.0
  %v5339 = vand.u32 %v5319, 4294901760
  %5340 = vmatpush1.msra.mxu0 %v5339
  %5341 = vmatprep.subr.mxu0 0.0
  %v5342 = vand.u32 %v5320, 4294901760
  %5343 = vmatpush1.msra.mxu0 %v5342
  %5344 = vmatprep.subr.mxu0 0.0
  %5345 = vmatpush1.msra.mxu0 0.0
  %5346 = vmatprep.subr.mxu0 0.0
  %5347 = vmatpush1.msra.mxu0 0.0
  %5348 = vmatprep.subr.mxu0 0.0
  %5349 = vmatpush1.msra.mxu0 0.0
  %5350 = vmatprep.subr.mxu0 0.0
  %5351 = vmatpush1.msra.mxu0 0.0
  %5352 = vmatprep.subr.mxu0 0.0
  %5353 = vmatpush1.msra.mxu0 0.0
  %5354 = vmatprep.subr.mxu0 0.0
  %5355 = vmatpush1.msra.mxu0 0.0
  %5356 = vmatprep.subr.mxu0 0.0
  %5357 = vmatpush1.msra.mxu0 0.0
  %5358 = vmatprep.subr.mxu0 0.0
  %5359 = vmatpush1.msra.mxu0 0.0
  %5360 = vmatprep.subr.mxu0 0.0
  %5361 = vmatpush1.msra.mxu0 0.0
  %5362 = vmatprep.subr.mxu0 0.0
  %5363 = vmatpush1.msra.mxu0 0.0
  %5364 = vmatprep.subr.mxu0 0.0
  %5365 = vmatpush1.msra.mxu0 0.0
  %5366 = vmatprep.subr.mxu0 0.0
  %5367 = vmatpush1.msra.mxu0 0.0
  %5368 = vmatprep.subr.mxu0 0.0
  %5369 = vmatpush1.msra.mxu0 0.0
  %5370 = vmatprep.subr.mxu0 0.0
  %5371 = vmatpush1.msra.mxu0 0.0
  %5372 = vmatprep.subr.mxu0 0.0
  %5373 = vmatpush1.msra.mxu0 0.0
  %5374 = vmatprep.subr.mxu0 0.0
  %5375 = vmatpush1.msra.mxu0 0.0
  %5376 = vmatprep.subr.mxu0 0.0
  %5377 = vmatpush1.msra.mxu0 0.0
  %5378 = vmatprep.subr.mxu0 0.0
  %5379 = vmatpush1.msra.mxu0 0.0
  %5380 = vmatprep.subr.mxu0 0.0
  %5381 = vmatpush1.msra.mxu0 0.0
  %5382 = vmatprep.subr.mxu0 0.0
  %5383 = vmatpush1.msra.mxu0 0.0
  %5384 = vmatprep.subr.mxu0 0.0
  %5385 = vmatpush1.msra.mxu0 0.0
  %5386 = vmatprep.subr.mxu0 0.0
  %5387 = vmatpush1.msra.mxu0 0.0
  %5388 = vmatprep.subr.mxu0 0.0
  %5389 = vmatpush1.msra.mxu0 0.0
  %5390 = vmatprep.subr.mxu0 0.0
  %5391 = vmatpush1.msra.mxu0 0.0
  %5392 = vmatprep.subr.mxu0 0.0
  %5393 = vmatpush1.msra.mxu0 0.0
  %5394 = vmatprep.subr.mxu0 0.0
  %5395 = vmatpush1.msra.mxu0 0.0
  %5396 = vmatprep.subr.mxu0 0.0
  %5397 = vmatpush1.msra.mxu0 0.0
  %5398 = vmatprep.subr.mxu0 0.0
  %5399 = vmatpush1.msra.mxu0 0.0
  %5400 = vmatprep.mubr.f32.mxu0 0.0
  %v5401 = vand.u32 %v5330, 4294901760
  %v5402 = vsub.f32 %v5330, %v5401
  %v5403 = vand.u32 %v5402, 4294901760
  %v5404 = vsub.f32 %v5402, %v5403
  %v5405 = vand.u32 %v5404, 4294901760
  %5406 = vmatmul.mubr.f32.gmra.mrb[0].mxu0 %v5405
  %v5407 = vpop.f32.mrb[0].mxu0
  %v5408 = vadd.f32 %v5326, %v5407
  %v5409 = vpop.f32.mrb[0].mxu0
  %5410 = vdwg.mxu0
  %5411 = vmatprep.subr.mxu0 0.0
  %v5412 = vand.u32 %v5317, 4294901760
  %v5413 = vsub.f32 %v5317, %v5412
  %v5414 = vand.u32 %v5413, 4294901760
  %v5415 = vsub.f32 %v5413, %v5414
  %v5416 = vand.u32 %v5415, 4294901760
  %5417 = vmatpush1.msra.mxu0 %v5416
  %5418 = vmatprep.subr.mxu0 0.0
  %v5419 = vand.u32 %v5318, 4294901760
  %v5420 = vsub.f32 %v5318, %v5419
  %v5421 = vand.u32 %v5420, 4294901760
  %v5422 = vsub.f32 %v5420, %v5421
  %v5423 = vand.u32 %v5422, 4294901760
  %5424 = vmatpush1.msra.mxu0 %v5423
  %5425 = vmatprep.subr.mxu0 0.0
  %v5426 = vand.u32 %v5319, 4294901760
  %v5427 = vsub.f32 %v5319, %v5426
  %v5428 = vand.u32 %v5427, 4294901760
  %v5429 = vsub.f32 %v5427, %v5428
  %v5430 = vand.u32 %v5429, 4294901760
  %5431 = vmatpush1.msra.mxu0 %v5430
  %5432 = vmatprep.subr.mxu0 0.0
  %v5433 = vand.u32 %v5320, 4294901760
  %v5434 = vsub.f32 %v5320, %v5433
  %v5435 = vand.u32 %v5434, 4294901760
  %v5436 = vsub.f32 %v5434, %v5435
  %v5437 = vand.u32 %v5436, 4294901760
  %5438 = vmatpush1.msra.mxu0 %v5437
  %5439 = vmatprep.subr.mxu0 0.0
  %5440 = vmatpush1.msra.mxu0 0.0
  %5441 = vmatprep.subr.mxu0 0.0
  %5442 = vmatpush1.msra.mxu0 0.0
  %5443 = vmatprep.subr.mxu0 0.0
  %5444 = vmatpush1.msra.mxu0 0.0
  %5445 = vmatprep.subr.mxu0 0.0
  %5446 = vmatpush1.msra.mxu0 0.0
  %5447 = vmatprep.subr.mxu0 0.0
  %5448 = vmatpush1.msra.mxu0 0.0
  %5449 = vmatprep.subr.mxu0 0.0
  %5450 = vmatpush1.msra.mxu0 0.0
  %5451 = vmatprep.subr.mxu0 0.0
  %5452 = vmatpush1.msra.mxu0 0.0
  %5453 = vmatprep.subr.mxu0 0.0
  %5454 = vmatpush1.msra.mxu0 0.0
  %5455 = vmatprep.subr.mxu0 0.0
  %5456 = vmatpush1.msra.mxu0 0.0
  %5457 = vmatprep.subr.mxu0 0.0
  %5458 = vmatpush1.msra.mxu0 0.0
  %5459 = vmatprep.subr.mxu0 0.0
  %5460 = vmatpush1.msra.mxu0 0.0
  %5461 = vmatprep.subr.mxu0 0.0
  %5462 = vmatpush1.msra.mxu0 0.0
  %5463 = vmatprep.subr.mxu0 0.0
  %5464 = vmatpush1.msra.mxu0 0.0
  %5465 = vmatprep.subr.mxu0 0.0
  %5466 = vmatpush1.msra.mxu0 0.0
  %5467 = vmatprep.subr.mxu0 0.0
  %5468 = vmatpush1.msra.mxu0 0.0
  %5469 = vmatprep.subr.mxu0 0.0
  %5470 = vmatpush1.msra.mxu0 0.0
  %5471 = vmatprep.subr.mxu0 0.0
  %5472 = vmatpush1.msra.mxu0 0.0
  %5473 = vmatprep.subr.mxu0 0.0
  %5474 = vmatpush1.msra.mxu0 0.0
  %5475 = vmatprep.subr.mxu0 0.0
  %5476 = vmatpush1.msra.mxu0 0.0
  %5477 = vmatprep.subr.mxu0 0.0
  %5478 = vmatpush1.msra.mxu0 0.0
  %5479 = vmatprep.subr.mxu0 0.0
  %5480 = vmatpush1.msra.mxu0 0.0
  %5481 = vmatprep.subr.mxu0 0.0
  %5482 = vmatpush1.msra.mxu0 0.0
  %5483 = vmatprep.subr.mxu0 0.0
  %5484 = vmatpush1.msra.mxu0 0.0
  %5485 = vmatprep.subr.mxu0 0.0
  %5486 = vmatpush1.msra.mxu0 0.0
  %5487 = vmatprep.subr.mxu0 0.0
  %5488 = vmatpush1.msra.mxu0 0.0
  %5489 = vmatprep.subr.mxu0 0.0
  %5490 = vmatpush1.msra.mxu0 0.0
  %5491 = vmatprep.subr.mxu0 0.0
  %5492 = vmatpush1.msra.mxu0 0.0
  %5493 = vmatprep.subr.mxu0 0.0
  %5494 = vmatpush1.msra.mxu0 0.0
  %5495 = vmatprep.mubr.f32.mxu0 0.0
  %v5496 = vand.u32 %v5330, 4294901760
  %5497 = vmatmul.mubr.f32.gmra.mrb[0].mxu0 %v5496
  %v5498 = vpop.f32.mrb[0].mxu0
  %v5499 = vadd.f32 %v5408, %v5498
  %v5500 = vpop.f32.mrb[0].mxu0
  %5501 = vdwg.mxu0
  %5502 = vmatprep.subr.mxu0 0.0
  %v5503 = vand.u32 %v5317, 4294901760
  %v5504 = vsub.f32 %v5317, %v5503
  %5505 = vmatpush1.msra.mxu0 %v5504
  %5506 = vmatprep.subr.mxu0 0.0
  %v5507 = vand.u32 %v5318, 4294901760
  %v5508 = vsub.f32 %v5318, %v5507
  %5509 = vmatpush1.msra.mxu0 %v5508
  %5510 = vmatprep.subr.mxu0 0.0
  %v5511 = vand.u32 %v5319, 4294901760
  %v5512 = vsub.f32 %v5319, %v5511
  %5513 = vmatpush1.msra.mxu0 %v5512
  %5514 = vmatprep.subr.mxu0 0.0
  %v5515 = vand.u32 %v5320, 4294901760
  %v5516 = vsub.f32 %v5320, %v5515
  %5517 = vmatpush1.msra.mxu0 %v5516
  %5518 = vmatprep.subr.mxu0 0.0
  %5519 = vmatpush1.msra.mxu0 0.0
  %5520 = vmatprep.subr.mxu0 0.0
  %5521 = vmatpush1.msra.mxu0 0.0
  %5522 = vmatprep.subr.mxu0 0.0
  %5523 = vmatpush1.msra.mxu0 0.0
  %5524 = vmatprep.subr.mxu0 0.0
  %5525 = vmatpush1.msra.mxu0 0.0
  %5526 = vmatprep.subr.mxu0 0.0
  %5527 = vmatpush1.msra.mxu0 0.0
  %5528 = vmatprep.subr.mxu0 0.0
  %5529 = vmatpush1.msra.mxu0 0.0
  %5530 = vmatprep.subr.mxu0 0.0
  %5531 = vmatpush1.msra.mxu0 0.0
  %5532 = vmatprep.subr.mxu0 0.0
  %5533 = vmatpush1.msra.mxu0 0.0
  %5534 = vmatprep.subr.mxu0 0.0
  %5535 = vmatpush1.msra.mxu0 0.0
  %5536 = vmatprep.subr.mxu0 0.0
  %5537 = vmatpush1.msra.mxu0 0.0
  %5538 = vmatprep.subr.mxu0 0.0
  %5539 = vmatpush1.msra.mxu0 0.0
  %5540 = vmatprep.subr.mxu0 0.0
  %5541 = vmatpush1.msra.mxu0 0.0
  %5542 = vmatprep.subr.mxu0 0.0
  %5543 = vmatpush1.msra.mxu0 0.0
  %5544 = vmatprep.subr.mxu0 0.0
  %5545 = vmatpush1.msra.mxu0 0.0
  %5546 = vmatprep.subr.mxu0 0.0
  %5547 = vmatpush1.msra.mxu0 0.0
  %5548 = vmatprep.subr.mxu0 0.0
  %5549 = vmatpush1.msra.mxu0 0.0
  %5550 = vmatprep.subr.mxu0 0.0
  %5551 = vmatpush1.msra.mxu0 0.0
  %5552 = vmatprep.subr.mxu0 0.0
  %5553 = vmatpush1.msra.mxu0 0.0
  %5554 = vmatprep.subr.mxu0 0.0
  %5555 = vmatpush1.msra.mxu0 0.0
  %5556 = vmatprep.subr.mxu0 0.0
  %5557 = vmatpush1.msra.mxu0 0.0
  %5558 = vmatprep.subr.mxu0 0.0
  %5559 = vmatpush1.msra.mxu0 0.0
  %5560 = vmatprep.subr.mxu0 0.0
  %5561 = vmatpush1.msra.mxu0 0.0
  %5562 = vmatprep.subr.mxu0 0.0
  %5563 = vmatpush1.msra.mxu0 0.0
  %5564 = vmatprep.subr.mxu0 0.0
  %5565 = vmatpush1.msra.mxu0 0.0
  %5566 = vmatprep.subr.mxu0 0.0
  %5567 = vmatpush1.msra.mxu0 0.0
  %5568 = vmatprep.subr.mxu0 0.0
  %5569 = vmatpush1.msra.mxu0 0.0
  %5570 = vmatprep.subr.mxu0 0.0
  %5571 = vmatpush1.msra.mxu0 0.0
  %5572 = vmatprep.subr.mxu0 0.0
  %5573 = vmatpush1.msra.mxu0 0.0
  %5574 = vmatprep.mubr.f32.mxu0 0.0
  %v5575 = vand.u32 %v5330, 4294901760
  %v5576 = vsub.f32 %v5330, %v5575
  %5577 = vmatmul.mubr.f32.gmra.mrb[0].mxu0 %v5576
  %v5578 = vpop.f32.mrb[0].mxu0
  %v5579 = vadd.f32 %v5499, %v5578
  %v5580 = vpop.f32.mrb[0].mxu0
  %5581 = vdwg.mxu0
  %5582 = vmatprep.subr.mxu0 0.0
  %v5583 = vand.u32 %v5317, 4294901760
  %5584 = vmatpush1.msra.mxu0 %v5583
  %5585 = vmatprep.subr.mxu0 0.0
  %v5586 = vand.u32 %v5318, 4294901760
  %5587 = vmatpush1.msra.mxu0 %v5586
  %5588 = vmatprep.subr.mxu0 0.0
  %v5589 = vand.u32 %v5319, 4294901760
  %5590 = vmatpush1.msra.mxu0 %v5589
  %5591 = vmatprep.subr.mxu0 0.0
  %v5592 = vand.u32 %v5320, 4294901760
  %5593 = vmatpush1.msra.mxu0 %v5592
  %5594 = vmatprep.subr.mxu0 0.0
  %5595 = vmatpush1.msra.mxu0 0.0
  %5596 = vmatprep.subr.mxu0 0.0
  %5597 = vmatpush1.msra.mxu0 0.0
  %5598 = vmatprep.subr.mxu0 0.0
  %5599 = vmatpush1.msra.mxu0 0.0
  %5600 = vmatprep.subr.mxu0 0.0
  %5601 = vmatpush1.msra.mxu0 0.0
  %5602 = vmatprep.subr.mxu0 0.0
  %5603 = vmatpush1.msra.mxu0 0.0
  %5604 = vmatprep.subr.mxu0 0.0
  %5605 = vmatpush1.msra.mxu0 0.0
  %5606 = vmatprep.subr.mxu0 0.0
  %5607 = vmatpush1.msra.mxu0 0.0
  %5608 = vmatprep.subr.mxu0 0.0
  %5609 = vmatpush1.msra.mxu0 0.0
  %5610 = vmatprep.subr.mxu0 0.0
  %5611 = vmatpush1.msra.mxu0 0.0
  %5612 = vmatprep.subr.mxu0 0.0
  %5613 = vmatpush1.msra.mxu0 0.0
  %5614 = vmatprep.subr.mxu0 0.0
  %5615 = vmatpush1.msra.mxu0 0.0
  %5616 = vmatprep.subr.mxu0 0.0
  %5617 = vmatpush1.msra.mxu0 0.0
  %5618 = vmatprep.subr.mxu0 0.0
  %5619 = vmatpush1.msra.mxu0 0.0
  %5620 = vmatprep.subr.mxu0 0.0
  %5621 = vmatpush1.msra.mxu0 0.0
  %5622 = vmatprep.subr.mxu0 0.0
  %5623 = vmatpush1.msra.mxu0 0.0
  %5624 = vmatprep.subr.mxu0 0.0
  %5625 = vmatpush1.msra.mxu0 0.0
  %5626 = vmatprep.subr.mxu0 0.0
  %5627 = vmatpush1.msra.mxu0 0.0
  %5628 = vmatprep.subr.mxu0 0.0
  %5629 = vmatpush1.msra.mxu0 0.0
  %5630 = vmatprep.subr.mxu0 0.0
  %5631 = vmatpush1.msra.mxu0 0.0
  %5632 = vmatprep.subr.mxu0 0.0
  %5633 = vmatpush1.msra.mxu0 0.0
  %5634 = vmatprep.subr.mxu0 0.0
  %5635 = vmatpush1.msra.mxu0 0.0
  %5636 = vmatprep.subr.mxu0 0.0
  %5637 = vmatpush1.msra.mxu0 0.0
  %5638 = vmatprep.subr.mxu0 0.0
  %5639 = vmatpush1.msra.mxu0 0.0
  %5640 = vmatprep.subr.mxu0 0.0
  %5641 = vmatpush1.msra.mxu0 0.0
  %5642 = vmatprep.subr.mxu0 0.0
  %5643 = vmatpush1.msra.mxu0 0.0
  %5644 = vmatprep.subr.mxu0 0.0
  %5645 = vmatpush1.msra.mxu0 0.0
  %5646 = vmatprep.subr.mxu0 0.0
  %5647 = vmatpush1.msra.mxu0 0.0
  %5648 = vmatprep.subr.mxu0 0.0
  %5649 = vmatpush1.msra.mxu0 0.0
  %5650 = vmatprep.mubr.f32.mxu0 0.0
  %v5651 = vand.u32 %v5330, 4294901760
  %v5652 = vsub.f32 %v5330, %v5651
  %v5653 = vand.u32 %v5652, 4294901760
  %5654 = vmatmul.mubr.f32.gmra.mrb[0].mxu0 %v5653
  %v5655 = vpop.f32.mrb[0].mxu0
  %v5656 = vadd.f32 %v5579, %v5655
  %v5657 = vpop.f32.mrb[0].mxu0
  %5658 = vdwg.mxu0
  %5659 = vmatprep.subr.mxu0 0.0
  %v5660 = vand.u32 %v5317, 4294901760
  %v5661 = vsub.f32 %v5317, %v5660
  %v5662 = vand.u32 %v5661, 4294901760
  %5663 = vmatpush1.msra.mxu0 %v5662
  %5664 = vmatprep.subr.mxu0 0.0
  %v5665 = vand.u32 %v5318, 4294901760
  %v5666 = vsub.f32 %v5318, %v5665
  %v5667 = vand.u32 %v5666, 4294901760
  %5668 = vmatpush1.msra.mxu0 %v5667
  %5669 = vmatprep.subr.mxu0 0.0
  %v5670 = vand.u32 %v5319, 4294901760
  %v5671 = vsub.f32 %v5319, %v5670
  %v5672 = vand.u32 %v5671, 4294901760
  %5673 = vmatpush1.msra.mxu0 %v5672
  %5674 = vmatprep.subr.mxu0 0.0
  %v5675 = vand.u32 %v5320, 4294901760
  %v5676 = vsub.f32 %v5320, %v5675
  %v5677 = vand.u32 %v5676, 4294901760
  %5678 = vmatpush1.msra.mxu0 %v5677
  %5679 = vmatprep.subr.mxu0 0.0
  %5680 = vmatpush1.msra.mxu0 0.0
  %5681 = vmatprep.subr.mxu0 0.0
  %5682 = vmatpush1.msra.mxu0 0.0
  %5683 = vmatprep.subr.mxu0 0.0
  %5684 = vmatpush1.msra.mxu0 0.0
  %5685 = vmatprep.subr.mxu0 0.0
  %5686 = vmatpush1.msra.mxu0 0.0
  %5687 = vmatprep.subr.mxu0 0.0
  %5688 = vmatpush1.msra.mxu0 0.0
  %5689 = vmatprep.subr.mxu0 0.0
  %5690 = vmatpush1.msra.mxu0 0.0
  %5691 = vmatprep.subr.mxu0 0.0
  %5692 = vmatpush1.msra.mxu0 0.0
  %5693 = vmatprep.subr.mxu0 0.0
  %5694 = vmatpush1.msra.mxu0 0.0
  %5695 = vmatprep.subr.mxu0 0.0
  %5696 = vmatpush1.msra.mxu0 0.0
  %5697 = vmatprep.subr.mxu0 0.0
  %5698 = vmatpush1.msra.mxu0 0.0
  %5699 = vmatprep.subr.mxu0 0.0
  %5700 = vmatpush1.msra.mxu0 0.0
  %5701 = vmatprep.subr.mxu0 0.0
  %5702 = vmatpush1.msra.mxu0 0.0
  %5703 = vmatprep.subr.mxu0 0.0
  %5704 = vmatpush1.msra.mxu0 0.0
  %5705 = vmatprep.subr.mxu0 0.0
  %5706 = vmatpush1.msra.mxu0 0.0
  %5707 = vmatprep.subr.mxu0 0.0
  %5708 = vmatpush1.msra.mxu0 0.0
  %5709 = vmatprep.subr.mxu0 0.0
  %5710 = vmatpush1.msra.mxu0 0.0
  %5711 = vmatprep.subr.mxu0 0.0
  %5712 = vmatpush1.msra.mxu0 0.0
  %5713 = vmatprep.subr.mxu0 0.0
  %5714 = vmatpush1.msra.mxu0 0.0
  %5715 = vmatprep.subr.mxu0 0.0
  %5716 = vmatpush1.msra.mxu0 0.0
  %5717 = vmatprep.subr.mxu0 0.0
  %5718 = vmatpush1.msra.mxu0 0.0
  %5719 = vmatprep.subr.mxu0 0.0
  %5720 = vmatpush1.msra.mxu0 0.0
  %5721 = vmatprep.subr.mxu0 0.0
  %5722 = vmatpush1.msra.mxu0 0.0
  %5723 = vmatprep.subr.mxu0 0.0
  %5724 = vmatpush1.msra.mxu0 0.0
  %5725 = vmatprep.subr.mxu0 0.0
  %5726 = vmatpush1.msra.mxu0 0.0
  %5727 = vmatprep.subr.mxu0 0.0
  %5728 = vmatpush1.msra.mxu0 0.0
  %5729 = vmatprep.subr.mxu0 0.0
  %5730 = vmatpush1.msra.mxu0 0.0
  %5731 = vmatprep.subr.mxu0 0.0
  %5732 = vmatpush1.msra.mxu0 0.0
  %5733 = vmatprep.subr.mxu0 0.0
  %5734 = vmatpush1.msra.mxu0 0.0
  %5735 = vmatprep.mubr.f32.mxu0 0.0
  %v5736 = vand.u32 %v5330, 4294901760
  %5737 = vmatmul.mubr.f32.gmra.mrb[0].mxu0 %v5736
  %v5738 = vpop.f32.mrb[0].mxu0
  %v5739 = vadd.f32 %v5656, %v5738
  %v5740 = vpop.f32.mrb[0].mxu0
  %5741 = vdwg.mxu0
  %5742 = vmatprep.subr.mxu0 0.0
  %v5743 = vand.u32 %v5317, 4294901760
  %5744 = vmatpush1.msra.mxu0 %v5743
  %5745 = vmatprep.subr.mxu0 0.0
  %v5746 = vand.u32 %v5318, 4294901760
  %5747 = vmatpush1.msra.mxu0 %v5746
  %5748 = vmatprep.subr.mxu0 0.0
  %v5749 = vand.u32 %v5319, 4294901760
  %5750 = vmatpush1.msra.mxu0 %v5749
  %5751 = vmatprep.subr.mxu0 0.0
  %v5752 = vand.u32 %v5320, 4294901760
  %5753 = vmatpush1.msra.mxu0 %v5752
  %5754 = vmatprep.subr.mxu0 0.0
  %5755 = vmatpush1.msra.mxu0 0.0
  %5756 = vmatprep.subr.mxu0 0.0
  %5757 = vmatpush1.msra.mxu0 0.0
  %5758 = vmatprep.subr.mxu0 0.0
  %5759 = vmatpush1.msra.mxu0 0.0
  %5760 = vmatprep.subr.mxu0 0.0
  %5761 = vmatpush1.msra.mxu0 0.0
  %5762 = vmatprep.subr.mxu0 0.0
  %5763 = vmatpush1.msra.mxu0 0.0
  %5764 = vmatprep.subr.mxu0 0.0
  %5765 = vmatpush1.msra.mxu0 0.0
  %5766 = vmatprep.subr.mxu0 0.0
  %5767 = vmatpush1.msra.mxu0 0.0
  %5768 = vmatprep.subr.mxu0 0.0
  %5769 = vmatpush1.msra.mxu0 0.0
  %5770 = vmatprep.subr.mxu0 0.0
  %5771 = vmatpush1.msra.mxu0 0.0
  %5772 = vmatprep.subr.mxu0 0.0
  %5773 = vmatpush1.msra.mxu0 0.0
  %5774 = vmatprep.subr.mxu0 0.0
  %5775 = vmatpush1.msra.mxu0 0.0
  %5776 = vmatprep.subr.mxu0 0.0
  %5777 = vmatpush1.msra.mxu0 0.0
  %5778 = vmatprep.subr.mxu0 0.0
  %5779 = vmatpush1.msra.mxu0 0.0
  %5780 = vmatprep.subr.mxu0 0.0
  %5781 = vmatpush1.msra.mxu0 0.0
  %5782 = vmatprep.subr.mxu0 0.0
  %5783 = vmatpush1.msra.mxu0 0.0
  %5784 = vmatprep.subr.mxu0 0.0
  %5785 = vmatpush1.msra.mxu0 0.0
  %5786 = vmatprep.subr.mxu0 0.0
  %5787 = vmatpush1.msra.mxu0 0.0
  %5788 = vmatprep.subr.mxu0 0.0
  %5789 = vmatpush1.msra.mxu0 0.0
  %5790 = vmatprep.subr.mxu0 0.0
  %5791 = vmatpush1.msra.mxu0 0.0
  %5792 = vmatprep.subr.mxu0 0.0
  %5793 = vmatpush1.msra.mxu0 0.0
  %5794 = vmatprep.subr.mxu0 0.0
  %5795 = vmatpush1.msra.mxu0 0.0
  %5796 = vmatprep.subr.mxu0 0.0
  %5797 = vmatpush1.msra.mxu0 0.0
  %5798 = vmatprep.subr.mxu0 0.0
  %5799 = vmatpush1.msra.mxu0 0.0
  %5800 = vmatprep.subr.mxu0 0.0
  %5801 = vmatpush1.msra.mxu0 0.0
  %5802 = vmatprep.subr.mxu0 0.0
  %5803 = vmatpush1.msra.mxu0 0.0
  %5804 = vmatprep.subr.mxu0 0.0
  %5805 = vmatpush1.msra.mxu0 0.0
  %5806 = vmatprep.subr.mxu0 0.0
  %5807 = vmatpush1.msra.mxu0 0.0
  %5808 = vmatprep.subr.mxu0 0.0
  %5809 = vmatpush1.msra.mxu0 0.0
  %5810 = vmatprep.mubr.f32.mxu0 0.0
  %v5811 = vand.u32 %v5330, 4294901760
  %5812 = vmatmul.mubr.f32.gmra.mrb[0].mxu0 %v5811
  %v5813 = vpop.f32.mrb[0].mxu0
  %v5814 = vadd.f32 %v5739, %v5813
  %v5815 = vpop.f32.mrb[0].mxu0
  %5816 = vdwg.mxu0
  %v5817 = vmul.f32 %v5814, %v5814
  %v5818 = vld [vmem:[%s6] sm:$0xff]
  %v5819 = vld [vmem:[%s6 + $0x8] sm:$0xff]
  %v5820 = vld [vmem:[%s6 + $0x10] sm:$0xff]
  %v5821 = vld [vmem:[%s6 + $0x18] sm:$0xff]
  %v5822 = vld [vmem:[%s6 + $0x20] sm:$0xff]
  %v5823 = vld [vmem:[%s6 + $0x28] sm:$0xff]
  %v5824 = vld [vmem:[%s6 + $0x30] sm:$0xff]
  %v5825 = vld [vmem:[%s6 + $0x38] sm:$0xff]
  %v5826 = vld [vmem:[%s6 + $0x40] sm:$0xff]
  %v5827 = vld [vmem:[%s6 + $0x48] sm:$0xff]
  %v5828 = vld [vmem:[%s6 + $0x50] sm:$0xff]
  %v5829 = vld [vmem:[%s6 + $0x58] sm:$0xff]
  %v5830 = vld [vmem:[%s6 + $0x60] sm:$0xff]
  %v5831 = vld [vmem:[%s6 + $0x68] sm:$0xff]
  %v5832 = vld [vmem:[%s6 + $0x70] sm:$0xff]
  %v5833 = vld [vmem:[%s6 + $0x78] sm:$0xff]
  %5834 = vmatprep.subr.mxu0 0.0
  %v5835 = vand.u32 %v5818, 4294901760
  %5836 = vmatpush1.msra.mxu0 %v5835
  %5837 = vmatprep.subr.mxu0 0.0
  %v5838 = vand.u32 %v5819, 4294901760
  %5839 = vmatpush1.msra.mxu0 %v5838
  %5840 = vmatprep.subr.mxu0 0.0
  %v5841 = vand.u32 %v5820, 4294901760
  %5842 = vmatpush1.msra.mxu0 %v5841
  %5843 = vmatprep.subr.mxu0 0.0
  %v5844 = vand.u32 %v5821, 4294901760
  %5845 = vmatpush1.msra.mxu0 %v5844
  %5846 = vmatprep.subr.mxu0 0.0
  %v5847 = vand.u32 %v5822, 4294901760
  %5848 = vmatpush1.msra.mxu0 %v5847
  %5849 = vmatprep.subr.mxu0 0.0
  %v5850 = vand.u32 %v5823, 4294901760
  %5851 = vmatpush1.msra.mxu0 %v5850
  %5852 = vmatprep.subr.mxu0 0.0
  %v5853 = vand.u32 %v5824, 4294901760
  %5854 = vmatpush1.msra.mxu0 %v5853
  %5855 = vmatprep.subr.mxu0 0.0
  %v5856 = vand.u32 %v5825, 4294901760
  %5857 = vmatpush1.msra.mxu0 %v5856
  %5858 = vmatprep.subr.mxu0 0.0
  %v5859 = vand.u32 %v5826, 4294901760
  %5860 = vmatpush1.msra.mxu0 %v5859
  %5861 = vmatprep.subr.mxu0 0.0
  %v5862 = vand.u32 %v5827, 4294901760
  %5863 = vmatpush1.msra.mxu0 %v5862
  %5864 = vmatprep.subr.mxu0 0.0
  %v5865 = vand.u32 %v5828, 4294901760
  %5866 = vmatpush1.msra.mxu0 %v5865
  %5867 = vmatprep.subr.mxu0 0.0
  %v5868 = vand.u32 %v5829, 4294901760
  %5869 = vmatpush1.msra.mxu0 %v5868
  %5870 = vmatprep.subr.mxu0 0.0
  %v5871 = vand.u32 %v5830, 4294901760
  %5872 = vmatpush1.msra.mxu0 %v5871
  %5873 = vmatprep.subr.mxu0 0.0
  %v5874 = vand.u32 %v5831, 4294901760
  %5875 = vmatpush1.msra.mxu0 %v5874
  %5876 = vmatprep.subr.mxu0 0.0
  %v5877 = vand.u32 %v5832, 4294901760
  %5878 = vmatpush1.msra.mxu0 %v5877
  %5879 = vmatprep.subr.mxu0 0.0
  %v5880 = vand.u32 %v5833, 4294901760
  %5881 = vmatpush1.msra.mxu0 %v5880
  %5882 = vmatprep.subr.mxu0 0.0
  %5883 = vmatpush1.msra.mxu0 0.0
  %5884 = vmatprep.subr.mxu0 0.0
  %5885 = vmatpush1.msra.mxu0 0.0
  %5886 = vmatprep.subr.mxu0 0.0
  %5887 = vmatpush1.msra.mxu0 0.0
  %5888 = vmatprep.subr.mxu0 0.0
  %5889 = vmatpush1.msra.mxu0 0.0
  %5890 = vmatprep.subr.mxu0 0.0
  %5891 = vmatpush1.msra.mxu0 0.0
  %5892 = vmatprep.subr.mxu0 0.0
  %5893 = vmatpush1.msra.mxu0 0.0
  %5894 = vmatprep.subr.mxu0 0.0
  %5895 = vmatpush1.msra.mxu0 0.0
  %5896 = vmatprep.subr.mxu0 0.0
  %5897 = vmatpush1.msra.mxu0 0.0
  %5898 = vmatprep.subr.mxu0 0.0
  %5899 = vmatpush1.msra.mxu0 0.0
  %5900 = vmatprep.subr.mxu0 0.0
  %5901 = vmatpush1.msra.mxu0 0.0
  %5902 = vmatprep.subr.mxu0 0.0
  %5903 = vmatpush1.msra.mxu0 0.0
  %5904 = vmatprep.subr.mxu0 0.0
  %5905 = vmatpush1.msra.mxu0 0.0
  %5906 = vmatprep.subr.mxu0 0.0
  %5907 = vmatpush1.msra.mxu0 0.0
  %5908 = vmatprep.subr.mxu0 0.0
  %5909 = vmatpush1.msra.mxu0 0.0
  %5910 = vmatprep.subr.mxu0 0.0
  %5911 = vmatpush1.msra.mxu0 0.0
  %5912 = vmatprep.subr.mxu0 0.0
  %5913 = vmatpush1.msra.mxu0 0.0
  %5914 = vmatprep.mubr.f32.mxu0 0.0
  %v5915 = vand.u32 %v5817, 4294901760
  %v5916 = vsub.f32 %v5817, %v5915
  %v5917 = vand.u32 %v5916, 4294901760
  %v5918 = vsub.f32 %v5916, %v5917
  %v5919 = vand.u32 %v5918, 4294901760
  %5920 = vmatmul.mubr.f32.gmra.mrb[0].mxu0 %v5919
  %v5921 = vpop.f32.mrb[0].mxu0
  %v5922 = vadd.f32 0.0, %v5921
  %v5923 = vpop.f32.mrb[0].mxu0
  %5924 = vdwg.mxu0
  %5925 = vmatprep.subr.mxu0 0.0
  %v5926 = vand.u32 %v5818, 4294901760
  %v5927 = vsub.f32 %v5818, %v5926
  %v5928 = vand.u32 %v5927, 4294901760
  %v5929 = vsub.f32 %v5927, %v5928
  %v5930 = vand.u32 %v5929, 4294901760
  %5931 = vmatpush1.msra.mxu0 %v5930
  %5932 = vmatprep.subr.mxu0 0.0
  %v5933 = vand.u32 %v5819, 4294901760
  %v5934 = vsub.f32 %v5819, %v5933
  %v5935 = vand.u32 %v5934, 4294901760
  %v5936 = vsub.f32 %v5934, %v5935
  %v5937 = vand.u32 %v5936, 4294901760
  %5938 = vmatpush1.msra.mxu0 %v5937
  %5939 = vmatprep.subr.mxu0 0.0
  %v5940 = vand.u32 %v5820, 4294901760
  %v5941 = vsub.f32 %v5820, %v5940
  %v5942 = vand.u32 %v5941, 4294901760
  %v5943 = vsub.f32 %v5941, %v5942
  %v5944 = vand.u32 %v5943, 4294901760
  %5945 = vmatpush1.msra.mxu0 %v5944
  %5946 = vmatprep.subr.mxu0 0.0
  %v5947 = vand.u32 %v5821, 4294901760
  %v5948 = vsub.f32 %v5821, %v5947
  %v5949 = vand.u32 %v5948, 4294901760
  %v5950 = vsub.f32 %v5948, %v5949
  %v5951 = vand.u32 %v5950, 4294901760
  %5952 = vmatpush1.msra.mxu0 %v5951
  %5953 = vmatprep.subr.mxu0 0.0
  %v5954 = vand.u32 %v5822, 4294901760
  %v5955 = vsub.f32 %v5822, %v5954
  %v5956 = vand.u32 %v5955, 4294901760
  %v5957 = vsub.f32 %v5955, %v5956
  %v5958 = vand.u32 %v5957, 4294901760
  %5959 = vmatpush1.msra.mxu0 %v5958
  %5960 = vmatprep.subr.mxu0 0.0
  %v5961 = vand.u32 %v5823, 4294901760
  %v5962 = vsub.f32 %v5823, %v5961
  %v5963 = vand.u32 %v5962, 4294901760
  %v5964 = vsub.f32 %v5962, %v5963
  %v5965 = vand.u32 %v5964, 4294901760
  %5966 = vmatpush1.msra.mxu0 %v5965
  %5967 = vmatprep.subr.mxu0 0.0
  %v5968 = vand.u32 %v5824, 4294901760
  %v5969 = vsub.f32 %v5824, %v5968
  %v5970 = vand.u32 %v5969, 4294901760
  %v5971 = vsub.f32 %v5969, %v5970
  %v5972 = vand.u32 %v5971, 4294901760
  %5973 = vmatpush1.msra.mxu0 %v5972
  %5974 = vmatprep.subr.mxu0 0.0
  %v5975 = vand.u32 %v5825, 4294901760
  %v5976 = vsub.f32 %v5825, %v5975
  %v5977 = vand.u32 %v5976, 4294901760
  %v5978 = vsub.f32 %v5976, %v5977
  %v5979 = vand.u32 %v5978, 4294901760
  %5980 = vmatpush1.msra.mxu0 %v5979
  %5981 = vmatprep.subr.mxu0 0.0
  %v5982 = vand.u32 %v5826, 4294901760
  %v5983 = vsub.f32 %v5826, %v5982
  %v5984 = vand.u32 %v5983, 4294901760
  %v5985 = vsub.f32 %v5983, %v5984
  %v5986 = vand.u32 %v5985, 4294901760
  %5987 = vmatpush1.msra.mxu0 %v5986
  %5988 = vmatprep.subr.mxu0 0.0
  %v5989 = vand.u32 %v5827, 4294901760
  %v5990 = vsub.f32 %v5827, %v5989
  %v5991 = vand.u32 %v5990, 4294901760
  %v5992 = vsub.f32 %v5990, %v5991
  %v5993 = vand.u32 %v5992, 4294901760
  %5994 = vmatpush1.msra.mxu0 %v5993
  %5995 = vmatprep.subr.mxu0 0.0
  %v5996 = vand.u32 %v5828, 4294901760
  %v5997 = vsub.f32 %v5828, %v5996
  %v5998 = vand.u32 %v5997, 4294901760
  %v5999 = vsub.f32 %v5997, %v5998
  %v6000 = vand.u32 %v5999, 4294901760
  %6001 = vmatpush1.msra.mxu0 %v6000
  %6002 = vmatprep.subr.mxu0 0.0
  %v6003 = vand.u32 %v5829, 4294901760
  %v6004 = vsub.f32 %v5829, %v6003
  %v6005 = vand.u32 %v6004, 4294901760
  %v6006 = vsub.f32 %v6004, %v6005
  %v6007 = vand.u32 %v6006, 4294901760
  %6008 = vmatpush1.msra.mxu0 %v6007
  %6009 = vmatprep.subr.mxu0 0.0
  %v6010 = vand.u32 %v5830, 4294901760
  %v6011 = vsub.f32 %v5830, %v6010
  %v6012 = vand.u32 %v6011, 4294901760
  %v6013 = vsub.f32 %v6011, %v6012
  %v6014 = vand.u32 %v6013, 4294901760
  %6015 = vmatpush1.msra.mxu0 %v6014
  %6016 = vmatprep.subr.mxu0 0.0
  %v6017 = vand.u32 %v5831, 4294901760
  %v6018 = vsub.f32 %v5831, %v6017
  %v6019 = vand.u32 %v6018, 4294901760
  %v6020 = vsub.f32 %v6018, %v6019
  %v6021 = vand.u32 %v6020, 4294901760
  %6022 = vmatpush1.msra.mxu0 %v6021
  %6023 = vmatprep.subr.mxu0 0.0
  %v6024 = vand.u32 %v5832, 4294901760
  %v6025 = vsub.f32 %v5832, %v6024
  %v6026 = vand.u32 %v6025, 4294901760
  %v6027 = vsub.f32 %v6025, %v6026
  %v6028 = vand.u32 %v6027, 4294901760
  %6029 = vmatpush1.msra.mxu0 %v6028
  %6030 = vmatprep.subr.mxu0 0.0
  %v6031 = vand.u32 %v5833, 4294901760
  %v6032 = vsub.f32 %v5833, %v6031
  %v6033 = vand.u32 %v6032, 4294901760
  %v6034 = vsub.f32 %v6032, %v6033
  %v6035 = vand.u32 %v6034, 4294901760
  %6036 = vmatpush1.msra.mxu0 %v6035
  %6037 = vmatprep.subr.mxu0 0.0
  %6038 = vmatpush1.msra.mxu0 0.0
  %6039 = vmatprep.subr.mxu0 0.0
  %6040 = vmatpush1.msra.mxu0 0.0
  %6041 = vmatprep.subr.mxu0 0.0
  %6042 = vmatpush1.msra.mxu0 0.0
  %6043 = vmatprep.subr.mxu0 0.0
  %6044 = vmatpush1.msra.mxu0 0.0
  %6045 = vmatprep.subr.mxu0 0.0
  %6046 = vmatpush1.msra.mxu0 0.0
  %6047 = vmatprep.subr.mxu0 0.0
  %6048 = vmatpush1.msra.mxu0 0.0
  %6049 = vmatprep.subr.mxu0 0.0
  %6050 = vmatpush1.msra.mxu0 0.0
  %6051 = vmatprep.subr.mxu0 0.0
  %6052 = vmatpush1.msra.mxu0 0.0
  %6053 = vmatprep.subr.mxu0 0.0
  %6054 = vmatpush1.msra.mxu0 0.0
  %6055 = vmatprep.subr.mxu0 0.0
  %6056 = vmatpush1.msra.mxu0 0.0
  %6057 = vmatprep.subr.mxu0 0.0
  %6058 = vmatpush1.msra.mxu0 0.0
  %6059 = vmatprep.subr.mxu0 0.0
  %6060 = vmatpush1.msra.mxu0 0.0
  %6061 = vmatprep.subr.mxu0 0.0
  %6062 = vmatpush1.msra.mxu0 0.0
  %6063 = vmatprep.subr.mxu0 0.0
  %6064 = vmatpush1.msra.mxu0 0.0
  %6065 = vmatprep.subr.mxu0 0.0
  %6066 = vmatpush1.msra.mxu0 0.0
  %6067 = vmatprep.subr.mxu0 0.0
  %6068 = vmatpush1.msra.mxu0 0.0
  %6069 = vmatprep.mubr.f32.mxu0 0.0
  %v6070 = vand.u32 %v5817, 4294901760
  %6071 = vmatmul.mubr.f32.gmra.mrb[0].mxu0 %v6070
  %v6072 = vpop.f32.mrb[0].mxu0
  %v6073 = vadd.f32 %v5922, %v6072
  %v6074 = vpop.f32.mrb[0].mxu0
  %6075 = vdwg.mxu0
  %6076 = vmatprep.subr.mxu0 0.0
  %v6077 = vand.u32 %v5818, 4294901760
  %v6078 = vsub.f32 %v5818, %v6077
  %6079 = vmatpush1.msra.mxu0 %v6078
  %6080 = vmatprep.subr.mxu0 0.0
  %v6081 = vand.u32 %v5819, 4294901760
  %v6082 = vsub.f32 %v5819, %v6081
  %6083 = vmatpush1.msra.mxu0 %v6082
  %6084 = vmatprep.subr.mxu0 0.0
  %v6085 = vand.u32 %v5820, 4294901760
  %v6086 = vsub.f32 %v5820, %v6085
  %6087 = vmatpush1.msra.mxu0 %v6086
  %6088 = vmatprep.subr.mxu0 0.0
  %v6089 = vand.u32 %v5821, 4294901760
  %v6090 = vsub.f32 %v5821, %v6089
  %6091 = vmatpush1.msra.mxu0 %v6090
  %6092 = vmatprep.subr.mxu0 0.0
  %v6093 = vand.u32 %v5822, 4294901760
  %v6094 = vsub.f32 %v5822, %v6093
  %6095 = vmatpush1.msra.mxu0 %v6094
  %6096 = vmatprep.subr.mxu0 0.0
  %v6097 = vand.u32 %v5823, 4294901760
  %v6098 = vsub.f32 %v5823, %v6097
  %6099 = vmatpush1.msra.mxu0 %v6098
  %6100 = vmatprep.subr.mxu0 0.0
  %v6101 = vand.u32 %v5824, 4294901760
  %v6102 = vsub.f32 %v5824, %v6101
  %6103 = vmatpush1.msra.mxu0 %v6102
  %6104 = vmatprep.subr.mxu0 0.0
  %v6105 = vand.u32 %v5825, 4294901760
  %v6106 = vsub.f32 %v5825, %v6105
  %6107 = vmatpush1.msra.mxu0 %v6106
  %6108 = vmatprep.subr.mxu0 0.0
  %v6109 = vand.u32 %v5826, 4294901760
  %v6110 = vsub.f32 %v5826, %v6109
  %6111 = vmatpush1.msra.mxu0 %v6110
  %6112 = vmatprep.subr.mxu0 0.0
  %v6113 = vand.u32 %v5827, 4294901760
  %v6114 = vsub.f32 %v5827, %v6113
  %6115 = vmatpush1.msra.mxu0 %v6114
  %6116 = vmatprep.subr.mxu0 0.0
  %v6117 = vand.u32 %v5828, 4294901760
  %v6118 = vsub.f32 %v5828, %v6117
  %6119 = vmatpush1.msra.mxu0 %v6118
  %6120 = vmatprep.subr.mxu0 0.0
  %v6121 = vand.u32 %v5829, 4294901760
  %v6122 = vsub.f32 %v5829, %v6121
  %6123 = vmatpush1.msra.mxu0 %v6122
  %6124 = vmatprep.subr.mxu0 0.0
  %v6125 = vand.u32 %v5830, 4294901760
  %v6126 = vsub.f32 %v5830, %v6125
  %6127 = vmatpush1.msra.mxu0 %v6126
  %6128 = vmatprep.subr.mxu0 0.0
  %v6129 = vand.u32 %v5831, 4294901760
  %v6130 = vsub.f32 %v5831, %v6129
  %6131 = vmatpush1.msra.mxu0 %v6130
  %6132 = vmatprep.subr.mxu0 0.0
  %v6133 = vand.u32 %v5832, 4294901760
  %v6134 = vsub.f32 %v5832, %v6133
  %6135 = vmatpush1.msra.mxu0 %v6134
  %6136 = vmatprep.subr.mxu0 0.0
  %v6137 = vand.u32 %v5833, 4294901760
  %v6138 = vsub.f32 %v5833, %v6137
  %6139 = vmatpush1.msra.mxu0 %v6138
  %6140 = vmatprep.subr.mxu0 0.0
  %6141 = vmatpush1.msra.mxu0 0.0
  %6142 = vmatprep.subr.mxu0 0.0
  %6143 = vmatpush1.msra.mxu0 0.0
  %6144 = vmatprep.subr.mxu0 0.0
  %6145 = vmatpush1.msra.mxu0 0.0
  %6146 = vmatprep.subr.mxu0 0.0
  %6147 = vmatpush1.msra.mxu0 0.0
  %6148 = vmatprep.subr.mxu0 0.0
  %6149 = vmatpush1.msra.mxu0 0.0
  %6150 = vmatprep.subr.mxu0 0.0
  %6151 = vmatpush1.msra.mxu0 0.0
  %6152 = vmatprep.subr.mxu0 0.0
  %6153 = vmatpush1.msra.mxu0 0.0
  %6154 = vmatprep.subr.mxu0 0.0
  %6155 = vmatpush1.msra.mxu0 0.0
  %6156 = vmatprep.subr.mxu0 0.0
  %6157 = vmatpush1.msra.mxu0 0.0
  %6158 = vmatprep.subr.mxu0 0.0
  %6159 = vmatpush1.msra.mxu0 0.0
  %6160 = vmatprep.subr.mxu0 0.0
  %6161 = vmatpush1.msra.mxu0 0.0
  %6162 = vmatprep.subr.mxu0 0.0
  %6163 = vmatpush1.msra.mxu0 0.0
  %6164 = vmatprep.subr.mxu0 0.0
  %6165 = vmatpush1.msra.mxu0 0.0
  %6166 = vmatprep.subr.mxu0 0.0
  %6167 = vmatpush1.msra.mxu0 0.0
  %6168 = vmatprep.subr.mxu0 0.0
  %6169 = vmatpush1.msra.mxu0 0.0
  %6170 = vmatprep.subr.mxu0 0.0
  %6171 = vmatpush1.msra.mxu0 0.0
  %6172 = vmatprep.mubr.f32.mxu0 0.0
  %v6173 = vand.u32 %v5817, 4294901760
  %v6174 = vsub.f32 %v5817, %v6173
  %6175 = vmatmul.mubr.f32.gmra.mrb[0].mxu0 %v6174
  %v6176 = vpop.f32.mrb[0].mxu0
  %v6177 = vadd.f32 %v6073, %v6176
  %v6178 = vpop.f32.mrb[0].mxu0
  %6179 = vdwg.mxu0
  %6180 = vmatprep.subr.mxu0 0.0
  %v6181 = vand.u32 %v5818, 4294901760
  %6182 = vmatpush1.msra.mxu0 %v6181
  %6183 = vmatprep.subr.mxu0 0.0
  %v6184 = vand.u32 %v5819, 4294901760
  %6185 = vmatpush1.msra.mxu0 %v6184
  %6186 = vmatprep.subr.mxu0 0.0
  %v6187 = vand.u32 %v5820, 4294901760
  %6188 = vmatpush1.msra.mxu0 %v6187
  %6189 = vmatprep.subr.mxu0 0.0
  %v6190 = vand.u32 %v5821, 4294901760
  %6191 = vmatpush1.msra.mxu0 %v6190
  %6192 = vmatprep.subr.mxu0 0.0
  %v6193 = vand.u32 %v5822, 4294901760
  %6194 = vmatpush1.msra.mxu0 %v6193
  %6195 = vmatprep.subr.mxu0 0.0
  %v6196 = vand.u32 %v5823, 4294901760
  %6197 = vmatpush1.msra.mxu0 %v6196
  %6198 = vmatprep.subr.mxu0 0.0
  %v6199 = vand.u32 %v5824, 4294901760
  %6200 = vmatpush1.msra.mxu0 %v6199
  %6201 = vmatprep.subr.mxu0 0.0
  %v6202 = vand.u32 %v5825, 4294901760
  %6203 = vmatpush1.msra.mxu0 %v6202
  %6204 = vmatprep.subr.mxu0 0.0
  %v6205 = vand.u32 %v5826, 4294901760
  %6206 = vmatpush1.msra.mxu0 %v6205
  %6207 = vmatprep.subr.mxu0 0.0
  %v6208 = vand.u32 %v5827, 4294901760
  %6209 = vmatpush1.msra.mxu0 %v6208
  %6210 = vmatprep.subr.mxu0 0.0
  %v6211 = vand.u32 %v5828, 4294901760
  %6212 = vmatpush1.msra.mxu0 %v6211
  %6213 = vmatprep.subr.mxu0 0.0
  %v6214 = vand.u32 %v5829, 4294901760
  %6215 = vmatpush1.msra.mxu0 %v6214
  %6216 = vmatprep.subr.mxu0 0.0
  %v6217 = vand.u32 %v5830, 4294901760
  %6218 = vmatpush1.msra.mxu0 %v6217
  %6219 = vmatprep.subr.mxu0 0.0
  %v6220 = vand.u32 %v5831, 4294901760
  %6221 = vmatpush1.msra.mxu0 %v6220
  %6222 = vmatprep.subr.mxu0 0.0
  %v6223 = vand.u32 %v5832, 4294901760
  %6224 = vmatpush1.msra.mxu0 %v6223
  %6225 = vmatprep.subr.mxu0 0.0
  %v6226 = vand.u32 %v5833, 4294901760
  %6227 = vmatpush1.msra.mxu0 %v6226
  %6228 = vmatprep.subr.mxu0 0.0
  %6229 = vmatpush1.msra.mxu0 0.0
  %6230 = vmatprep.subr.mxu0 0.0
  %6231 = vmatpush1.msra.mxu0 0.0
  %6232 = vmatprep.subr.mxu0 0.0
  %6233 = vmatpush1.msra.mxu0 0.0
  %6234 = vmatprep.subr.mxu0 0.0
  %6235 = vmatpush1.msra.mxu0 0.0
  %6236 = vmatprep.subr.mxu0 0.0
  %6237 = vmatpush1.msra.mxu0 0.0
  %6238 = vmatprep.subr.mxu0 0.0
  %6239 = vmatpush1.msra.mxu0 0.0
  %6240 = vmatprep.subr.mxu0 0.0
  %6241 = vmatpush1.msra.mxu0 0.0
  %6242 = vmatprep.subr.mxu0 0.0
  %6243 = vmatpush1.msra.mxu0 0.0
  %6244 = vmatprep.subr.mxu0 0.0
  %6245 = vmatpush1.msra.mxu0 0.0
  %6246 = vmatprep.subr.mxu0 0.0
  %6247 = vmatpush1.msra.mxu0 0.0
  %6248 = vmatprep.subr.mxu0 0.0
  %6249 = vmatpush1.msra.mxu0 0.0
  %6250 = vmatprep.subr.mxu0 0.0
  %6251 = vmatpush1.msra.mxu0 0.0
  %6252 = vmatprep.subr.mxu0 0.0
  %6253 = vmatpush1.msra.mxu0 0.0
  %6254 = vmatprep.subr.mxu0 0.0
  %6255 = vmatpush1.msra.mxu0 0.0
  %6256 = vmatprep.subr.mxu0 0.0
  %6257 = vmatpush1.msra.mxu0 0.0
  %6258 = vmatprep.subr.mxu0 0.0
  %6259 = vmatpush1.msra.mxu0 0.0
  %6260 = vmatprep.mubr.f32.mxu0 0.0
  %v6261 = vand.u32 %v5817, 4294901760
  %v6262 = vsub.f32 %v5817, %v6261
  %v6263 = vand.u32 %v6262, 4294901760
  %6264 = vmatmul.mubr.f32.gmra.mrb[0].mxu0 %v6263
  %v6265 = vpop.f32.mrb[0].mxu0
  %v6266 = vadd.f32 %v6177, %v6265
  %v6267 = vpop.f32.mrb[0].mxu0
  %6268 = vdwg.mxu0
  %6269 = vmatprep.subr.mxu0 0.0
  %v6270 = vand.u32 %v5818, 4294901760
  %v6271 = vsub.f32 %v5818, %v6270
  %v6272 = vand.u32 %v6271, 4294901760
  %6273 = vmatpush1.msra.mxu0 %v6272
  %6274 = vmatprep.subr.mxu0 0.0
  %v6275 = vand.u32 %v5819, 4294901760
  %v6276 = vsub.f32 %v5819, %v6275
  %v6277 = vand.u32 %v6276, 4294901760
  %6278 = vmatpush1.msra.mxu0 %v6277
  %6279 = vmatprep.subr.mxu0 0.0
  %v6280 = vand.u32 %v5820, 4294901760
  %v6281 = vsub.f32 %v5820, %v6280
  %v6282 = vand.u32 %v6281, 4294901760
  %6283 = vmatpush1.msra.mxu0 %v6282
  %6284 = vmatprep.subr.mxu0 0.0
  %v6285 = vand.u32 %v5821, 4294901760
  %v6286 = vsub.f32 %v5821, %v6285
  %v6287 = vand.u32 %v6286, 4294901760
  %6288 = vmatpush1.msra.mxu0 %v6287
  %6289 = vmatprep.subr.mxu0 0.0
  %v6290 = vand.u32 %v5822, 4294901760
  %v6291 = vsub.f32 %v5822, %v6290
  %v6292 = vand.u32 %v6291, 4294901760
  %6293 = vmatpush1.msra.mxu0 %v6292
  %6294 = vmatprep.subr.mxu0 0.0
  %v6295 = vand.u32 %v5823, 4294901760
  %v6296 = vsub.f32 %v5823, %v6295
  %v6297 = vand.u32 %v6296, 4294901760
  %6298 = vmatpush1.msra.mxu0 %v6297
  %6299 = vmatprep.subr.mxu0 0.0
  %v6300 = vand.u32 %v5824, 4294901760
  %v6301 = vsub.f32 %v5824, %v6300
  %v6302 = vand.u32 %v6301, 4294901760
  %6303 = vmatpush1.msra.mxu0 %v6302
  %6304 = vmatprep.subr.mxu0 0.0
  %v6305 = vand.u32 %v5825, 4294901760
  %v6306 = vsub.f32 %v5825, %v6305
  %v6307 = vand.u32 %v6306, 4294901760
  %6308 = vmatpush1.msra.mxu0 %v6307
  %6309 = vmatprep.subr.mxu0 0.0
  %v6310 = vand.u32 %v5826, 4294901760
  %v6311 = vsub.f32 %v5826, %v6310
  %v6312 = vand.u32 %v6311, 4294901760
  %6313 = vmatpush1.msra.mxu0 %v6312
  %6314 = vmatprep.subr.mxu0 0.0
  %v6315 = vand.u32 %v5827, 4294901760
  %v6316 = vsub.f32 %v5827, %v6315
  %v6317 = vand.u32 %v6316, 4294901760
  %6318 = vmatpush1.msra.mxu0 %v6317
  %6319 = vmatprep.subr.mxu0 0.0
  %v6320 = vand.u32 %v5828, 4294901760
  %v6321 = vsub.f32 %v5828, %v6320
  %v6322 = vand.u32 %v6321, 4294901760
  %6323 = vmatpush1.msra.mxu0 %v6322
  %6324 = vmatprep.subr.mxu0 0.0
  %v6325 = vand.u32 %v5829, 4294901760
  %v6326 = vsub.f32 %v5829, %v6325
  %v6327 = vand.u32 %v6326, 4294901760
  %6328 = vmatpush1.msra.mxu0 %v6327
  %6329 = vmatprep.subr.mxu0 0.0
  %v6330 = vand.u32 %v5830, 4294901760
  %v6331 = vsub.f32 %v5830, %v6330
  %v6332 = vand.u32 %v6331, 4294901760
  %6333 = vmatpush1.msra.mxu0 %v6332
  %6334 = vmatprep.subr.mxu0 0.0
  %v6335 = vand.u32 %v5831, 4294901760
  %v6336 = vsub.f32 %v5831, %v6335
  %v6337 = vand.u32 %v6336, 4294901760
  %6338 = vmatpush1.msra.mxu0 %v6337
  %6339 = vmatprep.subr.mxu0 0.0
  %v6340 = vand.u32 %v5832, 4294901760
  %v6341 = vsub.f32 %v5832, %v6340
  %v6342 = vand.u32 %v6341, 4294901760
  %6343 = vmatpush1.msra.mxu0 %v6342
  %6344 = vmatprep.subr.mxu0 0.0
  %v6345 = vand.u32 %v5833, 4294901760
  %v6346 = vsub.f32 %v5833, %v6345
  %v6347 = vand.u32 %v6346, 4294901760
  %6348 = vmatpush1.msra.mxu0 %v6347
  %6349 = vmatprep.subr.mxu0 0.0
  %6350 = vmatpush1.msra.mxu0 0.0
  %6351 = vmatprep.subr.mxu0 0.0
  %6352 = vmatpush1.msra.mxu0 0.0
  %6353 = vmatprep.subr.mxu0 0.0
  %6354 = vmatpush1.msra.mxu0 0.0
  %6355 = vmatprep.subr.mxu0 0.0
  %6356 = vmatpush1.msra.mxu0 0.0
  %6357 = vmatprep.subr.mxu0 0.0
  %6358 = vmatpush1.msra.mxu0 0.0
  %6359 = vmatprep.subr.mxu0 0.0
  %6360 = vmatpush1.msra.mxu0 0.0
  %6361 = vmatprep.subr.mxu0 0.0
  %6362 = vmatpush1.msra.mxu0 0.0
  %6363 = vmatprep.subr.mxu0 0.0
  %6364 = vmatpush1.msra.mxu0 0.0
  %6365 = vmatprep.subr.mxu0 0.0
  %6366 = vmatpush1.msra.mxu0 0.0
  %6367 = vmatprep.subr.mxu0 0.0
  %6368 = vmatpush1.msra.mxu0 0.0
  %6369 = vmatprep.subr.mxu0 0.0
  %6370 = vmatpush1.msra.mxu0 0.0
  %6371 = vmatprep.subr.mxu0 0.0
  %6372 = vmatpush1.msra.mxu0 0.0
  %6373 = vmatprep.subr.mxu0 0.0
  %6374 = vmatpush1.msra.mxu0 0.0
  %6375 = vmatprep.subr.mxu0 0.0
  %6376 = vmatpush1.msra.mxu0 0.0
  %6377 = vmatprep.subr.mxu0 0.0
  %6378 = vmatpush1.msra.mxu0 0.0
  %6379 = vmatprep.subr.mxu0 0.0
  %6380 = vmatpush1.msra.mxu0 0.0
  %6381 = vmatprep.mubr.f32.mxu0 0.0
  %v6382 = vand.u32 %v5817, 4294901760
  %6383 = vmatmul.mubr.f32.gmra.mrb[0].mxu0 %v6382
  %v6384 = vpop.f32.mrb[0].mxu0
  %v6385 = vadd.f32 %v6266, %v6384
  %v6386 = vpop.f32.mrb[0].mxu0
  %6387 = vdwg.mxu0
  %6388 = vmatprep.subr.mxu0 0.0
  %v6389 = vand.u32 %v5818, 4294901760
  %6390 = vmatpush1.msra.mxu0 %v6389
  %6391 = vmatprep.subr.mxu0 0.0
  %v6392 = vand.u32 %v5819, 4294901760
  %6393 = vmatpush1.msra.mxu0 %v6392
  %6394 = vmatprep.subr.mxu0 0.0
  %v6395 = vand.u32 %v5820, 4294901760
  %6396 = vmatpush1.msra.mxu0 %v6395
  %6397 = vmatprep.subr.mxu0 0.0
  %v6398 = vand.u32 %v5821, 4294901760
  %6399 = vmatpush1.msra.mxu0 %v6398
  %6400 = vmatprep.subr.mxu0 0.0
  %v6401 = vand.u32 %v5822, 4294901760
  %6402 = vmatpush1.msra.mxu0 %v6401
  %6403 = vmatprep.subr.mxu0 0.0
  %v6404 = vand.u32 %v5823, 4294901760
  %6405 = vmatpush1.msra.mxu0 %v6404
  %6406 = vmatprep.subr.mxu0 0.0
  %v6407 = vand.u32 %v5824, 4294901760
  %6408 = vmatpush1.msra.mxu0 %v6407
  %6409 = vmatprep.subr.mxu0 0.0
  %v6410 = vand.u32 %v5825, 4294901760
  %6411 = vmatpush1.msra.mxu0 %v6410
  %6412 = vmatprep.subr.mxu0 0.0
  %v6413 = vand.u32 %v5826, 4294901760
  %6414 = vmatpush1.msra.mxu0 %v6413
  %6415 = vmatprep.subr.mxu0 0.0
  %v6416 = vand.u32 %v5827, 4294901760
  %6417 = vmatpush1.msra.mxu0 %v6416
  %6418 = vmatprep.subr.mxu0 0.0
  %v6419 = vand.u32 %v5828, 4294901760
  %6420 = vmatpush1.msra.mxu0 %v6419
  %6421 = vmatprep.subr.mxu0 0.0
  %v6422 = vand.u32 %v5829, 4294901760
  %6423 = vmatpush1.msra.mxu0 %v6422
  %6424 = vmatprep.subr.mxu0 0.0
  %v6425 = vand.u32 %v5830, 4294901760
  %6426 = vmatpush1.msra.mxu0 %v6425
  %6427 = vmatprep.subr.mxu0 0.0
  %v6428 = vand.u32 %v5831, 4294901760
  %6429 = vmatpush1.msra.mxu0 %v6428
  %6430 = vmatprep.subr.mxu0 0.0
  %v6431 = vand.u32 %v5832, 4294901760
  %6432 = vmatpush1.msra.mxu0 %v6431
  %6433 = vmatprep.subr.mxu0 0.0
  %v6434 = vand.u32 %v5833, 4294901760
  %6435 = vmatpush1.msra.mxu0 %v6434
  %6436 = vmatprep.subr.mxu0 0.0
  %6437 = vmatpush1.msra.mxu0 0.0
  %6438 = vmatprep.subr.mxu0 0.0
  %6439 = vmatpush1.msra.mxu0 0.0
  %6440 = vmatprep.subr.mxu0 0.0
  %6441 = vmatpush1.msra.mxu0 0.0
  %6442 = vmatprep.subr.mxu0 0.0
  %6443 = vmatpush1.msra.mxu0 0.0
  %6444 = vmatprep.subr.mxu0 0.0
  %6445 = vmatpush1.msra.mxu0 0.0
  %6446 = vmatprep.subr.mxu0 0.0
  %6447 = vmatpush1.msra.mxu0 0.0
  %6448 = vmatprep.subr.mxu0 0.0
  %6449 = vmatpush1.msra.mxu0 0.0
  %6450 = vmatprep.subr.mxu0 0.0
  %6451 = vmatpush1.msra.mxu0 0.0
  %6452 = vmatprep.subr.mxu0 0.0
  %6453 = vmatpush1.msra.mxu0 0.0
  %6454 = vmatprep.subr.mxu0 0.0
  %6455 = vmatpush1.msra.mxu0 0.0
  %6456 = vmatprep.subr.mxu0 0.0
  %6457 = vmatpush1.msra.mxu0 0.0
  %6458 = vmatprep.subr.mxu0 0.0
  %6459 = vmatpush1.msra.mxu0 0.0
  %6460 = vmatprep.subr.mxu0 0.0
  %6461 = vmatpush1.msra.mxu0 0.0
  %6462 = vmatprep.subr.mxu0 0.0
  %6463 = vmatpush1.msra.mxu0 0.0
  %6464 = vmatprep.subr.mxu0 0.0
  %6465 = vmatpush1.msra.mxu0 0.0
  %6466 = vmatprep.subr.mxu0 0.0
  %6467 = vmatpush1.msra.mxu0 0.0
  %6468 = vmatprep.mubr.f32.mxu0 0.0
  %v6469 = vand.u32 %v5817, 4294901760
  %6470 = vmatmul.mubr.f32.gmra.mrb[0].mxu0 %v6469
  %v6471 = vpop.f32.mrb[0].mxu0
  %v6472 = vadd.f32 %v6385, %v6471
  %v6473 = vpop.f32.mrb[0].mxu0
  %6474 = vdwg.mxu0
  %v6475 = vmax.f32 %v6472, 1e-24
  %v6476 = vrsqrt.pop %v6475
  %v6477 = vmul.f32 %v5814, %v6476
  %6478 = vst [vmem:[%s7] sm:$0x3] %v6477
  // Predicated region
  $region30: #{hlsskl_forward.1} parent=0 // pred_check
    _
  $region31: #{hlsskl_forward.1} parent=0 // pred_check_branch
    %6480 = sbr.rel (0) target = $region33
  $region32: #{hlsskl_forward.1} parent=0 // pred_region
    _
  $region33: #{hlsskl_forward.1} parent=0 // pred_fallthru
    _
  // Predicated region
  $region34: #{hlsskl_forward.1} parent=0 // pred_check
    _
  $region35: #{hlsskl_forward.1} parent=0 // pred_check_branch
    %6482 = sbr.rel (0) target = $region37
  $region36: #{hlsskl_forward.1} parent=0 // pred_region
    _
  $region37: #{hlsskl_forward.1} parent=0 // pred_fallthru
    _

</llo_original>
